<compile_context>
chip_gen: v7x
topology: tpu7x:2x2x1
jax: 0.10.0
libtpu: 0.0.40
codegen_flags: <defaults>
</compile_context>

<pallas_src>
import functools

import jax
import jax.numpy as jnp
from jax.experimental import pallas as pl
from jax.experimental.pallas import tpu as pltpu


def _mish(x):
    # mish(x) = x * tanh(softplus(x)) = x * (t^2 - 1) / (t^2 + 1), t = 1 + e^x.
    # Clamp the exponent so t^2 stays finite; for x >= 20 the ratio is 1.0 to
    # f32 precision, so mish(x) == x there anyway.
    t = 1.0 + jnp.exp(jnp.minimum(x, 20.0))
    t2 = t * t
    return x * (t2 - 1.0) * pl.reciprocal(t2 + 1.0, approx=True)


def _resconv_kernel(x_ref, w_ref, beta_ref, shift_ref, o_ref, *, TH, Wp, Cp):
    # x_ref:     (1, H+2, Wp, Cp)  zero-padded NHWC image (resident per batch)
    # w_ref:     (9, Cp, Cp)       conv taps, (kh*3+kw, in_c, out_c)
    # beta_ref:  (1, Cp)           beta
    # shift_ref: (1, Cp)           beta * bias (pre-folded in the wrapper)
    # o_ref:     (1, TH, Wp, Cp)   padded-width output row tile
    h0 = pl.multiple_of(pl.program_id(1) * TH, TH)
    n_rows = TH * Wp

    acc = None
    x_center = None
    for dh in range(3):
        # Contiguous, tile-aligned row window; the reshape merges leading dims
        # of an (8,128)-aligned slab, so it is layout-free.
        rows = x_ref[0, pl.ds(h0 + dh, TH), :, :].reshape(n_rows, Cp)
        if dh == 1:
            x_center = rows                      # reuse for the residual add
        for dw in range(3):
            if dw == 1:
                shifted = rows
            else:
                # shifted[f] = rows[f + dw - 1]; wrap-around only touches the
                # discarded halo columns (t == 0 / t == Wp-1).
                shifted = pltpu.roll(rows, shift=(1 - dw) % n_rows, axis=0)
            part = jnp.dot(shifted, w_ref[dh * 3 + dw],
                           preferred_element_type=jnp.float32)
            acc = part if acc is None else acc + part

    beta = beta_ref[...].astype(jnp.float32)     # (1, Cp), broadcast once
    shift = shift_ref[...].astype(jnp.float32)   # (1, Cp)
    # (conv + bias) * beta + x  ==  conv * beta + (bias * beta) + x
    pre = acc * beta + shift + x_center.astype(jnp.float32)
    o_ref[...] = _mish(pre).reshape(1, TH, Wp, Cp).astype(o_ref.dtype)


def _round_up(x, m):
    return (x + m - 1) // m * m


def _row_tile(H, Wp, max_rows=256):
    # Largest divisor of H keeping the f32 accumulator (TH*Wp, Cp) small
    # enough to avoid heavy vreg spilling (~<= 128 KiB at Cp=128).
    th = max(1, min(H, max_rows // Wp))
    while H % th:
        th -= 1
    return th


def resconv_forward(x_nchw, w_oihw, bias, beta_1c11):
    """Forward pass matching PyTorch ResConv.forward (NCHW in / NCHW out)."""
    N, C, H, W = x_nchw.shape
    dtype = x_nchw.dtype
    Cp = _round_up(C, 128)        # lane-dense channel axis
    Wp = _round_up(W + 2, 8)      # sublane-aligned padded width (incl. halo)
    TH = _row_tile(H, Wp)
    HT = H // TH

    # TODO(synk): fold the NCHW<->NHWC transposes and the zero-pad into the
    # kernel's own DMA plan to avoid extra HBM round trips on huge inputs.
    x_nhwc = jnp.transpose(x_nchw, (0, 2, 3, 1))
    x_pad = jnp.pad(x_nhwc, ((0, 0), (1, 1), (1, Wp - W - 1), (0, Cp - C)))

    # (out_c, in_c, kh, kw) -> (kh*3+kw, in_c, out_c), zero-padded to Cp.
    w_taps = jnp.transpose(w_oihw, (2, 3, 1, 0)).reshape(9, C, C)
    w_taps = jnp.pad(w_taps, ((0, 0), (0, Cp - C), (0, Cp - C))).astype(dtype)

    beta_vec = beta_1c11.reshape(C).astype(jnp.float32)
    beta_p = jnp.pad(beta_vec, (0, Cp - C)).reshape(1, Cp)
    shift_p = jnp.pad(beta_vec * bias.astype(jnp.float32),
                      (0, Cp - C)).reshape(1, Cp)

    kernel = functools.partial(_resconv_kernel, TH=TH, Wp=Wp, Cp=Cp)

    out_padded = pl.pallas_call(
        kernel,
        out_shape=jax.ShapeDtypeStruct((N, H, Wp, Cp), dtype),
        grid_spec=pltpu.PrefetchScalarGridSpec(
            num_scalar_prefetch=0,
            grid=(N, HT),
            in_specs=[
                # Whole padded image; constant index over h -> DMA'd once per n.
                pl.BlockSpec((1, H + 2, Wp, Cp), lambda n, h: (n, 0, 0, 0)),
                pl.BlockSpec((9, Cp, Cp), lambda n, h: (0, 0, 0)),
                pl.BlockSpec((1, Cp), lambda n, h: (0, 0)),
                pl.BlockSpec((1, Cp), lambda n, h: (0, 0)),
            ],
            out_specs=pl.BlockSpec((1, TH, Wp, Cp), lambda n, h: (n, h, 0, 0)),
        ),
        compiler_params=pltpu.CompilerParams(
            dimension_semantics=("parallel", "parallel"),
            vmem_limit_bytes=48 * 1024 * 1024),
    )(x_pad, w_taps, beta_p, shift_p)

    # Strip halo/alignment columns and padded channels; NHWC -> NCHW.
    out = out_padded[:, :, 1:1 + W, :C]
    return jnp.transpose(out, (0, 3, 1, 2))


def _reference(x_nchw, w_oihw, bias, beta_1c11):
    """Pure-JAX reference (mirrors PyTorch semantics)."""
    conv = jax.lax.conv_general_dilated(
        x_nchw, w_oihw, window_strides=(1, 1), padding=((1, 1), (1, 1)),
        dimension_numbers=("NCHW", "OIHW", "NCHW"))
    conv = conv + bias.reshape(1, -1, 1, 1)
    pre = conv * beta_1c11 + x_nchw
    return pre * jnp.tanh(jax.nn.softplus(pre))


if __name__ == "__main__":
    key = jax.random.PRNGKey(0)
    N, C, H, W = 2, 4, 16, 16

    k_x, k_w, k_b, k_beta = jax.random.split(key, 4)
    x = jax.random.normal(k_x, (N, C, H, W), dtype=jnp.float32)
    # Shapes from nn.Conv2d(c, c, 3, 1, 1) + the learnable beta parameter.
    w = jax.random.normal(k_w, (C, C, 3, 3), dtype=jnp.float32) * 0.1
    b = jax.random.normal(k_b, (C,), dtype=jnp.float32) * 0.1
    beta = 1.0 + 0.1 * jax.random.normal(k_beta, (1, C, 1, 1), dtype=jnp.float32)

    out = jax.block_until_ready(resconv_forward(x, w, b, beta))
    ref = _reference(x, w, b, beta)

    assert out.shape == (N, C, H, W)
    # Tolerance covers the approx-reciprocal Mish (error << 1e-3).
    assert jnp.allclose(out, ref, atol=5e-3, rtol=5e-3), "mismatch vs reference"

    print("KERNEL_OK")
</pallas_src>

<mosaic_0001>
module attributes {stable_mosaic.version = 11 : i64} {
  func.func @_resconv_kernel(%arg0: i32, %arg1: i32, %arg2: memref<1x18x24x128xf32, #tpu.memory_space<vmem>>, %arg3: memref<9x128x128xf32, #tpu.memory_space<vmem>>, %arg4: memref<1x128xf32, #tpu.memory_space<vmem>>, %arg5: memref<1x128xf32, #tpu.memory_space<vmem>>, %arg6: memref<1x8x24x128xf32, #tpu.memory_space<vmem>>) attributes {dimension_semantics = [#tpu.dimension_semantics<parallel>, #tpu.dimension_semantics<parallel>], iteration_bounds = array<i64: 2, 2>, scalar_prefetch = 0 : i64, scratch_operands = 0 : i64, tpu.core_type = #tpu.core_type<tc>, window_params = [{transform_indices = @transform_0, window_bounds = array<i64: 1, 18, 24, 128>}, {pipeline_mode = #tpu.pipeline_mode<synchronous>, transform_indices = @transform_1, window_bounds = array<i64: 9, 128, 128>}, {pipeline_mode = #tpu.pipeline_mode<synchronous>, transform_indices = @transform_2, window_bounds = array<i64: 1, 128>}, {pipeline_mode = #tpu.pipeline_mode<synchronous>, transform_indices = @transform_3, window_bounds = array<i64: 1, 128>}, {transform_indices = @transform_4, window_bounds = array<i64: 1, 8, 24, 128>}]} {
    %c8_i32 = arith.constant 8 : i32
    %0 = arith.muli %arg1, %c8_i32 : i32
    %1 = tpu.assume_multiple %0, 8 : i32
    %c0_i32 = arith.constant 0 : i32
    %2 = arith.addi %1, %c0_i32 : i32
    %c0 = arith.constant 0 : index
    %3 = arith.index_cast %2 : i32 to index
    %c0_0 = arith.constant 0 : index
    %c0_1 = arith.constant 0 : index
    %4 = vector.load %arg2[%c0, %3, %c0_0, %c0_1] : memref<1x18x24x128xf32, #tpu.memory_space<vmem>>, vector<1x8x24x128xf32>
    %5 = vector.shape_cast %4 : vector<1x8x24x128xf32> to vector<8x24x128xf32>
    %6 = vector.shape_cast %5 : vector<8x24x128xf32> to vector<192x128xf32>
    %c1_i32 = arith.constant 1 : i32
    %7 = tpu.dynamic_rotate %6 by %c1_i32 dim 0 : vector<192x128xf32>, i32 -> vector<192x128xf32>
    %c0_2 = arith.constant 0 : index
    %c0_3 = arith.constant 0 : index
    %c0_4 = arith.constant 0 : index
    %8 = vector.load %arg3[%c0_2, %c0_3, %c0_4] : memref<9x128x128xf32, #tpu.memory_space<vmem>>, vector<1x128x128xf32>
    %9 = vector.shape_cast %8 : vector<1x128x128xf32> to vector<128x128xf32>
    %cst = arith.constant dense<0.000000e+00> : vector<192x128xf32>
    %10 = tpu.matmul %7, %9, %cst {dimension_numbers = #tpu.dot_dimension_numbers<[1], [0], [0], [1], [0, 0, 1, 1], [], []>} : vector<192x128xf32>, vector<128x128xf32>, vector<192x128xf32> -> vector<192x128xf32>
    %c1 = arith.constant 1 : index
    %c0_5 = arith.constant 0 : index
    %c0_6 = arith.constant 0 : index
    %11 = vector.load %arg3[%c1, %c0_5, %c0_6] : memref<9x128x128xf32, #tpu.memory_space<vmem>>, vector<1x128x128xf32>
    %12 = vector.shape_cast %11 : vector<1x128x128xf32> to vector<128x128xf32>
    %cst_7 = arith.constant dense<0.000000e+00> : vector<192x128xf32>
    %13 = tpu.matmul %6, %12, %cst_7 {dimension_numbers = #tpu.dot_dimension_numbers<[1], [0], [0], [1], [0, 0, 1, 1], [], []>} : vector<192x128xf32>, vector<128x128xf32>, vector<192x128xf32> -> vector<192x128xf32>
    %14 = arith.addf %10, %13 : vector<192x128xf32>
    %c191_i32 = arith.constant 191 : i32
    %15 = tpu.dynamic_rotate %6 by %c191_i32 dim 0 : vector<192x128xf32>, i32 -> vector<192x128xf32>
    %c2 = arith.constant 2 : index
    %c0_8 = arith.constant 0 : index
    %c0_9 = arith.constant 0 : index
    %16 = vector.load %arg3[%c2, %c0_8, %c0_9] : memref<9x128x128xf32, #tpu.memory_space<vmem>>, vector<1x128x128xf32>
    %17 = vector.shape_cast %16 : vector<1x128x128xf32> to vector<128x128xf32>
    %cst_10 = arith.constant dense<0.000000e+00> : vector<192x128xf32>
    %18 = tpu.matmul %15, %17, %cst_10 {dimension_numbers = #tpu.dot_dimension_numbers<[1], [0], [0], [1], [0, 0, 1, 1], [], []>} : vector<192x128xf32>, vector<128x128xf32>, vector<192x128xf32> -> vector<192x128xf32>
    %19 = arith.addf %14, %18 : vector<192x128xf32>
    %c1_i32_11 = arith.constant 1 : i32
    %20 = arith.addi %1, %c1_i32_11 : i32
    %c0_12 = arith.constant 0 : index
    %21 = arith.index_cast %20 : i32 to index
    %c0_13 = arith.constant 0 : index
    %c0_14 = arith.constant 0 : index
    %22 = vector.load %arg2[%c0_12, %21, %c0_13, %c0_14] : memref<1x18x24x128xf32, #tpu.memory_space<vmem>>, vector<1x8x24x128xf32>
    %23 = vector.shape_cast %22 : vector<1x8x24x128xf32> to vector<8x24x128xf32>
    %24 = vector.shape_cast %23 : vector<8x24x128xf32> to vector<192x128xf32>
    %c1_i32_15 = arith.constant 1 : i32
    %25 = tpu.dynamic_rotate %24 by %c1_i32_15 dim 0 : vector<192x128xf32>, i32 -> vector<192x128xf32>
    %c3 = arith.constant 3 : index
    %c0_16 = arith.constant 0 : index
    %c0_17 = arith.constant 0 : index
    %26 = vector.load %arg3[%c3, %c0_16, %c0_17] : memref<9x128x128xf32, #tpu.memory_space<vmem>>, vector<1x128x128xf32>
    %27 = vector.shape_cast %26 : vector<1x128x128xf32> to vector<128x128xf32>
    %cst_18 = arith.constant dense<0.000000e+00> : vector<192x128xf32>
    %28 = tpu.matmul %25, %27, %cst_18 {dimension_numbers = #tpu.dot_dimension_numbers<[1], [0], [0], [1], [0, 0, 1, 1], [], []>} : vector<192x128xf32>, vector<128x128xf32>, vector<192x128xf32> -> vector<192x128xf32>
    %29 = arith.addf %19, %28 : vector<192x128xf32>
    %c4 = arith.constant 4 : index
    %c0_19 = arith.constant 0 : index
    %c0_20 = arith.constant 0 : index
    %30 = vector.load %arg3[%c4, %c0_19, %c0_20] : memref<9x128x128xf32, #tpu.memory_space<vmem>>, vector<1x128x128xf32>
    %31 = vector.shape_cast %30 : vector<1x128x128xf32> to vector<128x128xf32>
    %cst_21 = arith.constant dense<0.000000e+00> : vector<192x128xf32>
    %32 = tpu.matmul %24, %31, %cst_21 {dimension_numbers = #tpu.dot_dimension_numbers<[1], [0], [0], [1], [0, 0, 1, 1], [], []>} : vector<192x128xf32>, vector<128x128xf32>, vector<192x128xf32> -> vector<192x128xf32>
    %33 = arith.addf %29, %32 : vector<192x128xf32>
    %c191_i32_22 = arith.constant 191 : i32
    %34 = tpu.dynamic_rotate %24 by %c191_i32_22 dim 0 : vector<192x128xf32>, i32 -> vector<192x128xf32>
    %c5 = arith.constant 5 : index
    %c0_23 = arith.constant 0 : index
    %c0_24 = arith.constant 0 : index
    %35 = vector.load %arg3[%c5, %c0_23, %c0_24] : memref<9x128x128xf32, #tpu.memory_space<vmem>>, vector<1x128x128xf32>
    %36 = vector.shape_cast %35 : vector<1x128x128xf32> to vector<128x128xf32>
    %cst_25 = arith.constant dense<0.000000e+00> : vector<192x128xf32>
    %37 = tpu.matmul %34, %36, %cst_25 {dimension_numbers = #tpu.dot_dimension_numbers<[1], [0], [0], [1], [0, 0, 1, 1], [], []>} : vector<192x128xf32>, vector<128x128xf32>, vector<192x128xf32> -> vector<192x128xf32>
    %38 = arith.addf %33, %37 : vector<192x128xf32>
    %c2_i32 = arith.constant 2 : i32
    %39 = arith.addi %1, %c2_i32 : i32
    %c0_26 = arith.constant 0 : index
    %40 = arith.index_cast %39 : i32 to index
    %c0_27 = arith.constant 0 : index
    %c0_28 = arith.constant 0 : index
    %41 = vector.load %arg2[%c0_26, %40, %c0_27, %c0_28] : memref<1x18x24x128xf32, #tpu.memory_space<vmem>>, vector<1x8x24x128xf32>
    %42 = vector.shape_cast %41 : vector<1x8x24x128xf32> to vector<8x24x128xf32>
    %43 = vector.shape_cast %42 : vector<8x24x128xf32> to vector<192x128xf32>
    %c1_i32_29 = arith.constant 1 : i32
    %44 = tpu.dynamic_rotate %43 by %c1_i32_29 dim 0 : vector<192x128xf32>, i32 -> vector<192x128xf32>
    %c6 = arith.constant 6 : index
    %c0_30 = arith.constant 0 : index
    %c0_31 = arith.constant 0 : index
    %45 = vector.load %arg3[%c6, %c0_30, %c0_31] : memref<9x128x128xf32, #tpu.memory_space<vmem>>, vector<1x128x128xf32>
    %46 = vector.shape_cast %45 : vector<1x128x128xf32> to vector<128x128xf32>
    %cst_32 = arith.constant dense<0.000000e+00> : vector<192x128xf32>
    %47 = tpu.matmul %44, %46, %cst_32 {dimension_numbers = #tpu.dot_dimension_numbers<[1], [0], [0], [1], [0, 0, 1, 1], [], []>} : vector<192x128xf32>, vector<128x128xf32>, vector<192x128xf32> -> vector<192x128xf32>
    %48 = arith.addf %38, %47 : vector<192x128xf32>
    %c7 = arith.constant 7 : index
    %c0_33 = arith.constant 0 : index
    %c0_34 = arith.constant 0 : index
    %49 = vector.load %arg3[%c7, %c0_33, %c0_34] : memref<9x128x128xf32, #tpu.memory_space<vmem>>, vector<1x128x128xf32>
    %50 = vector.shape_cast %49 : vector<1x128x128xf32> to vector<128x128xf32>
    %cst_35 = arith.constant dense<0.000000e+00> : vector<192x128xf32>
    %51 = tpu.matmul %43, %50, %cst_35 {dimension_numbers = #tpu.dot_dimension_numbers<[1], [0], [0], [1], [0, 0, 1, 1], [], []>} : vector<192x128xf32>, vector<128x128xf32>, vector<192x128xf32> -> vector<192x128xf32>
    %52 = arith.addf %48, %51 : vector<192x128xf32>
    %c191_i32_36 = arith.constant 191 : i32
    %53 = tpu.dynamic_rotate %43 by %c191_i32_36 dim 0 : vector<192x128xf32>, i32 -> vector<192x128xf32>
    %c8 = arith.constant 8 : index
    %c0_37 = arith.constant 0 : index
    %c0_38 = arith.constant 0 : index
    %54 = vector.load %arg3[%c8, %c0_37, %c0_38] : memref<9x128x128xf32, #tpu.memory_space<vmem>>, vector<1x128x128xf32>
    %55 = vector.shape_cast %54 : vector<1x128x128xf32> to vector<128x128xf32>
    %cst_39 = arith.constant dense<0.000000e+00> : vector<192x128xf32>
    %56 = tpu.matmul %53, %55, %cst_39 {dimension_numbers = #tpu.dot_dimension_numbers<[1], [0], [0], [1], [0, 0, 1, 1], [], []>} : vector<192x128xf32>, vector<128x128xf32>, vector<192x128xf32> -> vector<192x128xf32>
    %57 = arith.addf %52, %56 : vector<192x128xf32>
    %c0_40 = arith.constant 0 : index
    %c0_41 = arith.constant 0 : index
    %58 = vector.load %arg4[%c0_40, %c0_41] : memref<1x128xf32, #tpu.memory_space<vmem>>, vector<1x128xf32>
    %c0_42 = arith.constant 0 : index
    %c0_43 = arith.constant 0 : index
    %59 = vector.load %arg5[%c0_42, %c0_43] : memref<1x128xf32, #tpu.memory_space<vmem>>, vector<1x128xf32>
    %60 = vector.broadcast %58 : vector<1x128xf32> to vector<192x128xf32>
    %61 = arith.mulf %57, %60 : vector<192x128xf32>
    %62 = vector.broadcast %59 : vector<1x128xf32> to vector<192x128xf32>
    %63 = arith.addf %61, %62 : vector<192x128xf32>
    %64 = arith.addf %63, %24 : vector<192x128xf32>
    %cst_44 = arith.constant 2.000000e+01 : f32
    %65 = vector.broadcast %cst_44 : f32 to vector<192x128xf32>
    %66 = arith.minimumf %64, %65 : vector<192x128xf32>
    %67 = math.exp %66 : vector<192x128xf32>
    %cst_45 = arith.constant 1.000000e+00 : f32
    %68 = vector.broadcast %cst_45 : f32 to vector<192x128xf32>
    %69 = arith.addf %68, %67 : vector<192x128xf32>
    %70 = arith.mulf %69, %69 : vector<192x128xf32>
    %cst_46 = arith.constant 1.000000e+00 : f32
    %71 = vector.broadcast %cst_46 : f32 to vector<192x128xf32>
    %72 = arith.subf %70, %71 : vector<192x128xf32>
    %73 = arith.mulf %64, %72 : vector<192x128xf32>
    %cst_47 = arith.constant 1.000000e+00 : f32
    %74 = vector.broadcast %cst_47 : f32 to vector<192x128xf32>
    %75 = arith.addf %70, %74 : vector<192x128xf32>
    %76 = tpu.reciprocal %75 {approx = true} : vector<192x128xf32> -> vector<192x128xf32>
    %77 = arith.mulf %73, %76 : vector<192x128xf32>
    %78 = vector.shape_cast %77 : vector<192x128xf32> to vector<1x8x24x128xf32>
    %c0_48 = arith.constant 0 : index
    %c0_49 = arith.constant 0 : index
    %c0_50 = arith.constant 0 : index
    %c0_51 = arith.constant 0 : index
    %79 = vector.load %arg6[%c0_48, %c0_49, %c0_50, %c0_51] : memref<1x8x24x128xf32, #tpu.memory_space<vmem>>, vector<1x8x24x128xf32>
    tpu.vector_store %arg6[%c0_48, %c0_49, %c0_50, %c0_51], %78 {strides = array<i32>} : memref<1x8x24x128xf32, #tpu.memory_space<vmem>>, vector<1x8x24x128xf32>,
    return
  }
  func.func @transform_0(%arg0: i32, %arg1: i32) -> (i32, i32, i32, i32) {
    %c0_i32 = arith.constant 0 : i32
    %c0_i32_0 = arith.constant 0 : i32
    %c0_i32_1 = arith.constant 0 : i32
    %c0_i32_2 = arith.constant 0 : i32
    return %arg0, %c0_i32, %c0_i32_0, %c0_i32_1 : i32, i32, i32, i32
  }
  func.func @transform_1(%arg0: i32, %arg1: i32) -> (i32, i32, i32) {
    %c0_i32 = arith.constant 0 : i32
    %c0_i32_0 = arith.constant 0 : i32
    %c0_i32_1 = arith.constant 0 : i32
    %c0_i32_2 = arith.constant 0 : i32
    return %c0_i32, %c0_i32_0, %c0_i32_1 : i32, i32, i32
  }
  func.func @transform_2(%arg0: i32, %arg1: i32) -> (i32, i32) {
    %c0_i32 = arith.constant 0 : i32
    %c0_i32_0 = arith.constant 0 : i32
    %c0_i32_1 = arith.constant 0 : i32
    return %c0_i32, %c0_i32_0 : i32, i32
  }
  func.func @transform_3(%arg0: i32, %arg1: i32) -> (i32, i32) {
    %c0_i32 = arith.constant 0 : i32
    %c0_i32_0 = arith.constant 0 : i32
    %c0_i32_1 = arith.constant 0 : i32
    return %c0_i32, %c0_i32_0 : i32, i32
  }
  func.func @transform_4(%arg0: i32, %arg1: i32) -> (i32, i32, i32, i32) {
    %c0_i32 = arith.constant 0 : i32
    %c0_i32_0 = arith.constant 0 : i32
    %c0_i32_1 = arith.constant 0 : i32
    return %arg0, %arg1, %c0_i32, %c0_i32_0 : i32, i32, i32, i32
  }
}

</mosaic_0001>

<llo_original>
// kernel: tpu_custom_call.1
$region0: #{tpu_custom_call.1}
  #allocation0 [shape = 'u32[]', space=smem, size = 0x4, offset = 0x4, fixed_abs, tag = 'smem constant byte address 0x4 - core index']
  #allocation1 [shape = 'u32[144,128]{1,0:T(1,128)}', space=vmem, size = 0x12000, scoped, tag = 'internal scratch']
  %s0 = inlined_call_operand.hbm [shape: f32[2,18,24,128], index: 0, kind: input, shape index: {}]
  %s1 = inlined_call_operand.hbm [shape: f32[9,128,128], index: 1, kind: input, shape index: {}]
  %s2 = inlined_call_operand.vmem [shape: f32[1,128], index: 2, kind: input, shape index: {}]
  %s3 = inlined_call_operand.vmem [shape: f32[1,128], index: 3, kind: input, shape index: {}]
  %s4 = inlined_call_operand.hbm [shape: f32[2,16,24,128], index: 4, kind: output, shape index: {}]
  %s5 = sld [smem:[#allocation0]]
  $region57: #{tpu_custom_call.1} parent=0
    _
  %s7 = ssub.s32 1, %s5
  %s8 = scalar_select 0, %s7, %s5
  $region1: #{tpu_custom_call.1} parent=0
    #allocation2 [shape = 'u8[442368]{0}', space=vmem, size = 0x6c000, scoped, tag = 'input window, operand 0']
    #allocation3 [shape = 's32[2]{0}', space=sflag, size = 0x8, scoped, tag = 'scoped memory for tpu_custom_call.1']
    #allocation4 [shape = 's32[2]{0}', space=sflag, size = 0x8, scoped, tag = 'scoped memory for tpu_custom_call.1']
    #allocation5 [shape = 'u8[589824]{0}', space=vmem, size = 0x90000, scoped, tag = 'input window, operand 1, single buffered']
    #allocation6 [shape = 's32[1]{0}', space=sflag, size = 0x4, scoped, tag = 'scoped memory for tpu_custom_call.1']
    #allocation7 [shape = 'u8[196608]{0}', space=vmem, size = 0x30000, scoped, tag = 'output window, operand 0']
    %9 = vsyncpa [#allocation3], 0
    %s10 = scalar_lea.sflag [#allocation3], 1
    %11 = vsyncpa %s10, 0
    %12 = vsyncpa [#allocation6], 0
    %13 = vsyncpa [#allocation4], 0
    %s14 = scalar_lea.sflag [#allocation4], 1
    %15 = vsyncpa %s14, 0
    loop: start=0, step=1, limit=6
    $region2: #{tpu_custom_call.1} parent=1 // loop_pre_header
      _
    $region3: #{tpu_custom_call.1} parent=1 // loop_header
      %s17 = sphi 0, %s21
      %p18 = scmp.ge.s32.totalorder %s17, 6
      %s24 = sphi 0, %s36
      %s25 = sphi 0, %s32
      %s26 = sphi 0, %s24
      %s27 = sphi 0, %s25
      %s28 = sphi 0, %s26
      %s29 = sphi 0, %s27
      %s39 = sphi 0, %s41
      %s42 = sphi 0, %s39
      %s43 = sphi 0, %s42
      %s59 = sphi 0, %s43
      %s63 = sphi 0, %s63
      %s65 = sphi 0, %s63
      %s66 = sphi 0, %s65
      %s80 = sphi 0, %s66
      %s84 = sphi 0, %s84
      %s86 = sphi 0, %s84
      %s87 = sphi 0, %s86
      %s101 = sphi 0, %s87
      %s105 = sphi 0, %s105
      %s107 = sphi 0, %s105
      %s108 = sphi 0, %s107
      %s122 = sphi 0, %s108
      %s130 = sphi 0, %s132
      %s133 = sphi 0, %s130
      %s134 = sphi 0, %s133
      %s150 = sphi 0, %s134
    $region4: #{tpu_custom_call.1} parent=1 // loop_header_branch
      %20 = sbr.rel (%p18) target = $region8
    $region5: #{tpu_custom_call.1} parent=1 // loop_body
      %s22 = ssub.s32 %s17, 1
      %s23 = ssub.s32 %s17, 2
      %s30 = sadd.s32 1, %s25
      %p31 = scmp.ge.s32.totalorder %s30, 2
      %s32 = scalar_select %p31, 0, %s30
      %s33 = sadd.s32 1, %s24
      %s34 = scalar_select %p31, %s33, %s24
      %p35 = scmp.ge.s32.totalorder %s34, 2
      %s36 = scalar_select %p35, 0, %s34
      %s37 = ssub.s32 %s24, %s36
      %p38 = scmp.eq.s32.totalorder %s37, 0
      %s40 = sadd.s32 %s39, 1
      %s41 = scalar_select %p38, %s39, %s40
      %p44 = pneg %p38
      %p45 = scmp.eq.s32.totalorder %s17, 3
      %p46 = por %p44, %p45
      %p47 = scmp.ne.s32.totalorder %s39, %s42
      %p48 = scmp.eq.s32.totalorder %s17, 0
      %p49 = por %p47, %p48
      %p50 = scmp.ne.s32.totalorder %s39, %s42
      %p51 = scmp.eq.s32.totalorder %s22, 3
      %p52 = por %p50, %p51
      %p53 = scmp.ne.s32.totalorder %s42, %s43
      %p54 = scmp.eq.s32.totalorder %s22, 0
      %p55 = por %p53, %p54
      %p56 = scmp.ne.s32.totalorder %s42, %s43
      %p57 = scmp.eq.s32.totalorder %s23, 3
      %p58 = por %p56, %p57
      %p60 = scmp.ne.s32.totalorder %s43, %s59
      %p61 = scmp.eq.s32.totalorder %s23, 0
      %p62 = por %p60, %p61
      %s64 = sadd.s32 %s63, 1
      %p67 = scmp.eq.s32.totalorder %s17, 3
      %p68 = scmp.ne.s32.totalorder %s63, %s65
      %p69 = scmp.eq.s32.totalorder %s17, 0
      %p70 = por %p68, %p69
      %p71 = scmp.ne.s32.totalorder %s63, %s65
      %p72 = scmp.eq.s32.totalorder %s22, 3
      %p73 = por %p71, %p72
      %p74 = scmp.ne.s32.totalorder %s65, %s66
      %p75 = scmp.eq.s32.totalorder %s22, 0
      %p76 = por %p74, %p75
      %p77 = scmp.ne.s32.totalorder %s65, %s66
      %p78 = scmp.eq.s32.totalorder %s23, 3
      %p79 = por %p77, %p78
      %p81 = scmp.ne.s32.totalorder %s66, %s80
      %p82 = scmp.eq.s32.totalorder %s23, 0
      %p83 = por %p81, %p82
      %s85 = sadd.s32 %s84, 1
      %p88 = scmp.eq.s32.totalorder %s17, 3
      %p89 = scmp.ne.s32.totalorder %s84, %s86
      %p90 = scmp.eq.s32.totalorder %s17, 0
      %p91 = por %p89, %p90
      %p92 = scmp.ne.s32.totalorder %s84, %s86
      %p93 = scmp.eq.s32.totalorder %s22, 3
      %p94 = por %p92, %p93
      %p95 = scmp.ne.s32.totalorder %s86, %s87
      %p96 = scmp.eq.s32.totalorder %s22, 0
      %p97 = por %p95, %p96
      %p98 = scmp.ne.s32.totalorder %s86, %s87
      %p99 = scmp.eq.s32.totalorder %s23, 3
      %p100 = por %p98, %p99
      %p102 = scmp.ne.s32.totalorder %s87, %s101
      %p103 = scmp.eq.s32.totalorder %s23, 0
      %p104 = por %p102, %p103
      %s106 = sadd.s32 %s105, 1
      %p109 = scmp.eq.s32.totalorder %s17, 3
      %p110 = scmp.ne.s32.totalorder %s105, %s107
      %p111 = scmp.eq.s32.totalorder %s17, 0
      %p112 = por %p110, %p111
      %p113 = scmp.ne.s32.totalorder %s105, %s107
      %p114 = scmp.eq.s32.totalorder %s22, 3
      %p115 = por %p113, %p114
      %p116 = scmp.ne.s32.totalorder %s107, %s108
      %p117 = scmp.eq.s32.totalorder %s22, 0
      %p118 = por %p116, %p117
      %p119 = scmp.ne.s32.totalorder %s107, %s108
      %p120 = scmp.eq.s32.totalorder %s23, 3
      %p121 = por %p119, %p120
      %p123 = scmp.ne.s32.totalorder %s108, %s122
      %p124 = scmp.eq.s32.totalorder %s23, 0
      %p125 = por %p123, %p124
      %s126 = ssub.s32 %s24, %s36
      %s127 = ssub.s32 %s25, %s32
      %s128 = sor.u32 %s126, %s127
      %p129 = scmp.eq.s32.totalorder %s128, 0
      %s131 = sadd.s32 %s130, 1
      %s132 = scalar_select %p129, %s130, %s131
      %p135 = pneg %p129
      %p136 = scmp.eq.s32.totalorder %s17, 3
      %p137 = por %p135, %p136
      %p138 = scmp.ne.s32.totalorder %s130, %s133
      %p139 = scmp.eq.s32.totalorder %s17, 0
      %p140 = por %p138, %p139
      %p141 = scmp.ne.s32.totalorder %s130, %s133
      %p142 = scmp.eq.s32.totalorder %s22, 3
      %p143 = por %p141, %p142
      %p144 = scmp.ne.s32.totalorder %s133, %s134
      %p145 = scmp.eq.s32.totalorder %s22, 0
      %p146 = por %p144, %p145
      %p147 = scmp.ne.s32.totalorder %s133, %s134
      %p148 = scmp.eq.s32.totalorder %s23, 3
      %p149 = por %p147, %p148
      %p151 = scmp.ne.s32.totalorder %s134, %s150
      %p152 = scmp.eq.s32.totalorder %s23, 0
      %p153 = por %p151, %p152
      %p154 = scmp.le.s32.totalorder 1, %s17
      %p155 = scmp.lt.s32.totalorder %s17, 5
      %p156 = pnand %p154, %p155
      %p157 = pneg %p156
      // Predicated region
      $region9: #{tpu_custom_call.1} parent=5 // pred_check
        _
      $region10: #{tpu_custom_call.1} parent=5 // pred_check_branch
        %159 = sbr.rel (%p156) target = $region12
      $region11: #{tpu_custom_call.1} parent=5 // pred_region
        %s160 = ssub.s32 %s17, 1
        // Predicated region
        $region13: #{tpu_custom_call.1} parent=11 // pred_check
          %p161 = pneg %p76
        $region14: #{tpu_custom_call.1} parent=11 // pred_check_branch
          %163 = sbr.rel (%p161) target = $region16
        $region15: #{tpu_custom_call.1} parent=11 // pred_region
          %s165 = ssub.s32 18432, 18432
          %166 = vsyncadd [#allocation6], %s165
          %s167 = sshll.u32 [#allocation5], 4
          %s168 = int_to_ptr.vmem [resolvable:$true] %s167
          %173 = dma.hbm_to_vmem [thread:$0]  %s1, 18432, %s168, [#allocation6], 128, 128, 8
        $region16: #{tpu_custom_call.1} parent=11 // pred_fallthru
          _
        // Predicated region
        $region17: #{tpu_custom_call.1} parent=11 // pred_check
          %p174 = pneg %p97
        $region18: #{tpu_custom_call.1} parent=11 // pred_check_branch
          %176 = sbr.rel (%p174) target = $region20
        $region19: #{tpu_custom_call.1} parent=11 // pred_region
          _
        $region20: #{tpu_custom_call.1} parent=11 // pred_fallthru
          _
        // Predicated region
        $region21: #{tpu_custom_call.1} parent=11 // pred_check
          %p177 = pneg %p118
        $region22: #{tpu_custom_call.1} parent=11 // pred_check_branch
          %179 = sbr.rel (%p177) target = $region24
        $region23: #{tpu_custom_call.1} parent=11 // pred_region
          _
        $region24: #{tpu_custom_call.1} parent=11 // pred_fallthru
          _
      $region12: #{tpu_custom_call.1} parent=5 // pred_fallthru
        _
      %p180 = scmp.lt.s32.totalorder %s17, 4
      // Predicated region
      $region25: #{tpu_custom_call.1} parent=5 // pred_check
        %p181 = pneg %p180
      $region26: #{tpu_custom_call.1} parent=5 // pred_check_branch
        %183 = sbr.rel (%p181) target = $region28
      $region27: #{tpu_custom_call.1} parent=5 // pred_region
        // Predicated region
        $region29: #{tpu_custom_call.1} parent=27 // pred_check
          %p184 = pneg %p49
        $region30: #{tpu_custom_call.1} parent=27 // pred_check_branch
          %186 = sbr.rel (%p184) target = $region32
        $region31: #{tpu_custom_call.1} parent=27 // pred_region
          %s187 = sand.u32 %s39, 1
          %s188 = scalar_lea.sflag [#allocation3], %s187
          %s189 = sand.u32 %s39, 1
          %s190 = smul.addr %s189, 432
          %s191 = scalar_lea.vmem [#allocation2], %s190
          %s193 = ssub.s32 6912, 6912
          %194 = vsyncadd %s188, %s193
          %s195 = smul.addr %s24, 54
          %s196 = smul.addr %s195, 128
          %s197 = scalar_lea.hbm %s0, %s196
          %s198 = sshll.u32 %s191, 4
          %s199 = int_to_ptr.vmem [resolvable:$true] %s198
          %204 = dma.hbm_to_vmem [thread:$0]  %s197, 6912, %s199, %s188, 128, 128, 8
        $region32: #{tpu_custom_call.1} parent=27 // pred_fallthru
          _
      $region28: #{tpu_custom_call.1} parent=5 // pred_fallthru
        _
      %p205 = scmp.le.s32.totalorder 1, %s17
      %p206 = scmp.lt.s32.totalorder %s17, 5
      %p207 = pnand %p205, %p206
      %p208 = pneg %p207
      // Predicated region
      $region33: #{tpu_custom_call.1} parent=5 // pred_check
        _
      $region34: #{tpu_custom_call.1} parent=5 // pred_check_branch
        %210 = sbr.rel (%p207) target = $region36
      $region35: #{tpu_custom_call.1} parent=5 // pred_region
        %s211 = ssub.s32 %s17, 1
        %s212 = sand.u32 %s42, 1
        %s213 = scalar_lea.sflag [#allocation3], %s212
        %s214 = sand.u32 %s42, 1
        %s215 = smul.addr %s214, 432
        %s216 = scalar_lea.vmem [#allocation2], %s215
        // Predicated region
        $region37: #{tpu_custom_call.1} parent=35 // pred_check
          %p217 = pneg %p55
        $region38: #{tpu_custom_call.1} parent=35 // pred_check_branch
          %219 = sbr.rel (%p217) target = $region40
        $region39: #{tpu_custom_call.1} parent=35 // pred_region
          %220 = dma.done %s213, 6912
        $region40: #{tpu_custom_call.1} parent=35 // pred_fallthru
          _
        // Predicated region
        $region41: #{tpu_custom_call.1} parent=35 // pred_check
          %p221 = pneg %p76
        $region42: #{tpu_custom_call.1} parent=35 // pred_check_branch
          %223 = sbr.rel (%p221) target = $region44
        $region43: #{tpu_custom_call.1} parent=35 // pred_region
          %224 = dma.done [#allocation6], 18432
        $region44: #{tpu_custom_call.1} parent=35 // pred_fallthru
          _
        %s225 = sand.u32 %s42, 1
        %s226 = scalar_lea.sflag [#allocation3], %s225
        %s227 = sand.u32 %s42, 1
        %s228 = smul.addr %s227, 432
        %s229 = scalar_lea.vmem [#allocation2], %s228
        %p230 = pneg %p55
        %p231 = pneg %p52
        %p232 = pneg %p76
        %p233 = pneg %p73
        %p234 = pneg %p97
        %p235 = pneg %p94
        %p236 = pneg %p118
        %p237 = pneg %p115
        %p238 = pneg %p146
        %p239 = pneg %p143
        %s240 = sand.u32 %s133, 1
        %s241 = scalar_lea.sflag [#allocation4], %s240
        %s242 = sand.u32 %s133, 1
        %s243 = smul.addr %s242, 192
        %s244 = scalar_lea.vmem [#allocation7], %s243
        %s245 = smul.u32 8, %s27
        %s246 = smul.u32 %s27, 8
        %s247 = smul.u32 %s246, 24
        %s248 = scalar_lea.vmem %s216, %s247 [#allocation2]
        %v249 = vld [vmem:[%s248] sm:$0xff]
        %v250 = vld [vmem:[%s248 + $0x8] sm:$0xff]
        %v251 = vld [vmem:[%s248 + $0x10] sm:$0xff]
        %v252 = vld [vmem:[%s248 + $0x18] sm:$0xff]
        %v253 = vld [vmem:[%s248 + $0x20] sm:$0xff]
        %v254 = vld [vmem:[%s248 + $0x28] sm:$0xff]
        %v255 = vld [vmem:[%s248 + $0x30] sm:$0xff]
        %v256 = vld [vmem:[%s248 + $0x38] sm:$0xff]
        %v257 = vld [vmem:[%s248 + $0x40] sm:$0xff]
        %v258 = vld [vmem:[%s248 + $0x48] sm:$0xff]
        %v259 = vld [vmem:[%s248 + $0x50] sm:$0xff]
        %v260 = vld [vmem:[%s248 + $0x58] sm:$0xff]
        %v261 = vld [vmem:[%s248 + $0x60] sm:$0xff]
        %v262 = vld [vmem:[%s248 + $0x68] sm:$0xff]
        %v263 = vld [vmem:[%s248 + $0x70] sm:$0xff]
        %v264 = vld [vmem:[%s248 + $0x78] sm:$0xff]
        %v265 = vld [vmem:[%s248 + $0x80] sm:$0xff]
        %v266 = vld [vmem:[%s248 + $0x88] sm:$0xff]
        %v267 = vld [vmem:[%s248 + $0x90] sm:$0xff]
        %v268 = vld [vmem:[%s248 + $0x98] sm:$0xff]
        %v269 = vld [vmem:[%s248 + $0xa0] sm:$0xff]
        %v270 = vld [vmem:[%s248 + $0xa8] sm:$0xff]
        %v271 = vld [vmem:[%s248 + $0xb0] sm:$0xff]
        %v272 = vld [vmem:[%s248 + $0xb8] sm:$0xff]
        %v273 = vrot.slane %v249, 7
        %v274 = vrot.slane %v250, 7
        %v275 = vrot.slane %v251, 7
        %v276 = vrot.slane %v252, 7
        %v277 = vrot.slane %v253, 7
        %v278 = vrot.slane %v254, 7
        %v279 = vrot.slane %v255, 7
        %v280 = vrot.slane %v256, 7
        %v281 = vrot.slane %v257, 7
        %v282 = vrot.slane %v258, 7
        %v283 = vrot.slane %v259, 7
        %v284 = vrot.slane %v260, 7
        %v285 = vrot.slane %v261, 7
        %v286 = vrot.slane %v262, 7
        %v287 = vrot.slane %v263, 7
        %v288 = vrot.slane %v264, 7
        %v289 = vrot.slane %v265, 7
        %v290 = vrot.slane %v266, 7
        %v291 = vrot.slane %v267, 7
        %v292 = vrot.slane %v268, 7
        %v293 = vrot.slane %v269, 7
        %v294 = vrot.slane %v270, 7
        %v295 = vrot.slane %v271, 7
        %v296 = vrot.slane %v272, 7
        %v297 = vlaneseq
        %v298 = vshrl.u32 %v297, 7
        %vm299 = vcmp.lt.s32.totalorder %v298, 1
        %v300 = vsel %vm299, %v295, %v296
        %v301 = vsel %vm299, %v294, %v295
        %v302 = vsel %vm299, %v293, %v294
        %v303 = vsel %vm299, %v292, %v293
        %v304 = vsel %vm299, %v291, %v292
        %v305 = vsel %vm299, %v290, %v291
        %v306 = vsel %vm299, %v289, %v290
        %v307 = vsel %vm299, %v288, %v289
        %v308 = vsel %vm299, %v287, %v288
        %v309 = vsel %vm299, %v286, %v287
        %v310 = vsel %vm299, %v285, %v286
        %v311 = vsel %vm299, %v284, %v285
        %v312 = vsel %vm299, %v283, %v284
        %v313 = vsel %vm299, %v282, %v283
        %v314 = vsel %vm299, %v281, %v282
        %v315 = vsel %vm299, %v280, %v281
        %v316 = vsel %vm299, %v279, %v280
        %v317 = vsel %vm299, %v278, %v279
        %v318 = vsel %vm299, %v277, %v278
        %v319 = vsel %vm299, %v276, %v277
        %v320 = vsel %vm299, %v275, %v276
        %v321 = vsel %vm299, %v274, %v275
        %v322 = vsel %vm299, %v273, %v274
        %v323 = vsel %vm299, %v296, %v273
        %v324 = vld [vmem:[#allocation5] sm:$0xff]
        %v325 = vld [vmem:[#allocation5 + $0x8] sm:$0xff]
        %v326 = vld [vmem:[#allocation5 + $0x10] sm:$0xff]
        %v327 = vld [vmem:[#allocation5 + $0x18] sm:$0xff]
        %v328 = vld [vmem:[#allocation5 + $0x20] sm:$0xff]
        %v329 = vld [vmem:[#allocation5 + $0x28] sm:$0xff]
        %v330 = vld [vmem:[#allocation5 + $0x30] sm:$0xff]
        %v331 = vld [vmem:[#allocation5 + $0x38] sm:$0xff]
        %v332 = vld [vmem:[#allocation5 + $0x40] sm:$0xff]
        %v333 = vld [vmem:[#allocation5 + $0x48] sm:$0xff]
        %v334 = vld [vmem:[#allocation5 + $0x50] sm:$0xff]
        %v335 = vld [vmem:[#allocation5 + $0x58] sm:$0xff]
        %v336 = vld [vmem:[#allocation5 + $0x60] sm:$0xff]
        %v337 = vld [vmem:[#allocation5 + $0x68] sm:$0xff]
        %v338 = vld [vmem:[#allocation5 + $0x70] sm:$0xff]
        %v339 = vld [vmem:[#allocation5 + $0x78] sm:$0xff]
        %s340 = scalar_lea.vmem [#allocation5], 128
        %v341 = vld [vmem:[%s340] sm:$0xff]
        %v342 = vld [vmem:[%s340 + $0x8] sm:$0xff]
        %v343 = vld [vmem:[%s340 + $0x10] sm:$0xff]
        %v344 = vld [vmem:[%s340 + $0x18] sm:$0xff]
        %v345 = vld [vmem:[%s340 + $0x20] sm:$0xff]
        %v346 = vld [vmem:[%s340 + $0x28] sm:$0xff]
        %v347 = vld [vmem:[%s340 + $0x30] sm:$0xff]
        %v348 = vld [vmem:[%s340 + $0x38] sm:$0xff]
        %v349 = vld [vmem:[%s340 + $0x40] sm:$0xff]
        %v350 = vld [vmem:[%s340 + $0x48] sm:$0xff]
        %v351 = vld [vmem:[%s340 + $0x50] sm:$0xff]
        %v352 = vld [vmem:[%s340 + $0x58] sm:$0xff]
        %v353 = vld [vmem:[%s340 + $0x60] sm:$0xff]
        %v354 = vld [vmem:[%s340 + $0x68] sm:$0xff]
        %v355 = vld [vmem:[%s340 + $0x70] sm:$0xff]
        %v356 = vld [vmem:[%s340 + $0x78] sm:$0xff]
        %357 = vmatprep.subr.mxu0 0.0
        %358 = vmatpush1.msra.mxu0 %v341
        %359 = vmatprep.subr.mxu0 0.0
        %360 = vmatpush1.msra.mxu0 %v342
        %361 = vmatprep.subr.mxu0 0.0
        %362 = vmatpush1.msra.mxu0 %v343
        %363 = vmatprep.subr.mxu0 0.0
        %364 = vmatpush1.msra.mxu0 %v344
        %365 = vmatprep.subr.mxu0 0.0
        %366 = vmatpush1.msra.mxu0 %v345
        %367 = vmatprep.subr.mxu0 0.0
        %368 = vmatpush1.msra.mxu0 %v346
        %369 = vmatprep.subr.mxu0 0.0
        %370 = vmatpush1.msra.mxu0 %v347
        %371 = vmatprep.subr.mxu0 0.0
        %372 = vmatpush1.msra.mxu0 %v348
        %373 = vmatprep.subr.mxu0 0.0
        %374 = vmatpush1.msra.mxu0 %v349
        %375 = vmatprep.subr.mxu0 0.0
        %376 = vmatpush1.msra.mxu0 %v350
        %377 = vmatprep.subr.mxu0 0.0
        %378 = vmatpush1.msra.mxu0 %v351
        %379 = vmatprep.subr.mxu0 0.0
        %380 = vmatpush1.msra.mxu0 %v352
        %381 = vmatprep.subr.mxu0 0.0
        %382 = vmatpush1.msra.mxu0 %v353
        %383 = vmatprep.subr.mxu0 0.0
        %384 = vmatpush1.msra.mxu0 %v354
        %385 = vmatprep.subr.mxu0 0.0
        %386 = vmatpush1.msra.mxu0 %v355
        %387 = vmatprep.subr.mxu0 0.0
        %388 = vmatpush1.msra.mxu0 %v356
        %389 = vmatprep.subr.mxu0 0.0
        %390 = vmatpush1.msra.mxu0 0.0
        %391 = vmatprep.subr.mxu0 0.0
        %392 = vmatpush1.msra.mxu0 0.0
        %393 = vmatprep.subr.mxu0 0.0
        %394 = vmatpush1.msra.mxu0 0.0
        %395 = vmatprep.subr.mxu0 0.0
        %396 = vmatpush1.msra.mxu0 0.0
        %397 = vmatprep.subr.mxu0 0.0
        %398 = vmatpush1.msra.mxu0 0.0
        %399 = vmatprep.subr.mxu0 0.0
        %400 = vmatpush1.msra.mxu0 0.0
        %401 = vmatprep.subr.mxu0 0.0
        %402 = vmatpush1.msra.mxu0 0.0
        %403 = vmatprep.subr.mxu0 0.0
        %404 = vmatpush1.msra.mxu0 0.0
        %405 = vmatprep.subr.mxu0 0.0
        %406 = vmatpush1.msra.mxu0 0.0
        %407 = vmatprep.subr.mxu0 0.0
        %408 = vmatpush1.msra.mxu0 0.0
        %409 = vmatprep.subr.mxu0 0.0
        %410 = vmatpush1.msra.mxu0 0.0
        %411 = vmatprep.subr.mxu0 0.0
        %412 = vmatpush1.msra.mxu0 0.0
        %413 = vmatprep.subr.mxu0 0.0
        %414 = vmatpush1.msra.mxu0 0.0
        %415 = vmatprep.subr.mxu0 0.0
        %416 = vmatpush1.msra.mxu0 0.0
        %417 = vmatprep.subr.mxu0 0.0
        %418 = vmatpush1.msra.mxu0 0.0
        %419 = vmatprep.subr.mxu0 0.0
        %420 = vmatpush1.msra.mxu0 0.0
        %421 = vmatprep.mubr.f32.mxu0 0.0
        %422 = vmatmul.mubr.f32.gmra.mrb[0].mxu0 %v249
        %v423 = vpop.f32.mrb[0].mxu0
        %v424 = vadd.f32 0.0, %v423
        %v425 = vpop.f32.mrb[0].mxu0
        %426 = vmatprep.mubr.f32.mxu0 0.0
        %427 = vmatmul.mubr.f32.gmra.mrb[0].mxu0 %v250
        %v428 = vpop.f32.mrb[0].mxu0
        %v429 = vadd.f32 0.0, %v428
        %v430 = vpop.f32.mrb[0].mxu0
        %431 = vmatprep.mubr.f32.mxu0 0.0
        %432 = vmatmul.mubr.f32.gmra.mrb[0].mxu0 %v251
        %v433 = vpop.f32.mrb[0].mxu0
        %v434 = vadd.f32 0.0, %v433
        %v435 = vpop.f32.mrb[0].mxu0
        %436 = vmatprep.mubr.f32.mxu0 0.0
        %437 = vmatmul.mubr.f32.gmra.mrb[0].mxu0 %v252
        %v438 = vpop.f32.mrb[0].mxu0
        %v439 = vadd.f32 0.0, %v438
        %v440 = vpop.f32.mrb[0].mxu0
        %441 = vmatprep.mubr.f32.mxu0 0.0
        %442 = vmatmul.mubr.f32.gmra.mrb[0].mxu0 %v253
        %v443 = vpop.f32.mrb[0].mxu0
        %v444 = vadd.f32 0.0, %v443
        %v445 = vpop.f32.mrb[0].mxu0
        %446 = vmatprep.mubr.f32.mxu0 0.0
        %447 = vmatmul.mubr.f32.gmra.mrb[0].mxu0 %v254
        %v448 = vpop.f32.mrb[0].mxu0
        %v449 = vadd.f32 0.0, %v448
        %v450 = vpop.f32.mrb[0].mxu0
        %451 = vmatprep.mubr.f32.mxu0 0.0
        %452 = vmatmul.mubr.f32.gmra.mrb[0].mxu0 %v255
        %v453 = vpop.f32.mrb[0].mxu0
        %v454 = vadd.f32 0.0, %v453
        %v455 = vpop.f32.mrb[0].mxu0
        %456 = vmatprep.mubr.f32.mxu0 0.0
        %457 = vmatmul.mubr.f32.gmra.mrb[0].mxu0 %v256
        %v458 = vpop.f32.mrb[0].mxu0
        %v459 = vadd.f32 0.0, %v458
        %v460 = vpop.f32.mrb[0].mxu0
        %461 = vmatprep.mubr.f32.mxu0 0.0
        %462 = vmatmul.mubr.f32.gmra.mrb[0].mxu0 %v257
        %v463 = vpop.f32.mrb[0].mxu0
        %v464 = vadd.f32 0.0, %v463
        %v465 = vpop.f32.mrb[0].mxu0
        %466 = vmatprep.mubr.f32.mxu0 0.0
        %467 = vmatmul.mubr.f32.gmra.mrb[0].mxu0 %v258
        %v468 = vpop.f32.mrb[0].mxu0
        %v469 = vadd.f32 0.0, %v468
        %v470 = vpop.f32.mrb[0].mxu0
        %471 = vmatprep.mubr.f32.mxu0 0.0
        %472 = vmatmul.mubr.f32.gmra.mrb[0].mxu0 %v259
        %v473 = vpop.f32.mrb[0].mxu0
        %v474 = vadd.f32 0.0, %v473
        %v475 = vpop.f32.mrb[0].mxu0
        %476 = vmatprep.mubr.f32.mxu0 0.0
        %477 = vmatmul.mubr.f32.gmra.mrb[0].mxu0 %v260
        %v478 = vpop.f32.mrb[0].mxu0
        %v479 = vadd.f32 0.0, %v478
        %v480 = vpop.f32.mrb[0].mxu0
        %481 = vmatprep.mubr.f32.mxu0 0.0
        %482 = vmatmul.mubr.f32.gmra.mrb[0].mxu0 %v261
        %v483 = vpop.f32.mrb[0].mxu0
        %v484 = vadd.f32 0.0, %v483
        %v485 = vpop.f32.mrb[0].mxu0
        %486 = vmatprep.mubr.f32.mxu0 0.0
        %487 = vmatmul.mubr.f32.gmra.mrb[0].mxu0 %v262
        %v488 = vpop.f32.mrb[0].mxu0
        %v489 = vadd.f32 0.0, %v488
        %v490 = vpop.f32.mrb[0].mxu0
        %491 = vmatprep.mubr.f32.mxu0 0.0
        %492 = vmatmul.mubr.f32.gmra.mrb[0].mxu0 %v263
        %v493 = vpop.f32.mrb[0].mxu0
        %v494 = vadd.f32 0.0, %v493
        %v495 = vpop.f32.mrb[0].mxu0
        %496 = vmatprep.mubr.f32.mxu0 0.0
        %497 = vmatmul.mubr.f32.gmra.mrb[0].mxu0 %v264
        %v498 = vpop.f32.mrb[0].mxu0
        %v499 = vadd.f32 0.0, %v498
        %v500 = vpop.f32.mrb[0].mxu0
        %501 = vmatprep.mubr.f32.mxu0 0.0
        %502 = vmatmul.mubr.f32.gmra.mrb[0].mxu0 %v265
        %v503 = vpop.f32.mrb[0].mxu0
        %v504 = vadd.f32 0.0, %v503
        %v505 = vpop.f32.mrb[0].mxu0
        %506 = vmatprep.mubr.f32.mxu0 0.0
        %507 = vmatmul.mubr.f32.gmra.mrb[0].mxu0 %v266
        %v508 = vpop.f32.mrb[0].mxu0
        %v509 = vadd.f32 0.0, %v508
        %v510 = vpop.f32.mrb[0].mxu0
        %511 = vmatprep.mubr.f32.mxu0 0.0
        %512 = vmatmul.mubr.f32.gmra.mrb[0].mxu0 %v267
        %v513 = vpop.f32.mrb[0].mxu0
        %v514 = vadd.f32 0.0, %v513
        %v515 = vpop.f32.mrb[0].mxu0
        %516 = vmatprep.mubr.f32.mxu0 0.0
        %517 = vmatmul.mubr.f32.gmra.mrb[0].mxu0 %v268
        %v518 = vpop.f32.mrb[0].mxu0
        %v519 = vadd.f32 0.0, %v518
        %v520 = vpop.f32.mrb[0].mxu0
        %521 = vmatprep.mubr.f32.mxu0 0.0
        %522 = vmatmul.mubr.f32.gmra.mrb[0].mxu0 %v269
        %v523 = vpop.f32.mrb[0].mxu0
        %v524 = vadd.f32 0.0, %v523
        %v525 = vpop.f32.mrb[0].mxu0
        %526 = vmatprep.mubr.f32.mxu0 0.0
        %527 = vmatmul.mubr.f32.gmra.mrb[0].mxu0 %v270
        %v528 = vpop.f32.mrb[0].mxu0
        %v529 = vadd.f32 0.0, %v528
        %v530 = vpop.f32.mrb[0].mxu0
        %531 = vmatprep.mubr.f32.mxu0 0.0
        %532 = vmatmul.mubr.f32.gmra.mrb[0].mxu0 %v271
        %v533 = vpop.f32.mrb[0].mxu0
        %v534 = vadd.f32 0.0, %v533
        %v535 = vpop.f32.mrb[0].mxu0
        %536 = vmatprep.mubr.f32.mxu0 0.0
        %537 = vmatmul.mubr.f32.gmra.mrb[0].mxu0 %v272
        %v538 = vpop.f32.mrb[0].mxu0
        %v539 = vadd.f32 0.0, %v538
        %v540 = vpop.f32.mrb[0].mxu0
        %541 = vdwg.mxu0
        %542 = vmatprep.subr.mxu0 0.0
        %543 = vmatpush1.msra.mxu0 %v324
        %544 = vmatprep.subr.mxu0 0.0
        %545 = vmatpush1.msra.mxu0 %v325
        %546 = vmatprep.subr.mxu0 0.0
        %547 = vmatpush1.msra.mxu0 %v326
        %548 = vmatprep.subr.mxu0 0.0
        %549 = vmatpush1.msra.mxu0 %v327
        %550 = vmatprep.subr.mxu0 0.0
        %551 = vmatpush1.msra.mxu0 %v328
        %552 = vmatprep.subr.mxu0 0.0
        %553 = vmatpush1.msra.mxu0 %v329
        %554 = vmatprep.subr.mxu0 0.0
        %555 = vmatpush1.msra.mxu0 %v330
        %556 = vmatprep.subr.mxu0 0.0
        %557 = vmatpush1.msra.mxu0 %v331
        %558 = vmatprep.subr.mxu0 0.0
        %559 = vmatpush1.msra.mxu0 %v332
        %560 = vmatprep.subr.mxu0 0.0
        %561 = vmatpush1.msra.mxu0 %v333
        %562 = vmatprep.subr.mxu0 0.0
        %563 = vmatpush1.msra.mxu0 %v334
        %564 = vmatprep.subr.mxu0 0.0
        %565 = vmatpush1.msra.mxu0 %v335
        %566 = vmatprep.subr.mxu0 0.0
        %567 = vmatpush1.msra.mxu0 %v336
        %568 = vmatprep.subr.mxu0 0.0
        %569 = vmatpush1.msra.mxu0 %v337
        %570 = vmatprep.subr.mxu0 0.0
        %571 = vmatpush1.msra.mxu0 %v338
        %572 = vmatprep.subr.mxu0 0.0
        %573 = vmatpush1.msra.mxu0 %v339
        %574 = vmatprep.subr.mxu0 0.0
        %575 = vmatpush1.msra.mxu0 0.0
        %576 = vmatprep.subr.mxu0 0.0
        %577 = vmatpush1.msra.mxu0 0.0
        %578 = vmatprep.subr.mxu0 0.0
        %579 = vmatpush1.msra.mxu0 0.0
        %580 = vmatprep.subr.mxu0 0.0
        %581 = vmatpush1.msra.mxu0 0.0
        %582 = vmatprep.subr.mxu0 0.0
        %583 = vmatpush1.msra.mxu0 0.0
        %584 = vmatprep.subr.mxu0 0.0
        %585 = vmatpush1.msra.mxu0 0.0
        %586 = vmatprep.subr.mxu0 0.0
        %587 = vmatpush1.msra.mxu0 0.0
        %588 = vmatprep.subr.mxu0 0.0
        %589 = vmatpush1.msra.mxu0 0.0
        %590 = vmatprep.subr.mxu0 0.0
        %591 = vmatpush1.msra.mxu0 0.0
        %592 = vmatprep.subr.mxu0 0.0
        %593 = vmatpush1.msra.mxu0 0.0
        %594 = vmatprep.subr.mxu0 0.0
        %595 = vmatpush1.msra.mxu0 0.0
        %596 = vmatprep.subr.mxu0 0.0
        %597 = vmatpush1.msra.mxu0 0.0
        %598 = vmatprep.subr.mxu0 0.0
        %599 = vmatpush1.msra.mxu0 0.0
        %600 = vmatprep.subr.mxu0 0.0
        %601 = vmatpush1.msra.mxu0 0.0
        %602 = vmatprep.subr.mxu0 0.0
        %603 = vmatpush1.msra.mxu0 0.0
        %604 = vmatprep.subr.mxu0 0.0
        %605 = vmatpush1.msra.mxu0 0.0
        %606 = vmatprep.mubr.f32.mxu0 0.0
        %607 = vmatmul.mubr.f32.gmra.mrb[0].mxu0 %v323
        %v608 = vpop.f32.mrb[0].mxu0
        %v609 = vadd.f32 %v424, %v608
        %v610 = vpop.f32.mrb[0].mxu0
        %611 = vmatprep.mubr.f32.mxu0 0.0
        %612 = vmatmul.mubr.f32.gmra.mrb[0].mxu0 %v322
        %v613 = vpop.f32.mrb[0].mxu0
        %v614 = vadd.f32 %v429, %v613
        %v615 = vpop.f32.mrb[0].mxu0
        %616 = vmatprep.mubr.f32.mxu0 0.0
        %617 = vmatmul.mubr.f32.gmra.mrb[0].mxu0 %v321
        %v618 = vpop.f32.mrb[0].mxu0
        %v619 = vadd.f32 %v434, %v618
        %v620 = vpop.f32.mrb[0].mxu0
        %621 = vmatprep.mubr.f32.mxu0 0.0
        %622 = vmatmul.mubr.f32.gmra.mrb[0].mxu0 %v320
        %v623 = vpop.f32.mrb[0].mxu0
        %v624 = vadd.f32 %v439, %v623
        %v625 = vpop.f32.mrb[0].mxu0
        %626 = vmatprep.mubr.f32.mxu0 0.0
        %627 = vmatmul.mubr.f32.gmra.mrb[0].mxu0 %v319
        %v628 = vpop.f32.mrb[0].mxu0
        %v629 = vadd.f32 %v444, %v628
        %v630 = vpop.f32.mrb[0].mxu0
        %631 = vmatprep.mubr.f32.mxu0 0.0
        %632 = vmatmul.mubr.f32.gmra.mrb[0].mxu0 %v318
        %v633 = vpop.f32.mrb[0].mxu0
        %v634 = vadd.f32 %v449, %v633
        %v635 = vpop.f32.mrb[0].mxu0
        %636 = vmatprep.mubr.f32.mxu0 0.0
        %637 = vmatmul.mubr.f32.gmra.mrb[0].mxu0 %v317
        %v638 = vpop.f32.mrb[0].mxu0
        %v639 = vadd.f32 %v454, %v638
        %v640 = vpop.f32.mrb[0].mxu0
        %641 = vmatprep.mubr.f32.mxu0 0.0
        %642 = vmatmul.mubr.f32.gmra.mrb[0].mxu0 %v316
        %v643 = vpop.f32.mrb[0].mxu0
        %v644 = vadd.f32 %v459, %v643
        %v645 = vpop.f32.mrb[0].mxu0
        %646 = vmatprep.mubr.f32.mxu0 0.0
        %647 = vmatmul.mubr.f32.gmra.mrb[0].mxu0 %v315
        %v648 = vpop.f32.mrb[0].mxu0
        %v649 = vadd.f32 %v464, %v648
        %v650 = vpop.f32.mrb[0].mxu0
        %651 = vmatprep.mubr.f32.mxu0 0.0
        %652 = vmatmul.mubr.f32.gmra.mrb[0].mxu0 %v314
        %v653 = vpop.f32.mrb[0].mxu0
        %v654 = vadd.f32 %v469, %v653
        %v655 = vpop.f32.mrb[0].mxu0
        %656 = vmatprep.mubr.f32.mxu0 0.0
        %657 = vmatmul.mubr.f32.gmra.mrb[0].mxu0 %v313
        %v658 = vpop.f32.mrb[0].mxu0
        %v659 = vadd.f32 %v474, %v658
        %v660 = vpop.f32.mrb[0].mxu0
        %661 = vmatprep.mubr.f32.mxu0 0.0
        %662 = vmatmul.mubr.f32.gmra.mrb[0].mxu0 %v312
        %v663 = vpop.f32.mrb[0].mxu0
        %v664 = vadd.f32 %v479, %v663
        %v665 = vpop.f32.mrb[0].mxu0
        %666 = vmatprep.mubr.f32.mxu0 0.0
        %667 = vmatmul.mubr.f32.gmra.mrb[0].mxu0 %v311
        %v668 = vpop.f32.mrb[0].mxu0
        %v669 = vadd.f32 %v484, %v668
        %v670 = vpop.f32.mrb[0].mxu0
        %671 = vmatprep.mubr.f32.mxu0 0.0
        %672 = vmatmul.mubr.f32.gmra.mrb[0].mxu0 %v310
        %v673 = vpop.f32.mrb[0].mxu0
        %v674 = vadd.f32 %v489, %v673
        %v675 = vpop.f32.mrb[0].mxu0
        %676 = vmatprep.mubr.f32.mxu0 0.0
        %677 = vmatmul.mubr.f32.gmra.mrb[0].mxu0 %v309
        %v678 = vpop.f32.mrb[0].mxu0
        %v679 = vadd.f32 %v494, %v678
        %v680 = vpop.f32.mrb[0].mxu0
        %681 = vmatprep.mubr.f32.mxu0 0.0
        %682 = vmatmul.mubr.f32.gmra.mrb[0].mxu0 %v308
        %v683 = vpop.f32.mrb[0].mxu0
        %v684 = vadd.f32 %v499, %v683
        %v685 = vpop.f32.mrb[0].mxu0
        %686 = vmatprep.mubr.f32.mxu0 0.0
        %687 = vmatmul.mubr.f32.gmra.mrb[0].mxu0 %v307
        %v688 = vpop.f32.mrb[0].mxu0
        %v689 = vadd.f32 %v504, %v688
        %v690 = vpop.f32.mrb[0].mxu0
        %691 = vmatprep.mubr.f32.mxu0 0.0
        %692 = vmatmul.mubr.f32.gmra.mrb[0].mxu0 %v306
        %v693 = vpop.f32.mrb[0].mxu0
        %v694 = vadd.f32 %v509, %v693
        %v695 = vpop.f32.mrb[0].mxu0
        %696 = vmatprep.mubr.f32.mxu0 0.0
        %697 = vmatmul.mubr.f32.gmra.mrb[0].mxu0 %v305
        %v698 = vpop.f32.mrb[0].mxu0
        %v699 = vadd.f32 %v514, %v698
        %v700 = vpop.f32.mrb[0].mxu0
        %701 = vmatprep.mubr.f32.mxu0 0.0
        %702 = vmatmul.mubr.f32.gmra.mrb[0].mxu0 %v304
        %v703 = vpop.f32.mrb[0].mxu0
        %v704 = vadd.f32 %v519, %v703
        %v705 = vpop.f32.mrb[0].mxu0
        %706 = vmatprep.mubr.f32.mxu0 0.0
        %707 = vmatmul.mubr.f32.gmra.mrb[0].mxu0 %v303
        %v708 = vpop.f32.mrb[0].mxu0
        %v709 = vadd.f32 %v524, %v708
        %v710 = vpop.f32.mrb[0].mxu0
        %711 = vmatprep.mubr.f32.mxu0 0.0
        %712 = vmatmul.mubr.f32.gmra.mrb[0].mxu0 %v302
        %v713 = vpop.f32.mrb[0].mxu0
        %v714 = vadd.f32 %v529, %v713
        %v715 = vpop.f32.mrb[0].mxu0
        %716 = vmatprep.mubr.f32.mxu0 0.0
        %717 = vmatmul.mubr.f32.gmra.mrb[0].mxu0 %v301
        %v718 = vpop.f32.mrb[0].mxu0
        %v719 = vadd.f32 %v534, %v718
        %v720 = vpop.f32.mrb[0].mxu0
        %721 = vmatprep.mubr.f32.mxu0 0.0
        %722 = vmatmul.mubr.f32.gmra.mrb[0].mxu0 %v300
        %v723 = vpop.f32.mrb[0].mxu0
        %v724 = vadd.f32 %v539, %v723
        %v725 = vpop.f32.mrb[0].mxu0
        %726 = vdwg.mxu0
        %v727 = vrot.slane %v249, 1
        %v728 = vrot.slane %v250, 1
        %v729 = vrot.slane %v251, 1
        %v730 = vrot.slane %v252, 1
        %v731 = vrot.slane %v253, 1
        %v732 = vrot.slane %v254, 1
        %v733 = vrot.slane %v255, 1
        %v734 = vrot.slane %v256, 1
        %v735 = vrot.slane %v257, 1
        %v736 = vrot.slane %v258, 1
        %v737 = vrot.slane %v259, 1
        %v738 = vrot.slane %v260, 1
        %v739 = vrot.slane %v261, 1
        %v740 = vrot.slane %v262, 1
        %v741 = vrot.slane %v263, 1
        %v742 = vrot.slane %v264, 1
        %v743 = vrot.slane %v265, 1
        %v744 = vrot.slane %v266, 1
        %v745 = vrot.slane %v267, 1
        %v746 = vrot.slane %v268, 1
        %v747 = vrot.slane %v269, 1
        %v748 = vrot.slane %v270, 1
        %v749 = vrot.slane %v271, 1
        %v750 = vrot.slane %v272, 1
        %vm751 = vcmp.lt.s32.totalorder %v298, 7
        %v752 = vsel %vm751, %v749, %v750
        %v753 = vsel %vm751, %v748, %v749
        %v754 = vsel %vm751, %v747, %v748
        %v755 = vsel %vm751, %v746, %v747
        %v756 = vsel %vm751, %v745, %v746
        %v757 = vsel %vm751, %v744, %v745
        %v758 = vsel %vm751, %v743, %v744
        %v759 = vsel %vm751, %v742, %v743
        %v760 = vsel %vm751, %v741, %v742
        %v761 = vsel %vm751, %v740, %v741
        %v762 = vsel %vm751, %v739, %v740
        %v763 = vsel %vm751, %v738, %v739
        %v764 = vsel %vm751, %v737, %v738
        %v765 = vsel %vm751, %v736, %v737
        %v766 = vsel %vm751, %v735, %v736
        %v767 = vsel %vm751, %v734, %v735
        %v768 = vsel %vm751, %v733, %v734
        %v769 = vsel %vm751, %v732, %v733
        %v770 = vsel %vm751, %v731, %v732
        %v771 = vsel %vm751, %v730, %v731
        %v772 = vsel %vm751, %v729, %v730
        %v773 = vsel %vm751, %v728, %v729
        %v774 = vsel %vm751, %v727, %v728
        %v775 = vsel %vm751, %v750, %v727
        %s776 = scalar_lea.vmem [#allocation5], 256
        %v777 = vld [vmem:[%s776] sm:$0xff]
        %v778 = vld [vmem:[%s776 + $0x8] sm:$0xff]
        %v779 = vld [vmem:[%s776 + $0x10] sm:$0xff]
        %v780 = vld [vmem:[%s776 + $0x18] sm:$0xff]
        %v781 = vld [vmem:[%s776 + $0x20] sm:$0xff]
        %v782 = vld [vmem:[%s776 + $0x28] sm:$0xff]
        %v783 = vld [vmem:[%s776 + $0x30] sm:$0xff]
        %v784 = vld [vmem:[%s776 + $0x38] sm:$0xff]
        %v785 = vld [vmem:[%s776 + $0x40] sm:$0xff]
        %v786 = vld [vmem:[%s776 + $0x48] sm:$0xff]
        %v787 = vld [vmem:[%s776 + $0x50] sm:$0xff]
        %v788 = vld [vmem:[%s776 + $0x58] sm:$0xff]
        %v789 = vld [vmem:[%s776 + $0x60] sm:$0xff]
        %v790 = vld [vmem:[%s776 + $0x68] sm:$0xff]
        %v791 = vld [vmem:[%s776 + $0x70] sm:$0xff]
        %v792 = vld [vmem:[%s776 + $0x78] sm:$0xff]
        %793 = vmatprep.subr.mxu0 0.0
        %794 = vmatpush1.msra.mxu0 %v777
        %795 = vmatprep.subr.mxu0 0.0
        %796 = vmatpush1.msra.mxu0 %v778
        %797 = vmatprep.subr.mxu0 0.0
        %798 = vmatpush1.msra.mxu0 %v779
        %799 = vmatprep.subr.mxu0 0.0
        %800 = vmatpush1.msra.mxu0 %v780
        %801 = vmatprep.subr.mxu0 0.0
        %802 = vmatpush1.msra.mxu0 %v781
        %803 = vmatprep.subr.mxu0 0.0
        %804 = vmatpush1.msra.mxu0 %v782
        %805 = vmatprep.subr.mxu0 0.0
        %806 = vmatpush1.msra.mxu0 %v783
        %807 = vmatprep.subr.mxu0 0.0
        %808 = vmatpush1.msra.mxu0 %v784
        %809 = vmatprep.subr.mxu0 0.0
        %810 = vmatpush1.msra.mxu0 %v785
        %811 = vmatprep.subr.mxu0 0.0
        %812 = vmatpush1.msra.mxu0 %v786
        %813 = vmatprep.subr.mxu0 0.0
        %814 = vmatpush1.msra.mxu0 %v787
        %815 = vmatprep.subr.mxu0 0.0
        %816 = vmatpush1.msra.mxu0 %v788
        %817 = vmatprep.subr.mxu0 0.0
        %818 = vmatpush1.msra.mxu0 %v789
        %819 = vmatprep.subr.mxu0 0.0
        %820 = vmatpush1.msra.mxu0 %v790
        %821 = vmatprep.subr.mxu0 0.0
        %822 = vmatpush1.msra.mxu0 %v791
        %823 = vmatprep.subr.mxu0 0.0
        %824 = vmatpush1.msra.mxu0 %v792
        %825 = vmatprep.subr.mxu0 0.0
        %826 = vmatpush1.msra.mxu0 0.0
        %827 = vmatprep.subr.mxu0 0.0
        %828 = vmatpush1.msra.mxu0 0.0
        %829 = vmatprep.subr.mxu0 0.0
        %830 = vmatpush1.msra.mxu0 0.0
        %831 = vmatprep.subr.mxu0 0.0
        %832 = vmatpush1.msra.mxu0 0.0
        %833 = vmatprep.subr.mxu0 0.0
        %834 = vmatpush1.msra.mxu0 0.0
        %835 = vmatprep.subr.mxu0 0.0
        %836 = vmatpush1.msra.mxu0 0.0
        %837 = vmatprep.subr.mxu0 0.0
        %838 = vmatpush1.msra.mxu0 0.0
        %839 = vmatprep.subr.mxu0 0.0
        %840 = vmatpush1.msra.mxu0 0.0
        %841 = vmatprep.subr.mxu0 0.0
        %842 = vmatpush1.msra.mxu0 0.0
        %843 = vmatprep.subr.mxu0 0.0
        %844 = vmatpush1.msra.mxu0 0.0
        %845 = vmatprep.subr.mxu0 0.0
        %846 = vmatpush1.msra.mxu0 0.0
        %847 = vmatprep.subr.mxu0 0.0
        %848 = vmatpush1.msra.mxu0 0.0
        %849 = vmatprep.subr.mxu0 0.0
        %850 = vmatpush1.msra.mxu0 0.0
        %851 = vmatprep.subr.mxu0 0.0
        %852 = vmatpush1.msra.mxu0 0.0
        %853 = vmatprep.subr.mxu0 0.0
        %854 = vmatpush1.msra.mxu0 0.0
        %855 = vmatprep.subr.mxu0 0.0
        %856 = vmatpush1.msra.mxu0 0.0
        %857 = vmatprep.mubr.f32.mxu0 0.0
        %858 = vmatmul.mubr.f32.gmra.mrb[0].mxu0 %v774
        %v859 = vpop.f32.mrb[0].mxu0
        %v860 = vadd.f32 0.0, %v859
        %v861 = vpop.f32.mrb[0].mxu0
        %862 = vmatprep.mubr.f32.mxu0 0.0
        %863 = vmatmul.mubr.f32.gmra.mrb[0].mxu0 %v773
        %v864 = vpop.f32.mrb[0].mxu0
        %v865 = vadd.f32 0.0, %v864
        %v866 = vpop.f32.mrb[0].mxu0
        %867 = vmatprep.mubr.f32.mxu0 0.0
        %868 = vmatmul.mubr.f32.gmra.mrb[0].mxu0 %v772
        %v869 = vpop.f32.mrb[0].mxu0
        %v870 = vadd.f32 0.0, %v869
        %v871 = vpop.f32.mrb[0].mxu0
        %872 = vmatprep.mubr.f32.mxu0 0.0
        %873 = vmatmul.mubr.f32.gmra.mrb[0].mxu0 %v771
        %v874 = vpop.f32.mrb[0].mxu0
        %v875 = vadd.f32 0.0, %v874
        %v876 = vpop.f32.mrb[0].mxu0
        %877 = vmatprep.mubr.f32.mxu0 0.0
        %878 = vmatmul.mubr.f32.gmra.mrb[0].mxu0 %v770
        %v879 = vpop.f32.mrb[0].mxu0
        %v880 = vadd.f32 0.0, %v879
        %v881 = vpop.f32.mrb[0].mxu0
        %882 = vmatprep.mubr.f32.mxu0 0.0
        %883 = vmatmul.mubr.f32.gmra.mrb[0].mxu0 %v769
        %v884 = vpop.f32.mrb[0].mxu0
        %v885 = vadd.f32 0.0, %v884
        %v886 = vpop.f32.mrb[0].mxu0
        %887 = vmatprep.mubr.f32.mxu0 0.0
        %888 = vmatmul.mubr.f32.gmra.mrb[0].mxu0 %v768
        %v889 = vpop.f32.mrb[0].mxu0
        %v890 = vadd.f32 0.0, %v889
        %v891 = vpop.f32.mrb[0].mxu0
        %892 = vmatprep.mubr.f32.mxu0 0.0
        %893 = vmatmul.mubr.f32.gmra.mrb[0].mxu0 %v767
        %v894 = vpop.f32.mrb[0].mxu0
        %v895 = vadd.f32 0.0, %v894
        %v896 = vpop.f32.mrb[0].mxu0
        %897 = vmatprep.mubr.f32.mxu0 0.0
        %898 = vmatmul.mubr.f32.gmra.mrb[0].mxu0 %v766
        %v899 = vpop.f32.mrb[0].mxu0
        %v900 = vadd.f32 0.0, %v899
        %v901 = vpop.f32.mrb[0].mxu0
        %902 = vmatprep.mubr.f32.mxu0 0.0
        %903 = vmatmul.mubr.f32.gmra.mrb[0].mxu0 %v765
        %v904 = vpop.f32.mrb[0].mxu0
        %v905 = vadd.f32 0.0, %v904
        %v906 = vpop.f32.mrb[0].mxu0
        %907 = vmatprep.mubr.f32.mxu0 0.0
        %908 = vmatmul.mubr.f32.gmra.mrb[0].mxu0 %v764
        %v909 = vpop.f32.mrb[0].mxu0
        %v910 = vadd.f32 0.0, %v909
        %v911 = vpop.f32.mrb[0].mxu0
        %912 = vmatprep.mubr.f32.mxu0 0.0
        %913 = vmatmul.mubr.f32.gmra.mrb[0].mxu0 %v763
        %v914 = vpop.f32.mrb[0].mxu0
        %v915 = vadd.f32 0.0, %v914
        %v916 = vpop.f32.mrb[0].mxu0
        %917 = vmatprep.mubr.f32.mxu0 0.0
        %918 = vmatmul.mubr.f32.gmra.mrb[0].mxu0 %v762
        %v919 = vpop.f32.mrb[0].mxu0
        %v920 = vadd.f32 0.0, %v919
        %v921 = vpop.f32.mrb[0].mxu0
        %922 = vmatprep.mubr.f32.mxu0 0.0
        %923 = vmatmul.mubr.f32.gmra.mrb[0].mxu0 %v761
        %v924 = vpop.f32.mrb[0].mxu0
        %v925 = vadd.f32 0.0, %v924
        %v926 = vpop.f32.mrb[0].mxu0
        %927 = vmatprep.mubr.f32.mxu0 0.0
        %928 = vmatmul.mubr.f32.gmra.mrb[0].mxu0 %v760
        %v929 = vpop.f32.mrb[0].mxu0
        %v930 = vadd.f32 0.0, %v929
        %v931 = vpop.f32.mrb[0].mxu0
        %932 = vmatprep.mubr.f32.mxu0 0.0
        %933 = vmatmul.mubr.f32.gmra.mrb[0].mxu0 %v759
        %v934 = vpop.f32.mrb[0].mxu0
        %v935 = vadd.f32 0.0, %v934
        %v936 = vpop.f32.mrb[0].mxu0
        %937 = vmatprep.mubr.f32.mxu0 0.0
        %938 = vmatmul.mubr.f32.gmra.mrb[0].mxu0 %v758
        %v939 = vpop.f32.mrb[0].mxu0
        %v940 = vadd.f32 0.0, %v939
        %v941 = vpop.f32.mrb[0].mxu0
        %942 = vmatprep.mubr.f32.mxu0 0.0
        %943 = vmatmul.mubr.f32.gmra.mrb[0].mxu0 %v757
        %v944 = vpop.f32.mrb[0].mxu0
        %v945 = vadd.f32 0.0, %v944
        %v946 = vpop.f32.mrb[0].mxu0
        %947 = vmatprep.mubr.f32.mxu0 0.0
        %948 = vmatmul.mubr.f32.gmra.mrb[0].mxu0 %v756
        %v949 = vpop.f32.mrb[0].mxu0
        %v950 = vadd.f32 0.0, %v949
        %v951 = vpop.f32.mrb[0].mxu0
        %952 = vmatprep.mubr.f32.mxu0 0.0
        %953 = vmatmul.mubr.f32.gmra.mrb[0].mxu0 %v755
        %v954 = vpop.f32.mrb[0].mxu0
        %v955 = vadd.f32 0.0, %v954
        %v956 = vpop.f32.mrb[0].mxu0
        %957 = vmatprep.mubr.f32.mxu0 0.0
        %958 = vmatmul.mubr.f32.gmra.mrb[0].mxu0 %v754
        %v959 = vpop.f32.mrb[0].mxu0
        %v960 = vadd.f32 0.0, %v959
        %v961 = vpop.f32.mrb[0].mxu0
        %962 = vmatprep.mubr.f32.mxu0 0.0
        %963 = vmatmul.mubr.f32.gmra.mrb[0].mxu0 %v753
        %v964 = vpop.f32.mrb[0].mxu0
        %v965 = vadd.f32 0.0, %v964
        %v966 = vpop.f32.mrb[0].mxu0
        %967 = vmatprep.mubr.f32.mxu0 0.0
        %968 = vmatmul.mubr.f32.gmra.mrb[0].mxu0 %v752
        %v969 = vpop.f32.mrb[0].mxu0
        %v970 = vadd.f32 0.0, %v969
        %v971 = vpop.f32.mrb[0].mxu0
        %972 = vmatprep.mubr.f32.mxu0 0.0
        %973 = vmatmul.mubr.f32.gmra.mrb[0].mxu0 %v775
        %v974 = vpop.f32.mrb[0].mxu0
        %v975 = vadd.f32 0.0, %v974
        %v976 = vpop.f32.mrb[0].mxu0
        %977 = vdwg.mxu0
        %v978 = vadd.f32 %v609, %v860
        %v979 = vadd.f32 %v614, %v865
        %v980 = vadd.f32 %v619, %v870
        %v981 = vadd.f32 %v624, %v875
        %v982 = vadd.f32 %v629, %v880
        %v983 = vadd.f32 %v634, %v885
        %v984 = vadd.f32 %v639, %v890
        %v985 = vadd.f32 %v644, %v895
        %v986 = vadd.f32 %v649, %v900
        %v987 = vadd.f32 %v654, %v905
        %v988 = vadd.f32 %v659, %v910
        %v989 = vadd.f32 %v664, %v915
        %v990 = vadd.f32 %v669, %v920
        %v991 = vadd.f32 %v674, %v925
        %v992 = vadd.f32 %v679, %v930
        %v993 = vadd.f32 %v684, %v935
        %v994 = vadd.f32 %v689, %v940
        %v995 = vadd.f32 %v694, %v945
        %v996 = vadd.f32 %v699, %v950
        %v997 = vadd.f32 %v704, %v955
        %v998 = vadd.f32 %v709, %v960
        %v999 = vadd.f32 %v714, %v965
        %v1000 = vadd.f32 %v719, %v970
        %v1001 = vadd.f32 %v724, %v975
        %s1002 = sadd.s32 %s246, 1
        %s1003 = smul.u32 %s1002, 24
        %s1004 = scalar_lea.vmem %s216, %s1003 [#allocation2]
        %v1005 = vld [vmem:[%s1004] sm:$0xff]
        %v1006 = vld [vmem:[%s1004 + $0x8] sm:$0xff]
        %v1007 = vld [vmem:[%s1004 + $0x10] sm:$0xff]
        %v1008 = vld [vmem:[%s1004 + $0x18] sm:$0xff]
        %v1009 = vld [vmem:[%s1004 + $0x20] sm:$0xff]
        %v1010 = vld [vmem:[%s1004 + $0x28] sm:$0xff]
        %v1011 = vld [vmem:[%s1004 + $0x30] sm:$0xff]
        %v1012 = vld [vmem:[%s1004 + $0x38] sm:$0xff]
        %v1013 = vld [vmem:[%s1004 + $0x40] sm:$0xff]
        %v1014 = vld [vmem:[%s1004 + $0x48] sm:$0xff]
        %v1015 = vld [vmem:[%s1004 + $0x50] sm:$0xff]
        %v1016 = vld [vmem:[%s1004 + $0x58] sm:$0xff]
        %v1017 = vld [vmem:[%s1004 + $0x60] sm:$0xff]
        %v1018 = vld [vmem:[%s1004 + $0x68] sm:$0xff]
        %v1019 = vld [vmem:[%s1004 + $0x70] sm:$0xff]
        %v1020 = vld [vmem:[%s1004 + $0x78] sm:$0xff]
        %v1021 = vld [vmem:[%s1004 + $0x80] sm:$0xff]
        %v1022 = vld [vmem:[%s1004 + $0x88] sm:$0xff]
        %v1023 = vld [vmem:[%s1004 + $0x90] sm:$0xff]
        %v1024 = vld [vmem:[%s1004 + $0x98] sm:$0xff]
        %v1025 = vld [vmem:[%s1004 + $0xa0] sm:$0xff]
        %v1026 = vld [vmem:[%s1004 + $0xa8] sm:$0xff]
        %v1027 = vld [vmem:[%s1004 + $0xb0] sm:$0xff]
        %v1028 = vld [vmem:[%s1004 + $0xb8] sm:$0xff]
        %v1029 = vrot.slane %v1005, 7
        %v1030 = vrot.slane %v1006, 7
        %v1031 = vrot.slane %v1007, 7
        %v1032 = vrot.slane %v1008, 7
        %v1033 = vrot.slane %v1009, 7
        %v1034 = vrot.slane %v1010, 7
        %v1035 = vrot.slane %v1011, 7
        %v1036 = vrot.slane %v1012, 7
        %v1037 = vrot.slane %v1013, 7
        %v1038 = vrot.slane %v1014, 7
        %v1039 = vrot.slane %v1015, 7
        %v1040 = vrot.slane %v1016, 7
        %v1041 = vrot.slane %v1017, 7
        %v1042 = vrot.slane %v1018, 7
        %v1043 = vrot.slane %v1019, 7
        %v1044 = vrot.slane %v1020, 7
        %v1045 = vrot.slane %v1021, 7
        %v1046 = vrot.slane %v1022, 7
        %v1047 = vrot.slane %v1023, 7
        %v1048 = vrot.slane %v1024, 7
        %v1049 = vrot.slane %v1025, 7
        %v1050 = vrot.slane %v1026, 7
        %v1051 = vrot.slane %v1027, 7
        %v1052 = vrot.slane %v1028, 7
        %v1053 = vsel %vm299, %v1051, %v1052
        %v1054 = vsel %vm299, %v1050, %v1051
        %v1055 = vsel %vm299, %v1049, %v1050
        %v1056 = vsel %vm299, %v1048, %v1049
        %v1057 = vsel %vm299, %v1047, %v1048
        %v1058 = vsel %vm299, %v1046, %v1047
        %v1059 = vsel %vm299, %v1045, %v1046
        %v1060 = vsel %vm299, %v1044, %v1045
        %v1061 = vsel %vm299, %v1043, %v1044
        %v1062 = vsel %vm299, %v1042, %v1043
        %v1063 = vsel %vm299, %v1041, %v1042
        %v1064 = vsel %vm299, %v1040, %v1041
        %v1065 = vsel %vm299, %v1039, %v1040
        %v1066 = vsel %vm299, %v1038, %v1039
        %v1067 = vsel %vm299, %v1037, %v1038
        %v1068 = vsel %vm299, %v1036, %v1037
        %v1069 = vsel %vm299, %v1035, %v1036
        %v1070 = vsel %vm299, %v1034, %v1035
        %v1071 = vsel %vm299, %v1033, %v1034
        %v1072 = vsel %vm299, %v1032, %v1033
        %v1073 = vsel %vm299, %v1031, %v1032
        %v1074 = vsel %vm299, %v1030, %v1031
        %v1075 = vsel %vm299, %v1029, %v1030
        %v1076 = vsel %vm299, %v1052, %v1029
        %s1077 = scalar_lea.vmem [#allocation5], 384
        %v1078 = vld [vmem:[%s1077] sm:$0xff]
        %v1079 = vld [vmem:[%s1077 + $0x8] sm:$0xff]
        %v1080 = vld [vmem:[%s1077 + $0x10] sm:$0xff]
        %v1081 = vld [vmem:[%s1077 + $0x18] sm:$0xff]
        %v1082 = vld [vmem:[%s1077 + $0x20] sm:$0xff]
        %v1083 = vld [vmem:[%s1077 + $0x28] sm:$0xff]
        %v1084 = vld [vmem:[%s1077 + $0x30] sm:$0xff]
        %v1085 = vld [vmem:[%s1077 + $0x38] sm:$0xff]
        %v1086 = vld [vmem:[%s1077 + $0x40] sm:$0xff]
        %v1087 = vld [vmem:[%s1077 + $0x48] sm:$0xff]
        %v1088 = vld [vmem:[%s1077 + $0x50] sm:$0xff]
        %v1089 = vld [vmem:[%s1077 + $0x58] sm:$0xff]
        %v1090 = vld [vmem:[%s1077 + $0x60] sm:$0xff]
        %v1091 = vld [vmem:[%s1077 + $0x68] sm:$0xff]
        %v1092 = vld [vmem:[%s1077 + $0x70] sm:$0xff]
        %v1093 = vld [vmem:[%s1077 + $0x78] sm:$0xff]
        %1094 = vmatprep.subr.mxu0 0.0
        %1095 = vmatpush1.msra.mxu0 %v1078
        %1096 = vmatprep.subr.mxu0 0.0
        %1097 = vmatpush1.msra.mxu0 %v1079
        %1098 = vmatprep.subr.mxu0 0.0
        %1099 = vmatpush1.msra.mxu0 %v1080
        %1100 = vmatprep.subr.mxu0 0.0
        %1101 = vmatpush1.msra.mxu0 %v1081
        %1102 = vmatprep.subr.mxu0 0.0
        %1103 = vmatpush1.msra.mxu0 %v1082
        %1104 = vmatprep.subr.mxu0 0.0
        %1105 = vmatpush1.msra.mxu0 %v1083
        %1106 = vmatprep.subr.mxu0 0.0
        %1107 = vmatpush1.msra.mxu0 %v1084
        %1108 = vmatprep.subr.mxu0 0.0
        %1109 = vmatpush1.msra.mxu0 %v1085
        %1110 = vmatprep.subr.mxu0 0.0
        %1111 = vmatpush1.msra.mxu0 %v1086
        %1112 = vmatprep.subr.mxu0 0.0
        %1113 = vmatpush1.msra.mxu0 %v1087
        %1114 = vmatprep.subr.mxu0 0.0
        %1115 = vmatpush1.msra.mxu0 %v1088
        %1116 = vmatprep.subr.mxu0 0.0
        %1117 = vmatpush1.msra.mxu0 %v1089
        %1118 = vmatprep.subr.mxu0 0.0
        %1119 = vmatpush1.msra.mxu0 %v1090
        %1120 = vmatprep.subr.mxu0 0.0
        %1121 = vmatpush1.msra.mxu0 %v1091
        %1122 = vmatprep.subr.mxu0 0.0
        %1123 = vmatpush1.msra.mxu0 %v1092
        %1124 = vmatprep.subr.mxu0 0.0
        %1125 = vmatpush1.msra.mxu0 %v1093
        %1126 = vmatprep.subr.mxu0 0.0
        %1127 = vmatpush1.msra.mxu0 0.0
        %1128 = vmatprep.subr.mxu0 0.0
        %1129 = vmatpush1.msra.mxu0 0.0
        %1130 = vmatprep.subr.mxu0 0.0
        %1131 = vmatpush1.msra.mxu0 0.0
        %1132 = vmatprep.subr.mxu0 0.0
        %1133 = vmatpush1.msra.mxu0 0.0
        %1134 = vmatprep.subr.mxu0 0.0
        %1135 = vmatpush1.msra.mxu0 0.0
        %1136 = vmatprep.subr.mxu0 0.0
        %1137 = vmatpush1.msra.mxu0 0.0
        %1138 = vmatprep.subr.mxu0 0.0
        %1139 = vmatpush1.msra.mxu0 0.0
        %1140 = vmatprep.subr.mxu0 0.0
        %1141 = vmatpush1.msra.mxu0 0.0
        %1142 = vmatprep.subr.mxu0 0.0
        %1143 = vmatpush1.msra.mxu0 0.0
        %1144 = vmatprep.subr.mxu0 0.0
        %1145 = vmatpush1.msra.mxu0 0.0
        %1146 = vmatprep.subr.mxu0 0.0
        %1147 = vmatpush1.msra.mxu0 0.0
        %1148 = vmatprep.subr.mxu0 0.0
        %1149 = vmatpush1.msra.mxu0 0.0
        %1150 = vmatprep.subr.mxu0 0.0
        %1151 = vmatpush1.msra.mxu0 0.0
        %1152 = vmatprep.subr.mxu0 0.0
        %1153 = vmatpush1.msra.mxu0 0.0
        %1154 = vmatprep.subr.mxu0 0.0
        %1155 = vmatpush1.msra.mxu0 0.0
        %1156 = vmatprep.subr.mxu0 0.0
        %1157 = vmatpush1.msra.mxu0 0.0
        %1158 = vmatprep.mubr.f32.mxu0 0.0
        %1159 = vmatmul.mubr.f32.gmra.mrb[0].mxu0 %v1076
        %v1160 = vpop.f32.mrb[0].mxu0
        %v1161 = vadd.f32 0.0, %v1160
        %v1162 = vpop.f32.mrb[0].mxu0
        %1163 = vmatprep.mubr.f32.mxu0 0.0
        %1164 = vmatmul.mubr.f32.gmra.mrb[0].mxu0 %v1075
        %v1165 = vpop.f32.mrb[0].mxu0
        %v1166 = vadd.f32 0.0, %v1165
        %v1167 = vpop.f32.mrb[0].mxu0
        %1168 = vmatprep.mubr.f32.mxu0 0.0
        %1169 = vmatmul.mubr.f32.gmra.mrb[0].mxu0 %v1074
        %v1170 = vpop.f32.mrb[0].mxu0
        %v1171 = vadd.f32 0.0, %v1170
        %v1172 = vpop.f32.mrb[0].mxu0
        %1173 = vmatprep.mubr.f32.mxu0 0.0
        %1174 = vmatmul.mubr.f32.gmra.mrb[0].mxu0 %v1073
        %v1175 = vpop.f32.mrb[0].mxu0
        %v1176 = vadd.f32 0.0, %v1175
        %v1177 = vpop.f32.mrb[0].mxu0
        %1178 = vmatprep.mubr.f32.mxu0 0.0
        %1179 = vmatmul.mubr.f32.gmra.mrb[0].mxu0 %v1072
        %v1180 = vpop.f32.mrb[0].mxu0
        %v1181 = vadd.f32 0.0, %v1180
        %v1182 = vpop.f32.mrb[0].mxu0
        %1183 = vmatprep.mubr.f32.mxu0 0.0
        %1184 = vmatmul.mubr.f32.gmra.mrb[0].mxu0 %v1071
        %v1185 = vpop.f32.mrb[0].mxu0
        %v1186 = vadd.f32 0.0, %v1185
        %v1187 = vpop.f32.mrb[0].mxu0
        %1188 = vmatprep.mubr.f32.mxu0 0.0
        %1189 = vmatmul.mubr.f32.gmra.mrb[0].mxu0 %v1070
        %v1190 = vpop.f32.mrb[0].mxu0
        %v1191 = vadd.f32 0.0, %v1190
        %v1192 = vpop.f32.mrb[0].mxu0
        %1193 = vmatprep.mubr.f32.mxu0 0.0
        %1194 = vmatmul.mubr.f32.gmra.mrb[0].mxu0 %v1069
        %v1195 = vpop.f32.mrb[0].mxu0
        %v1196 = vadd.f32 0.0, %v1195
        %v1197 = vpop.f32.mrb[0].mxu0
        %1198 = vmatprep.mubr.f32.mxu0 0.0
        %1199 = vmatmul.mubr.f32.gmra.mrb[0].mxu0 %v1068
        %v1200 = vpop.f32.mrb[0].mxu0
        %v1201 = vadd.f32 0.0, %v1200
        %v1202 = vpop.f32.mrb[0].mxu0
        %1203 = vmatprep.mubr.f32.mxu0 0.0
        %1204 = vmatmul.mubr.f32.gmra.mrb[0].mxu0 %v1067
        %v1205 = vpop.f32.mrb[0].mxu0
        %v1206 = vadd.f32 0.0, %v1205
        %v1207 = vpop.f32.mrb[0].mxu0
        %1208 = vmatprep.mubr.f32.mxu0 0.0
        %1209 = vmatmul.mubr.f32.gmra.mrb[0].mxu0 %v1066
        %v1210 = vpop.f32.mrb[0].mxu0
        %v1211 = vadd.f32 0.0, %v1210
        %v1212 = vpop.f32.mrb[0].mxu0
        %1213 = vmatprep.mubr.f32.mxu0 0.0
        %1214 = vmatmul.mubr.f32.gmra.mrb[0].mxu0 %v1065
        %v1215 = vpop.f32.mrb[0].mxu0
        %v1216 = vadd.f32 0.0, %v1215
        %v1217 = vpop.f32.mrb[0].mxu0
        %1218 = vmatprep.mubr.f32.mxu0 0.0
        %1219 = vmatmul.mubr.f32.gmra.mrb[0].mxu0 %v1064
        %v1220 = vpop.f32.mrb[0].mxu0
        %v1221 = vadd.f32 0.0, %v1220
        %v1222 = vpop.f32.mrb[0].mxu0
        %1223 = vmatprep.mubr.f32.mxu0 0.0
        %1224 = vmatmul.mubr.f32.gmra.mrb[0].mxu0 %v1063
        %v1225 = vpop.f32.mrb[0].mxu0
        %v1226 = vadd.f32 0.0, %v1225
        %v1227 = vpop.f32.mrb[0].mxu0
        %1228 = vmatprep.mubr.f32.mxu0 0.0
        %1229 = vmatmul.mubr.f32.gmra.mrb[0].mxu0 %v1062
        %v1230 = vpop.f32.mrb[0].mxu0
        %v1231 = vadd.f32 0.0, %v1230
        %v1232 = vpop.f32.mrb[0].mxu0
        %1233 = vmatprep.mubr.f32.mxu0 0.0
        %1234 = vmatmul.mubr.f32.gmra.mrb[0].mxu0 %v1061
        %v1235 = vpop.f32.mrb[0].mxu0
        %v1236 = vadd.f32 0.0, %v1235
        %v1237 = vpop.f32.mrb[0].mxu0
        %1238 = vmatprep.mubr.f32.mxu0 0.0
        %1239 = vmatmul.mubr.f32.gmra.mrb[0].mxu0 %v1060
        %v1240 = vpop.f32.mrb[0].mxu0
        %v1241 = vadd.f32 0.0, %v1240
        %v1242 = vpop.f32.mrb[0].mxu0
        %1243 = vmatprep.mubr.f32.mxu0 0.0
        %1244 = vmatmul.mubr.f32.gmra.mrb[0].mxu0 %v1059
        %v1245 = vpop.f32.mrb[0].mxu0
        %v1246 = vadd.f32 0.0, %v1245
        %v1247 = vpop.f32.mrb[0].mxu0
        %1248 = vmatprep.mubr.f32.mxu0 0.0
        %1249 = vmatmul.mubr.f32.gmra.mrb[0].mxu0 %v1058
        %v1250 = vpop.f32.mrb[0].mxu0
        %v1251 = vadd.f32 0.0, %v1250
        %v1252 = vpop.f32.mrb[0].mxu0
        %1253 = vmatprep.mubr.f32.mxu0 0.0
        %1254 = vmatmul.mubr.f32.gmra.mrb[0].mxu0 %v1057
        %v1255 = vpop.f32.mrb[0].mxu0
        %v1256 = vadd.f32 0.0, %v1255
        %v1257 = vpop.f32.mrb[0].mxu0
        %1258 = vmatprep.mubr.f32.mxu0 0.0
        %1259 = vmatmul.mubr.f32.gmra.mrb[0].mxu0 %v1056
        %v1260 = vpop.f32.mrb[0].mxu0
        %v1261 = vadd.f32 0.0, %v1260
        %v1262 = vpop.f32.mrb[0].mxu0
        %1263 = vmatprep.mubr.f32.mxu0 0.0
        %1264 = vmatmul.mubr.f32.gmra.mrb[0].mxu0 %v1055
        %v1265 = vpop.f32.mrb[0].mxu0
        %v1266 = vadd.f32 0.0, %v1265
        %v1267 = vpop.f32.mrb[0].mxu0
        %1268 = vmatprep.mubr.f32.mxu0 0.0
        %1269 = vmatmul.mubr.f32.gmra.mrb[0].mxu0 %v1054
        %v1270 = vpop.f32.mrb[0].mxu0
        %v1271 = vadd.f32 0.0, %v1270
        %v1272 = vpop.f32.mrb[0].mxu0
        %1273 = vmatprep.mubr.f32.mxu0 0.0
        %1274 = vmatmul.mubr.f32.gmra.mrb[0].mxu0 %v1053
        %v1275 = vpop.f32.mrb[0].mxu0
        %v1276 = vadd.f32 0.0, %v1275
        %v1277 = vpop.f32.mrb[0].mxu0
        %1278 = vdwg.mxu0
        %v1279 = vadd.f32 %v978, %v1161
        %v1280 = vadd.f32 %v979, %v1166
        %v1281 = vadd.f32 %v980, %v1171
        %v1282 = vadd.f32 %v981, %v1176
        %v1283 = vadd.f32 %v982, %v1181
        %v1284 = vadd.f32 %v983, %v1186
        %v1285 = vadd.f32 %v984, %v1191
        %v1286 = vadd.f32 %v985, %v1196
        %v1287 = vadd.f32 %v986, %v1201
        %v1288 = vadd.f32 %v987, %v1206
        %v1289 = vadd.f32 %v988, %v1211
        %v1290 = vadd.f32 %v989, %v1216
        %v1291 = vadd.f32 %v990, %v1221
        %v1292 = vadd.f32 %v991, %v1226
        %v1293 = vadd.f32 %v992, %v1231
        %v1294 = vadd.f32 %v993, %v1236
        %v1295 = vadd.f32 %v994, %v1241
        %v1296 = vadd.f32 %v995, %v1246
        %v1297 = vadd.f32 %v996, %v1251
        %v1298 = vadd.f32 %v997, %v1256
        %v1299 = vadd.f32 %v998, %v1261
        %v1300 = vadd.f32 %v999, %v1266
        %v1301 = vadd.f32 %v1000, %v1271
        %v1302 = vadd.f32 %v1001, %v1276
        %s1303 = scalar_lea.vmem [#allocation5], 512
        %v1304 = vld [vmem:[%s1303] sm:$0xff]
        %v1305 = vld [vmem:[%s1303 + $0x8] sm:$0xff]
        %v1306 = vld [vmem:[%s1303 + $0x10] sm:$0xff]
        %v1307 = vld [vmem:[%s1303 + $0x18] sm:$0xff]
        %v1308 = vld [vmem:[%s1303 + $0x20] sm:$0xff]
        %v1309 = vld [vmem:[%s1303 + $0x28] sm:$0xff]
        %v1310 = vld [vmem:[%s1303 + $0x30] sm:$0xff]
        %v1311 = vld [vmem:[%s1303 + $0x38] sm:$0xff]
        %v1312 = vld [vmem:[%s1303 + $0x40] sm:$0xff]
        %v1313 = vld [vmem:[%s1303 + $0x48] sm:$0xff]
        %v1314 = vld [vmem:[%s1303 + $0x50] sm:$0xff]
        %v1315 = vld [vmem:[%s1303 + $0x58] sm:$0xff]
        %v1316 = vld [vmem:[%s1303 + $0x60] sm:$0xff]
        %v1317 = vld [vmem:[%s1303 + $0x68] sm:$0xff]
        %v1318 = vld [vmem:[%s1303 + $0x70] sm:$0xff]
        %v1319 = vld [vmem:[%s1303 + $0x78] sm:$0xff]
        %1320 = vmatprep.subr.mxu0 0.0
        %1321 = vmatpush1.msra.mxu0 %v1304
        %1322 = vmatprep.subr.mxu0 0.0
        %1323 = vmatpush1.msra.mxu0 %v1305
        %1324 = vmatprep.subr.mxu0 0.0
        %1325 = vmatpush1.msra.mxu0 %v1306
        %1326 = vmatprep.subr.mxu0 0.0
        %1327 = vmatpush1.msra.mxu0 %v1307
        %1328 = vmatprep.subr.mxu0 0.0
        %1329 = vmatpush1.msra.mxu0 %v1308
        %1330 = vmatprep.subr.mxu0 0.0
        %1331 = vmatpush1.msra.mxu0 %v1309
        %1332 = vmatprep.subr.mxu0 0.0
        %1333 = vmatpush1.msra.mxu0 %v1310
        %1334 = vmatprep.subr.mxu0 0.0
        %1335 = vmatpush1.msra.mxu0 %v1311
        %1336 = vmatprep.subr.mxu0 0.0
        %1337 = vmatpush1.msra.mxu0 %v1312
        %1338 = vmatprep.subr.mxu0 0.0
        %1339 = vmatpush1.msra.mxu0 %v1313
        %1340 = vmatprep.subr.mxu0 0.0
        %1341 = vmatpush1.msra.mxu0 %v1314
        %1342 = vmatprep.subr.mxu0 0.0
        %1343 = vmatpush1.msra.mxu0 %v1315
        %1344 = vmatprep.subr.mxu0 0.0
        %1345 = vmatpush1.msra.mxu0 %v1316
        %1346 = vmatprep.subr.mxu0 0.0
        %1347 = vmatpush1.msra.mxu0 %v1317
        %1348 = vmatprep.subr.mxu0 0.0
        %1349 = vmatpush1.msra.mxu0 %v1318
        %1350 = vmatprep.subr.mxu0 0.0
        %1351 = vmatpush1.msra.mxu0 %v1319
        %1352 = vmatprep.subr.mxu0 0.0
        %1353 = vmatpush1.msra.mxu0 0.0
        %1354 = vmatprep.subr.mxu0 0.0
        %1355 = vmatpush1.msra.mxu0 0.0
        %1356 = vmatprep.subr.mxu0 0.0
        %1357 = vmatpush1.msra.mxu0 0.0
        %1358 = vmatprep.subr.mxu0 0.0
        %1359 = vmatpush1.msra.mxu0 0.0
        %1360 = vmatprep.subr.mxu0 0.0
        %1361 = vmatpush1.msra.mxu0 0.0
        %1362 = vmatprep.subr.mxu0 0.0
        %1363 = vmatpush1.msra.mxu0 0.0
        %1364 = vmatprep.subr.mxu0 0.0
        %1365 = vmatpush1.msra.mxu0 0.0
        %1366 = vmatprep.subr.mxu0 0.0
        %1367 = vmatpush1.msra.mxu0 0.0
        %1368 = vmatprep.subr.mxu0 0.0
        %1369 = vmatpush1.msra.mxu0 0.0
        %1370 = vmatprep.subr.mxu0 0.0
        %1371 = vmatpush1.msra.mxu0 0.0
        %1372 = vmatprep.subr.mxu0 0.0
        %1373 = vmatpush1.msra.mxu0 0.0
        %1374 = vmatprep.subr.mxu0 0.0
        %1375 = vmatpush1.msra.mxu0 0.0
        %1376 = vmatprep.subr.mxu0 0.0
        %1377 = vmatpush1.msra.mxu0 0.0
        %1378 = vmatprep.subr.mxu0 0.0
        %1379 = vmatpush1.msra.mxu0 0.0
        %1380 = vmatprep.subr.mxu0 0.0
        %1381 = vmatpush1.msra.mxu0 0.0
        %1382 = vmatprep.subr.mxu0 0.0
        %1383 = vmatpush1.msra.mxu0 0.0
        %1384 = vmatprep.mubr.f32.mxu0 0.0
        %1385 = vmatmul.mubr.f32.gmra.mrb[0].mxu0 %v1005
        %v1386 = vpop.f32.mrb[0].mxu0
        %v1387 = vadd.f32 0.0, %v1386
        %v1388 = vpop.f32.mrb[0].mxu0
        %1389 = vmatprep.mubr.f32.mxu0 0.0
        %1390 = vmatmul.mubr.f32.gmra.mrb[0].mxu0 %v1006
        %v1391 = vpop.f32.mrb[0].mxu0
        %v1392 = vadd.f32 0.0, %v1391
        %v1393 = vpop.f32.mrb[0].mxu0
        %1394 = vmatprep.mubr.f32.mxu0 0.0
        %1395 = vmatmul.mubr.f32.gmra.mrb[0].mxu0 %v1007
        %v1396 = vpop.f32.mrb[0].mxu0
        %v1397 = vadd.f32 0.0, %v1396
        %v1398 = vpop.f32.mrb[0].mxu0
        %1399 = vmatprep.mubr.f32.mxu0 0.0
        %1400 = vmatmul.mubr.f32.gmra.mrb[0].mxu0 %v1008
        %v1401 = vpop.f32.mrb[0].mxu0
        %v1402 = vadd.f32 0.0, %v1401
        %v1403 = vpop.f32.mrb[0].mxu0
        %1404 = vmatprep.mubr.f32.mxu0 0.0
        %1405 = vmatmul.mubr.f32.gmra.mrb[0].mxu0 %v1009
        %v1406 = vpop.f32.mrb[0].mxu0
        %v1407 = vadd.f32 0.0, %v1406
        %v1408 = vpop.f32.mrb[0].mxu0
        %1409 = vmatprep.mubr.f32.mxu0 0.0
        %1410 = vmatmul.mubr.f32.gmra.mrb[0].mxu0 %v1010
        %v1411 = vpop.f32.mrb[0].mxu0
        %v1412 = vadd.f32 0.0, %v1411
        %v1413 = vpop.f32.mrb[0].mxu0
        %1414 = vmatprep.mubr.f32.mxu0 0.0
        %1415 = vmatmul.mubr.f32.gmra.mrb[0].mxu0 %v1011
        %v1416 = vpop.f32.mrb[0].mxu0
        %v1417 = vadd.f32 0.0, %v1416
        %v1418 = vpop.f32.mrb[0].mxu0
        %1419 = vmatprep.mubr.f32.mxu0 0.0
        %1420 = vmatmul.mubr.f32.gmra.mrb[0].mxu0 %v1012
        %v1421 = vpop.f32.mrb[0].mxu0
        %v1422 = vadd.f32 0.0, %v1421
        %v1423 = vpop.f32.mrb[0].mxu0
        %1424 = vmatprep.mubr.f32.mxu0 0.0
        %1425 = vmatmul.mubr.f32.gmra.mrb[0].mxu0 %v1013
        %v1426 = vpop.f32.mrb[0].mxu0
        %v1427 = vadd.f32 0.0, %v1426
        %v1428 = vpop.f32.mrb[0].mxu0
        %1429 = vmatprep.mubr.f32.mxu0 0.0
        %1430 = vmatmul.mubr.f32.gmra.mrb[0].mxu0 %v1014
        %v1431 = vpop.f32.mrb[0].mxu0
        %v1432 = vadd.f32 0.0, %v1431
        %v1433 = vpop.f32.mrb[0].mxu0
        %1434 = vmatprep.mubr.f32.mxu0 0.0
        %1435 = vmatmul.mubr.f32.gmra.mrb[0].mxu0 %v1015
        %v1436 = vpop.f32.mrb[0].mxu0
        %v1437 = vadd.f32 0.0, %v1436
        %v1438 = vpop.f32.mrb[0].mxu0
        %1439 = vmatprep.mubr.f32.mxu0 0.0
        %1440 = vmatmul.mubr.f32.gmra.mrb[0].mxu0 %v1016
        %v1441 = vpop.f32.mrb[0].mxu0
        %v1442 = vadd.f32 0.0, %v1441
        %v1443 = vpop.f32.mrb[0].mxu0
        %1444 = vmatprep.mubr.f32.mxu0 0.0
        %1445 = vmatmul.mubr.f32.gmra.mrb[0].mxu0 %v1017
        %v1446 = vpop.f32.mrb[0].mxu0
        %v1447 = vadd.f32 0.0, %v1446
        %v1448 = vpop.f32.mrb[0].mxu0
        %1449 = vmatprep.mubr.f32.mxu0 0.0
        %1450 = vmatmul.mubr.f32.gmra.mrb[0].mxu0 %v1018
        %v1451 = vpop.f32.mrb[0].mxu0
        %v1452 = vadd.f32 0.0, %v1451
        %v1453 = vpop.f32.mrb[0].mxu0
        %1454 = vmatprep.mubr.f32.mxu0 0.0
        %1455 = vmatmul.mubr.f32.gmra.mrb[0].mxu0 %v1019
        %v1456 = vpop.f32.mrb[0].mxu0
        %v1457 = vadd.f32 0.0, %v1456
        %v1458 = vpop.f32.mrb[0].mxu0
        %1459 = vmatprep.mubr.f32.mxu0 0.0
        %1460 = vmatmul.mubr.f32.gmra.mrb[0].mxu0 %v1020
        %v1461 = vpop.f32.mrb[0].mxu0
        %v1462 = vadd.f32 0.0, %v1461
        %v1463 = vpop.f32.mrb[0].mxu0
        %1464 = vmatprep.mubr.f32.mxu0 0.0
        %1465 = vmatmul.mubr.f32.gmra.mrb[0].mxu0 %v1021
        %v1466 = vpop.f32.mrb[0].mxu0
        %v1467 = vadd.f32 0.0, %v1466
        %v1468 = vpop.f32.mrb[0].mxu0
        %1469 = vmatprep.mubr.f32.mxu0 0.0
        %1470 = vmatmul.mubr.f32.gmra.mrb[0].mxu0 %v1022
        %v1471 = vpop.f32.mrb[0].mxu0
        %v1472 = vadd.f32 0.0, %v1471
        %v1473 = vpop.f32.mrb[0].mxu0
        %1474 = vmatprep.mubr.f32.mxu0 0.0
        %1475 = vmatmul.mubr.f32.gmra.mrb[0].mxu0 %v1023
        %v1476 = vpop.f32.mrb[0].mxu0
        %v1477 = vadd.f32 0.0, %v1476
        %v1478 = vpop.f32.mrb[0].mxu0
        %1479 = vmatprep.mubr.f32.mxu0 0.0
        %1480 = vmatmul.mubr.f32.gmra.mrb[0].mxu0 %v1024
        %v1481 = vpop.f32.mrb[0].mxu0
        %v1482 = vadd.f32 0.0, %v1481
        %v1483 = vpop.f32.mrb[0].mxu0
        %1484 = vmatprep.mubr.f32.mxu0 0.0
        %1485 = vmatmul.mubr.f32.gmra.mrb[0].mxu0 %v1025
        %v1486 = vpop.f32.mrb[0].mxu0
        %v1487 = vadd.f32 0.0, %v1486
        %v1488 = vpop.f32.mrb[0].mxu0
        %1489 = vmatprep.mubr.f32.mxu0 0.0
        %1490 = vmatmul.mubr.f32.gmra.mrb[0].mxu0 %v1026
        %v1491 = vpop.f32.mrb[0].mxu0
        %v1492 = vadd.f32 0.0, %v1491
        %v1493 = vpop.f32.mrb[0].mxu0
        %1494 = vmatprep.mubr.f32.mxu0 0.0
        %1495 = vmatmul.mubr.f32.gmra.mrb[0].mxu0 %v1027
        %v1496 = vpop.f32.mrb[0].mxu0
        %v1497 = vadd.f32 0.0, %v1496
        %v1498 = vpop.f32.mrb[0].mxu0
        %1499 = vmatprep.mubr.f32.mxu0 0.0
        %1500 = vmatmul.mubr.f32.gmra.mrb[0].mxu0 %v1028
        %v1501 = vpop.f32.mrb[0].mxu0
        %v1502 = vadd.f32 0.0, %v1501
        %v1503 = vpop.f32.mrb[0].mxu0
        %1504 = vdwg.mxu0
        %v1505 = vadd.f32 %v1279, %v1387
        %v1506 = vadd.f32 %v1280, %v1392
        %v1507 = vadd.f32 %v1281, %v1397
        %v1508 = vadd.f32 %v1282, %v1402
        %v1509 = vadd.f32 %v1283, %v1407
        %v1510 = vadd.f32 %v1284, %v1412
        %v1511 = vadd.f32 %v1285, %v1417
        %v1512 = vadd.f32 %v1286, %v1422
        %v1513 = vadd.f32 %v1287, %v1427
        %v1514 = vadd.f32 %v1288, %v1432
        %v1515 = vadd.f32 %v1289, %v1437
        %v1516 = vadd.f32 %v1290, %v1442
        %v1517 = vadd.f32 %v1291, %v1447
        %v1518 = vadd.f32 %v1292, %v1452
        %v1519 = vadd.f32 %v1293, %v1457
        %v1520 = vadd.f32 %v1294, %v1462
        %v1521 = vadd.f32 %v1295, %v1467
        %v1522 = vadd.f32 %v1296, %v1472
        %v1523 = vadd.f32 %v1297, %v1477
        %v1524 = vadd.f32 %v1298, %v1482
        %v1525 = vadd.f32 %v1299, %v1487
        %v1526 = vadd.f32 %v1300, %v1492
        %v1527 = vadd.f32 %v1301, %v1497
        %v1528 = vadd.f32 %v1302, %v1502
        %v1529 = vrot.slane %v1005, 1
        %v1530 = vrot.slane %v1006, 1
        %v1531 = vrot.slane %v1007, 1
        %v1532 = vrot.slane %v1008, 1
        %v1533 = vrot.slane %v1009, 1
        %v1534 = vrot.slane %v1010, 1
        %v1535 = vrot.slane %v1011, 1
        %v1536 = vrot.slane %v1012, 1
        %v1537 = vrot.slane %v1013, 1
        %v1538 = vrot.slane %v1014, 1
        %v1539 = vrot.slane %v1015, 1
        %v1540 = vrot.slane %v1016, 1
        %v1541 = vrot.slane %v1017, 1
        %v1542 = vrot.slane %v1018, 1
        %v1543 = vrot.slane %v1019, 1
        %v1544 = vrot.slane %v1020, 1
        %v1545 = vrot.slane %v1021, 1
        %v1546 = vrot.slane %v1022, 1
        %v1547 = vrot.slane %v1023, 1
        %v1548 = vrot.slane %v1024, 1
        %v1549 = vrot.slane %v1025, 1
        %v1550 = vrot.slane %v1026, 1
        %v1551 = vrot.slane %v1027, 1
        %v1552 = vrot.slane %v1028, 1
        %v1553 = vsel %vm751, %v1551, %v1552
        %v1554 = vsel %vm751, %v1550, %v1551
        %v1555 = vsel %vm751, %v1549, %v1550
        %v1556 = vsel %vm751, %v1548, %v1549
        %v1557 = vsel %vm751, %v1547, %v1548
        %v1558 = vsel %vm751, %v1546, %v1547
        %v1559 = vsel %vm751, %v1545, %v1546
        %v1560 = vsel %vm751, %v1544, %v1545
        %v1561 = vsel %vm751, %v1543, %v1544
        %v1562 = vsel %vm751, %v1542, %v1543
        %v1563 = vsel %vm751, %v1541, %v1542
        %v1564 = vsel %vm751, %v1540, %v1541
        %v1565 = vsel %vm751, %v1539, %v1540
        %v1566 = vsel %vm751, %v1538, %v1539
        %v1567 = vsel %vm751, %v1537, %v1538
        %v1568 = vsel %vm751, %v1536, %v1537
        %v1569 = vsel %vm751, %v1535, %v1536
        %v1570 = vsel %vm751, %v1534, %v1535
        %v1571 = vsel %vm751, %v1533, %v1534
        %v1572 = vsel %vm751, %v1532, %v1533
        %v1573 = vsel %vm751, %v1531, %v1532
        %v1574 = vsel %vm751, %v1530, %v1531
        %v1575 = vsel %vm751, %v1529, %v1530
        %v1576 = vsel %vm751, %v1552, %v1529
        %s1577 = scalar_lea.vmem [#allocation5], 640
        %v1578 = vld [vmem:[%s1577] sm:$0xff]
        %v1579 = vld [vmem:[%s1577 + $0x8] sm:$0xff]
        %v1580 = vld [vmem:[%s1577 + $0x10] sm:$0xff]
        %v1581 = vld [vmem:[%s1577 + $0x18] sm:$0xff]
        %v1582 = vld [vmem:[%s1577 + $0x20] sm:$0xff]
        %v1583 = vld [vmem:[%s1577 + $0x28] sm:$0xff]
        %v1584 = vld [vmem:[%s1577 + $0x30] sm:$0xff]
        %v1585 = vld [vmem:[%s1577 + $0x38] sm:$0xff]
        %v1586 = vld [vmem:[%s1577 + $0x40] sm:$0xff]
        %v1587 = vld [vmem:[%s1577 + $0x48] sm:$0xff]
        %v1588 = vld [vmem:[%s1577 + $0x50] sm:$0xff]
        %v1589 = vld [vmem:[%s1577 + $0x58] sm:$0xff]
        %v1590 = vld [vmem:[%s1577 + $0x60] sm:$0xff]
        %v1591 = vld [vmem:[%s1577 + $0x68] sm:$0xff]
        %v1592 = vld [vmem:[%s1577 + $0x70] sm:$0xff]
        %v1593 = vld [vmem:[%s1577 + $0x78] sm:$0xff]
        %1594 = vmatprep.subr.mxu0 0.0
        %1595 = vmatpush1.msra.mxu0 %v1578
        %1596 = vmatprep.subr.mxu0 0.0
        %1597 = vmatpush1.msra.mxu0 %v1579
        %1598 = vmatprep.subr.mxu0 0.0
        %1599 = vmatpush1.msra.mxu0 %v1580
        %1600 = vmatprep.subr.mxu0 0.0
        %1601 = vmatpush1.msra.mxu0 %v1581
        %1602 = vmatprep.subr.mxu0 0.0
        %1603 = vmatpush1.msra.mxu0 %v1582
        %1604 = vmatprep.subr.mxu0 0.0
        %1605 = vmatpush1.msra.mxu0 %v1583
        %1606 = vmatprep.subr.mxu0 0.0
        %1607 = vmatpush1.msra.mxu0 %v1584
        %1608 = vmatprep.subr.mxu0 0.0
        %1609 = vmatpush1.msra.mxu0 %v1585
        %1610 = vmatprep.subr.mxu0 0.0
        %1611 = vmatpush1.msra.mxu0 %v1586
        %1612 = vmatprep.subr.mxu0 0.0
        %1613 = vmatpush1.msra.mxu0 %v1587
        %1614 = vmatprep.subr.mxu0 0.0
        %1615 = vmatpush1.msra.mxu0 %v1588
        %1616 = vmatprep.subr.mxu0 0.0
        %1617 = vmatpush1.msra.mxu0 %v1589
        %1618 = vmatprep.subr.mxu0 0.0
        %1619 = vmatpush1.msra.mxu0 %v1590
        %1620 = vmatprep.subr.mxu0 0.0
        %1621 = vmatpush1.msra.mxu0 %v1591
        %1622 = vmatprep.subr.mxu0 0.0
        %1623 = vmatpush1.msra.mxu0 %v1592
        %1624 = vmatprep.subr.mxu0 0.0
        %1625 = vmatpush1.msra.mxu0 %v1593
        %1626 = vmatprep.subr.mxu0 0.0
        %1627 = vmatpush1.msra.mxu0 0.0
        %1628 = vmatprep.subr.mxu0 0.0
        %1629 = vmatpush1.msra.mxu0 0.0
        %1630 = vmatprep.subr.mxu0 0.0
        %1631 = vmatpush1.msra.mxu0 0.0
        %1632 = vmatprep.subr.mxu0 0.0
        %1633 = vmatpush1.msra.mxu0 0.0
        %1634 = vmatprep.subr.mxu0 0.0
        %1635 = vmatpush1.msra.mxu0 0.0
        %1636 = vmatprep.subr.mxu0 0.0
        %1637 = vmatpush1.msra.mxu0 0.0
        %1638 = vmatprep.subr.mxu0 0.0
        %1639 = vmatpush1.msra.mxu0 0.0
        %1640 = vmatprep.subr.mxu0 0.0
        %1641 = vmatpush1.msra.mxu0 0.0
        %1642 = vmatprep.subr.mxu0 0.0
        %1643 = vmatpush1.msra.mxu0 0.0
        %1644 = vmatprep.subr.mxu0 0.0
        %1645 = vmatpush1.msra.mxu0 0.0
        %1646 = vmatprep.subr.mxu0 0.0
        %1647 = vmatpush1.msra.mxu0 0.0
        %1648 = vmatprep.subr.mxu0 0.0
        %1649 = vmatpush1.msra.mxu0 0.0
        %1650 = vmatprep.subr.mxu0 0.0
        %1651 = vmatpush1.msra.mxu0 0.0
        %1652 = vmatprep.subr.mxu0 0.0
        %1653 = vmatpush1.msra.mxu0 0.0
        %1654 = vmatprep.subr.mxu0 0.0
        %1655 = vmatpush1.msra.mxu0 0.0
        %1656 = vmatprep.subr.mxu0 0.0
        %1657 = vmatpush1.msra.mxu0 0.0
        %1658 = vmatprep.mubr.f32.mxu0 0.0
        %1659 = vmatmul.mubr.f32.gmra.mrb[0].mxu0 %v1575
        %v1660 = vpop.f32.mrb[0].mxu0
        %v1661 = vadd.f32 0.0, %v1660
        %v1662 = vpop.f32.mrb[0].mxu0
        %1663 = vmatprep.mubr.f32.mxu0 0.0
        %1664 = vmatmul.mubr.f32.gmra.mrb[0].mxu0 %v1574
        %v1665 = vpop.f32.mrb[0].mxu0
        %v1666 = vadd.f32 0.0, %v1665
        %v1667 = vpop.f32.mrb[0].mxu0
        %1668 = vmatprep.mubr.f32.mxu0 0.0
        %1669 = vmatmul.mubr.f32.gmra.mrb[0].mxu0 %v1573
        %v1670 = vpop.f32.mrb[0].mxu0
        %v1671 = vadd.f32 0.0, %v1670
        %v1672 = vpop.f32.mrb[0].mxu0
        %1673 = vmatprep.mubr.f32.mxu0 0.0
        %1674 = vmatmul.mubr.f32.gmra.mrb[0].mxu0 %v1572
        %v1675 = vpop.f32.mrb[0].mxu0
        %v1676 = vadd.f32 0.0, %v1675
        %v1677 = vpop.f32.mrb[0].mxu0
        %1678 = vmatprep.mubr.f32.mxu0 0.0
        %1679 = vmatmul.mubr.f32.gmra.mrb[0].mxu0 %v1571
        %v1680 = vpop.f32.mrb[0].mxu0
        %v1681 = vadd.f32 0.0, %v1680
        %v1682 = vpop.f32.mrb[0].mxu0
        %1683 = vmatprep.mubr.f32.mxu0 0.0
        %1684 = vmatmul.mubr.f32.gmra.mrb[0].mxu0 %v1570
        %v1685 = vpop.f32.mrb[0].mxu0
        %v1686 = vadd.f32 0.0, %v1685
        %v1687 = vpop.f32.mrb[0].mxu0
        %1688 = vmatprep.mubr.f32.mxu0 0.0
        %1689 = vmatmul.mubr.f32.gmra.mrb[0].mxu0 %v1569
        %v1690 = vpop.f32.mrb[0].mxu0
        %v1691 = vadd.f32 0.0, %v1690
        %v1692 = vpop.f32.mrb[0].mxu0
        %1693 = vmatprep.mubr.f32.mxu0 0.0
        %1694 = vmatmul.mubr.f32.gmra.mrb[0].mxu0 %v1568
        %v1695 = vpop.f32.mrb[0].mxu0
        %v1696 = vadd.f32 0.0, %v1695
        %v1697 = vpop.f32.mrb[0].mxu0
        %1698 = vmatprep.mubr.f32.mxu0 0.0
        %1699 = vmatmul.mubr.f32.gmra.mrb[0].mxu0 %v1567
        %v1700 = vpop.f32.mrb[0].mxu0
        %v1701 = vadd.f32 0.0, %v1700
        %v1702 = vpop.f32.mrb[0].mxu0
        %1703 = vmatprep.mubr.f32.mxu0 0.0
        %1704 = vmatmul.mubr.f32.gmra.mrb[0].mxu0 %v1566
        %v1705 = vpop.f32.mrb[0].mxu0
        %v1706 = vadd.f32 0.0, %v1705
        %v1707 = vpop.f32.mrb[0].mxu0
        %1708 = vmatprep.mubr.f32.mxu0 0.0
        %1709 = vmatmul.mubr.f32.gmra.mrb[0].mxu0 %v1565
        %v1710 = vpop.f32.mrb[0].mxu0
        %v1711 = vadd.f32 0.0, %v1710
        %v1712 = vpop.f32.mrb[0].mxu0
        %1713 = vmatprep.mubr.f32.mxu0 0.0
        %1714 = vmatmul.mubr.f32.gmra.mrb[0].mxu0 %v1564
        %v1715 = vpop.f32.mrb[0].mxu0
        %v1716 = vadd.f32 0.0, %v1715
        %v1717 = vpop.f32.mrb[0].mxu0
        %1718 = vmatprep.mubr.f32.mxu0 0.0
        %1719 = vmatmul.mubr.f32.gmra.mrb[0].mxu0 %v1563
        %v1720 = vpop.f32.mrb[0].mxu0
        %v1721 = vadd.f32 0.0, %v1720
        %v1722 = vpop.f32.mrb[0].mxu0
        %1723 = vmatprep.mubr.f32.mxu0 0.0
        %1724 = vmatmul.mubr.f32.gmra.mrb[0].mxu0 %v1562
        %v1725 = vpop.f32.mrb[0].mxu0
        %v1726 = vadd.f32 0.0, %v1725
        %v1727 = vpop.f32.mrb[0].mxu0
        %1728 = vmatprep.mubr.f32.mxu0 0.0
        %1729 = vmatmul.mubr.f32.gmra.mrb[0].mxu0 %v1561
        %v1730 = vpop.f32.mrb[0].mxu0
        %v1731 = vadd.f32 0.0, %v1730
        %v1732 = vpop.f32.mrb[0].mxu0
        %1733 = vmatprep.mubr.f32.mxu0 0.0
        %1734 = vmatmul.mubr.f32.gmra.mrb[0].mxu0 %v1560
        %v1735 = vpop.f32.mrb[0].mxu0
        %v1736 = vadd.f32 0.0, %v1735
        %v1737 = vpop.f32.mrb[0].mxu0
        %1738 = vmatprep.mubr.f32.mxu0 0.0
        %1739 = vmatmul.mubr.f32.gmra.mrb[0].mxu0 %v1559
        %v1740 = vpop.f32.mrb[0].mxu0
        %v1741 = vadd.f32 0.0, %v1740
        %v1742 = vpop.f32.mrb[0].mxu0
        %1743 = vmatprep.mubr.f32.mxu0 0.0
        %1744 = vmatmul.mubr.f32.gmra.mrb[0].mxu0 %v1558
        %v1745 = vpop.f32.mrb[0].mxu0
        %v1746 = vadd.f32 0.0, %v1745
        %v1747 = vpop.f32.mrb[0].mxu0
        %1748 = vmatprep.mubr.f32.mxu0 0.0
        %1749 = vmatmul.mubr.f32.gmra.mrb[0].mxu0 %v1557
        %v1750 = vpop.f32.mrb[0].mxu0
        %v1751 = vadd.f32 0.0, %v1750
        %v1752 = vpop.f32.mrb[0].mxu0
        %1753 = vmatprep.mubr.f32.mxu0 0.0
        %1754 = vmatmul.mubr.f32.gmra.mrb[0].mxu0 %v1556
        %v1755 = vpop.f32.mrb[0].mxu0
        %v1756 = vadd.f32 0.0, %v1755
        %v1757 = vpop.f32.mrb[0].mxu0
        %1758 = vmatprep.mubr.f32.mxu0 0.0
        %1759 = vmatmul.mubr.f32.gmra.mrb[0].mxu0 %v1555
        %v1760 = vpop.f32.mrb[0].mxu0
        %v1761 = vadd.f32 0.0, %v1760
        %v1762 = vpop.f32.mrb[0].mxu0
        %1763 = vmatprep.mubr.f32.mxu0 0.0
        %1764 = vmatmul.mubr.f32.gmra.mrb[0].mxu0 %v1554
        %v1765 = vpop.f32.mrb[0].mxu0
        %v1766 = vadd.f32 0.0, %v1765
        %v1767 = vpop.f32.mrb[0].mxu0
        %1768 = vmatprep.mubr.f32.mxu0 0.0
        %1769 = vmatmul.mubr.f32.gmra.mrb[0].mxu0 %v1553
        %v1770 = vpop.f32.mrb[0].mxu0
        %v1771 = vadd.f32 0.0, %v1770
        %v1772 = vpop.f32.mrb[0].mxu0
        %1773 = vmatprep.mubr.f32.mxu0 0.0
        %1774 = vmatmul.mubr.f32.gmra.mrb[0].mxu0 %v1576
        %v1775 = vpop.f32.mrb[0].mxu0
        %v1776 = vadd.f32 0.0, %v1775
        %v1777 = vpop.f32.mrb[0].mxu0
        %1778 = vdwg.mxu0
        %v1779 = vadd.f32 %v1505, %v1661
        %v1780 = vadd.f32 %v1506, %v1666
        %v1781 = vadd.f32 %v1507, %v1671
        %v1782 = vadd.f32 %v1508, %v1676
        %v1783 = vadd.f32 %v1509, %v1681
        %v1784 = vadd.f32 %v1510, %v1686
        %v1785 = vadd.f32 %v1511, %v1691
        %v1786 = vadd.f32 %v1512, %v1696
        %v1787 = vadd.f32 %v1513, %v1701
        %v1788 = vadd.f32 %v1514, %v1706
        %v1789 = vadd.f32 %v1515, %v1711
        %v1790 = vadd.f32 %v1516, %v1716
        %v1791 = vadd.f32 %v1517, %v1721
        %v1792 = vadd.f32 %v1518, %v1726
        %v1793 = vadd.f32 %v1519, %v1731
        %v1794 = vadd.f32 %v1520, %v1736
        %v1795 = vadd.f32 %v1521, %v1741
        %v1796 = vadd.f32 %v1522, %v1746
        %v1797 = vadd.f32 %v1523, %v1751
        %v1798 = vadd.f32 %v1524, %v1756
        %v1799 = vadd.f32 %v1525, %v1761
        %v1800 = vadd.f32 %v1526, %v1766
        %v1801 = vadd.f32 %v1527, %v1771
        %v1802 = vadd.f32 %v1528, %v1776
        %s1803 = sadd.s32 %s246, 2
        %s1804 = smul.u32 %s1803, 24
        %s1805 = scalar_lea.vmem %s216, %s1804 [#allocation2]
        %v1806 = vld [vmem:[%s1805] sm:$0xff]
        %v1807 = vld [vmem:[%s1805 + $0x8] sm:$0xff]
        %v1808 = vld [vmem:[%s1805 + $0x10] sm:$0xff]
        %v1809 = vld [vmem:[%s1805 + $0x18] sm:$0xff]
        %v1810 = vld [vmem:[%s1805 + $0x20] sm:$0xff]
        %v1811 = vld [vmem:[%s1805 + $0x28] sm:$0xff]
        %v1812 = vld [vmem:[%s1805 + $0x30] sm:$0xff]
        %v1813 = vld [vmem:[%s1805 + $0x38] sm:$0xff]
        %v1814 = vld [vmem:[%s1805 + $0x40] sm:$0xff]
        %v1815 = vld [vmem:[%s1805 + $0x48] sm:$0xff]
        %v1816 = vld [vmem:[%s1805 + $0x50] sm:$0xff]
        %v1817 = vld [vmem:[%s1805 + $0x58] sm:$0xff]
        %v1818 = vld [vmem:[%s1805 + $0x60] sm:$0xff]
        %v1819 = vld [vmem:[%s1805 + $0x68] sm:$0xff]
        %v1820 = vld [vmem:[%s1805 + $0x70] sm:$0xff]
        %v1821 = vld [vmem:[%s1805 + $0x78] sm:$0xff]
        %v1822 = vld [vmem:[%s1805 + $0x80] sm:$0xff]
        %v1823 = vld [vmem:[%s1805 + $0x88] sm:$0xff]
        %v1824 = vld [vmem:[%s1805 + $0x90] sm:$0xff]
        %v1825 = vld [vmem:[%s1805 + $0x98] sm:$0xff]
        %v1826 = vld [vmem:[%s1805 + $0xa0] sm:$0xff]
        %v1827 = vld [vmem:[%s1805 + $0xa8] sm:$0xff]
        %v1828 = vld [vmem:[%s1805 + $0xb0] sm:$0xff]
        %v1829 = vld [vmem:[%s1805 + $0xb8] sm:$0xff]
        %v1830 = vrot.slane %v1806, 7
        %v1831 = vrot.slane %v1807, 7
        %v1832 = vrot.slane %v1808, 7
        %v1833 = vrot.slane %v1809, 7
        %v1834 = vrot.slane %v1810, 7
        %v1835 = vrot.slane %v1811, 7
        %v1836 = vrot.slane %v1812, 7
        %v1837 = vrot.slane %v1813, 7
        %v1838 = vrot.slane %v1814, 7
        %v1839 = vrot.slane %v1815, 7
        %v1840 = vrot.slane %v1816, 7
        %v1841 = vrot.slane %v1817, 7
        %v1842 = vrot.slane %v1818, 7
        %v1843 = vrot.slane %v1819, 7
        %v1844 = vrot.slane %v1820, 7
        %v1845 = vrot.slane %v1821, 7
        %v1846 = vrot.slane %v1822, 7
        %v1847 = vrot.slane %v1823, 7
        %v1848 = vrot.slane %v1824, 7
        %v1849 = vrot.slane %v1825, 7
        %v1850 = vrot.slane %v1826, 7
        %v1851 = vrot.slane %v1827, 7
        %v1852 = vrot.slane %v1828, 7
        %v1853 = vrot.slane %v1829, 7
        %v1854 = vsel %vm299, %v1852, %v1853
        %v1855 = vsel %vm299, %v1851, %v1852
        %v1856 = vsel %vm299, %v1850, %v1851
        %v1857 = vsel %vm299, %v1849, %v1850
        %v1858 = vsel %vm299, %v1848, %v1849
        %v1859 = vsel %vm299, %v1847, %v1848
        %v1860 = vsel %vm299, %v1846, %v1847
        %v1861 = vsel %vm299, %v1845, %v1846
        %v1862 = vsel %vm299, %v1844, %v1845
        %v1863 = vsel %vm299, %v1843, %v1844
        %v1864 = vsel %vm299, %v1842, %v1843
        %v1865 = vsel %vm299, %v1841, %v1842
        %v1866 = vsel %vm299, %v1840, %v1841
        %v1867 = vsel %vm299, %v1839, %v1840
        %v1868 = vsel %vm299, %v1838, %v1839
        %v1869 = vsel %vm299, %v1837, %v1838
        %v1870 = vsel %vm299, %v1836, %v1837
        %v1871 = vsel %vm299, %v1835, %v1836
        %v1872 = vsel %vm299, %v1834, %v1835
        %v1873 = vsel %vm299, %v1833, %v1834
        %v1874 = vsel %vm299, %v1832, %v1833
        %v1875 = vsel %vm299, %v1831, %v1832
        %v1876 = vsel %vm299, %v1830, %v1831
        %v1877 = vsel %vm299, %v1853, %v1830
        %s1878 = scalar_lea.vmem [#allocation5], 768
        %v1879 = vld [vmem:[%s1878] sm:$0xff]
        %v1880 = vld [vmem:[%s1878 + $0x8] sm:$0xff]
        %v1881 = vld [vmem:[%s1878 + $0x10] sm:$0xff]
        %v1882 = vld [vmem:[%s1878 + $0x18] sm:$0xff]
        %v1883 = vld [vmem:[%s1878 + $0x20] sm:$0xff]
        %v1884 = vld [vmem:[%s1878 + $0x28] sm:$0xff]
        %v1885 = vld [vmem:[%s1878 + $0x30] sm:$0xff]
        %v1886 = vld [vmem:[%s1878 + $0x38] sm:$0xff]
        %v1887 = vld [vmem:[%s1878 + $0x40] sm:$0xff]
        %v1888 = vld [vmem:[%s1878 + $0x48] sm:$0xff]
        %v1889 = vld [vmem:[%s1878 + $0x50] sm:$0xff]
        %v1890 = vld [vmem:[%s1878 + $0x58] sm:$0xff]
        %v1891 = vld [vmem:[%s1878 + $0x60] sm:$0xff]
        %v1892 = vld [vmem:[%s1878 + $0x68] sm:$0xff]
        %v1893 = vld [vmem:[%s1878 + $0x70] sm:$0xff]
        %v1894 = vld [vmem:[%s1878 + $0x78] sm:$0xff]
        %1895 = vmatprep.subr.mxu0 0.0
        %1896 = vmatpush1.msra.mxu0 %v1879
        %1897 = vmatprep.subr.mxu0 0.0
        %1898 = vmatpush1.msra.mxu0 %v1880
        %1899 = vmatprep.subr.mxu0 0.0
        %1900 = vmatpush1.msra.mxu0 %v1881
        %1901 = vmatprep.subr.mxu0 0.0
        %1902 = vmatpush1.msra.mxu0 %v1882
        %1903 = vmatprep.subr.mxu0 0.0
        %1904 = vmatpush1.msra.mxu0 %v1883
        %1905 = vmatprep.subr.mxu0 0.0
        %1906 = vmatpush1.msra.mxu0 %v1884
        %1907 = vmatprep.subr.mxu0 0.0
        %1908 = vmatpush1.msra.mxu0 %v1885
        %1909 = vmatprep.subr.mxu0 0.0
        %1910 = vmatpush1.msra.mxu0 %v1886
        %1911 = vmatprep.subr.mxu0 0.0
        %1912 = vmatpush1.msra.mxu0 %v1887
        %1913 = vmatprep.subr.mxu0 0.0
        %1914 = vmatpush1.msra.mxu0 %v1888
        %1915 = vmatprep.subr.mxu0 0.0
        %1916 = vmatpush1.msra.mxu0 %v1889
        %1917 = vmatprep.subr.mxu0 0.0
        %1918 = vmatpush1.msra.mxu0 %v1890
        %1919 = vmatprep.subr.mxu0 0.0
        %1920 = vmatpush1.msra.mxu0 %v1891
        %1921 = vmatprep.subr.mxu0 0.0
        %1922 = vmatpush1.msra.mxu0 %v1892
        %1923 = vmatprep.subr.mxu0 0.0
        %1924 = vmatpush1.msra.mxu0 %v1893
        %1925 = vmatprep.subr.mxu0 0.0
        %1926 = vmatpush1.msra.mxu0 %v1894
        %1927 = vmatprep.subr.mxu0 0.0
        %1928 = vmatpush1.msra.mxu0 0.0
        %1929 = vmatprep.subr.mxu0 0.0
        %1930 = vmatpush1.msra.mxu0 0.0
        %1931 = vmatprep.subr.mxu0 0.0
        %1932 = vmatpush1.msra.mxu0 0.0
        %1933 = vmatprep.subr.mxu0 0.0
        %1934 = vmatpush1.msra.mxu0 0.0
        %1935 = vmatprep.subr.mxu0 0.0
        %1936 = vmatpush1.msra.mxu0 0.0
        %1937 = vmatprep.subr.mxu0 0.0
        %1938 = vmatpush1.msra.mxu0 0.0
        %1939 = vmatprep.subr.mxu0 0.0
        %1940 = vmatpush1.msra.mxu0 0.0
        %1941 = vmatprep.subr.mxu0 0.0
        %1942 = vmatpush1.msra.mxu0 0.0
        %1943 = vmatprep.subr.mxu0 0.0
        %1944 = vmatpush1.msra.mxu0 0.0
        %1945 = vmatprep.subr.mxu0 0.0
        %1946 = vmatpush1.msra.mxu0 0.0
        %1947 = vmatprep.subr.mxu0 0.0
        %1948 = vmatpush1.msra.mxu0 0.0
        %1949 = vmatprep.subr.mxu0 0.0
        %1950 = vmatpush1.msra.mxu0 0.0
        %1951 = vmatprep.subr.mxu0 0.0
        %1952 = vmatpush1.msra.mxu0 0.0
        %1953 = vmatprep.subr.mxu0 0.0
        %1954 = vmatpush1.msra.mxu0 0.0
        %1955 = vmatprep.subr.mxu0 0.0
        %1956 = vmatpush1.msra.mxu0 0.0
        %1957 = vmatprep.subr.mxu0 0.0
        %1958 = vmatpush1.msra.mxu0 0.0
        %1959 = vmatprep.mubr.f32.mxu0 0.0
        %1960 = vmatmul.mubr.f32.gmra.mrb[0].mxu0 %v1877
        %v1961 = vpop.f32.mrb[0].mxu0
        %v1962 = vadd.f32 0.0, %v1961
        %v1963 = vpop.f32.mrb[0].mxu0
        %1964 = vmatprep.mubr.f32.mxu0 0.0
        %1965 = vmatmul.mubr.f32.gmra.mrb[0].mxu0 %v1876
        %v1966 = vpop.f32.mrb[0].mxu0
        %v1967 = vadd.f32 0.0, %v1966
        %v1968 = vpop.f32.mrb[0].mxu0
        %1969 = vmatprep.mubr.f32.mxu0 0.0
        %1970 = vmatmul.mubr.f32.gmra.mrb[0].mxu0 %v1875
        %v1971 = vpop.f32.mrb[0].mxu0
        %v1972 = vadd.f32 0.0, %v1971
        %v1973 = vpop.f32.mrb[0].mxu0
        %1974 = vmatprep.mubr.f32.mxu0 0.0
        %1975 = vmatmul.mubr.f32.gmra.mrb[0].mxu0 %v1874
        %v1976 = vpop.f32.mrb[0].mxu0
        %v1977 = vadd.f32 0.0, %v1976
        %v1978 = vpop.f32.mrb[0].mxu0
        %1979 = vmatprep.mubr.f32.mxu0 0.0
        %1980 = vmatmul.mubr.f32.gmra.mrb[0].mxu0 %v1873
        %v1981 = vpop.f32.mrb[0].mxu0
        %v1982 = vadd.f32 0.0, %v1981
        %v1983 = vpop.f32.mrb[0].mxu0
        %1984 = vmatprep.mubr.f32.mxu0 0.0
        %1985 = vmatmul.mubr.f32.gmra.mrb[0].mxu0 %v1872
        %v1986 = vpop.f32.mrb[0].mxu0
        %v1987 = vadd.f32 0.0, %v1986
        %v1988 = vpop.f32.mrb[0].mxu0
        %1989 = vmatprep.mubr.f32.mxu0 0.0
        %1990 = vmatmul.mubr.f32.gmra.mrb[0].mxu0 %v1871
        %v1991 = vpop.f32.mrb[0].mxu0
        %v1992 = vadd.f32 0.0, %v1991
        %v1993 = vpop.f32.mrb[0].mxu0
        %1994 = vmatprep.mubr.f32.mxu0 0.0
        %1995 = vmatmul.mubr.f32.gmra.mrb[0].mxu0 %v1870
        %v1996 = vpop.f32.mrb[0].mxu0
        %v1997 = vadd.f32 0.0, %v1996
        %v1998 = vpop.f32.mrb[0].mxu0
        %1999 = vmatprep.mubr.f32.mxu0 0.0
        %2000 = vmatmul.mubr.f32.gmra.mrb[0].mxu0 %v1869
        %v2001 = vpop.f32.mrb[0].mxu0
        %v2002 = vadd.f32 0.0, %v2001
        %v2003 = vpop.f32.mrb[0].mxu0
        %2004 = vmatprep.mubr.f32.mxu0 0.0
        %2005 = vmatmul.mubr.f32.gmra.mrb[0].mxu0 %v1868
        %v2006 = vpop.f32.mrb[0].mxu0
        %v2007 = vadd.f32 0.0, %v2006
        %v2008 = vpop.f32.mrb[0].mxu0
        %2009 = vmatprep.mubr.f32.mxu0 0.0
        %2010 = vmatmul.mubr.f32.gmra.mrb[0].mxu0 %v1867
        %v2011 = vpop.f32.mrb[0].mxu0
        %v2012 = vadd.f32 0.0, %v2011
        %v2013 = vpop.f32.mrb[0].mxu0
        %2014 = vmatprep.mubr.f32.mxu0 0.0
        %2015 = vmatmul.mubr.f32.gmra.mrb[0].mxu0 %v1866
        %v2016 = vpop.f32.mrb[0].mxu0
        %v2017 = vadd.f32 0.0, %v2016
        %v2018 = vpop.f32.mrb[0].mxu0
        %2019 = vmatprep.mubr.f32.mxu0 0.0
        %2020 = vmatmul.mubr.f32.gmra.mrb[0].mxu0 %v1865
        %v2021 = vpop.f32.mrb[0].mxu0
        %v2022 = vadd.f32 0.0, %v2021
        %v2023 = vpop.f32.mrb[0].mxu0
        %2024 = vmatprep.mubr.f32.mxu0 0.0
        %2025 = vmatmul.mubr.f32.gmra.mrb[0].mxu0 %v1864
        %v2026 = vpop.f32.mrb[0].mxu0
        %v2027 = vadd.f32 0.0, %v2026
        %v2028 = vpop.f32.mrb[0].mxu0
        %2029 = vmatprep.mubr.f32.mxu0 0.0
        %2030 = vmatmul.mubr.f32.gmra.mrb[0].mxu0 %v1863
        %v2031 = vpop.f32.mrb[0].mxu0
        %v2032 = vadd.f32 0.0, %v2031
        %v2033 = vpop.f32.mrb[0].mxu0
        %2034 = vmatprep.mubr.f32.mxu0 0.0
        %2035 = vmatmul.mubr.f32.gmra.mrb[0].mxu0 %v1862
        %v2036 = vpop.f32.mrb[0].mxu0
        %v2037 = vadd.f32 0.0, %v2036
        %v2038 = vpop.f32.mrb[0].mxu0
        %2039 = vmatprep.mubr.f32.mxu0 0.0
        %2040 = vmatmul.mubr.f32.gmra.mrb[0].mxu0 %v1861
        %v2041 = vpop.f32.mrb[0].mxu0
        %v2042 = vadd.f32 0.0, %v2041
        %v2043 = vpop.f32.mrb[0].mxu0
        %2044 = vmatprep.mubr.f32.mxu0 0.0
        %2045 = vmatmul.mubr.f32.gmra.mrb[0].mxu0 %v1860
        %v2046 = vpop.f32.mrb[0].mxu0
        %v2047 = vadd.f32 0.0, %v2046
        %v2048 = vpop.f32.mrb[0].mxu0
        %2049 = vmatprep.mubr.f32.mxu0 0.0
        %2050 = vmatmul.mubr.f32.gmra.mrb[0].mxu0 %v1859
        %v2051 = vpop.f32.mrb[0].mxu0
        %v2052 = vadd.f32 0.0, %v2051
        %v2053 = vpop.f32.mrb[0].mxu0
        %2054 = vmatprep.mubr.f32.mxu0 0.0
        %2055 = vmatmul.mubr.f32.gmra.mrb[0].mxu0 %v1858
        %v2056 = vpop.f32.mrb[0].mxu0
        %v2057 = vadd.f32 0.0, %v2056
        %v2058 = vpop.f32.mrb[0].mxu0
        %2059 = vmatprep.mubr.f32.mxu0 0.0
        %2060 = vmatmul.mubr.f32.gmra.mrb[0].mxu0 %v1857
        %v2061 = vpop.f32.mrb[0].mxu0
        %v2062 = vadd.f32 0.0, %v2061
        %v2063 = vpop.f32.mrb[0].mxu0
        %2064 = vmatprep.mubr.f32.mxu0 0.0
        %2065 = vmatmul.mubr.f32.gmra.mrb[0].mxu0 %v1856
        %v2066 = vpop.f32.mrb[0].mxu0
        %v2067 = vadd.f32 0.0, %v2066
        %v2068 = vpop.f32.mrb[0].mxu0
        %2069 = vmatprep.mubr.f32.mxu0 0.0
        %2070 = vmatmul.mubr.f32.gmra.mrb[0].mxu0 %v1855
        %v2071 = vpop.f32.mrb[0].mxu0
        %v2072 = vadd.f32 0.0, %v2071
        %v2073 = vpop.f32.mrb[0].mxu0
        %2074 = vmatprep.mubr.f32.mxu0 0.0
        %2075 = vmatmul.mubr.f32.gmra.mrb[0].mxu0 %v1854
        %v2076 = vpop.f32.mrb[0].mxu0
        %v2077 = vadd.f32 0.0, %v2076
        %v2078 = vpop.f32.mrb[0].mxu0
        %2079 = vdwg.mxu0
        %v2080 = vadd.f32 %v1779, %v1962
        %v2081 = vadd.f32 %v1780, %v1967
        %v2082 = vadd.f32 %v1781, %v1972
        %v2083 = vadd.f32 %v1782, %v1977
        %v2084 = vadd.f32 %v1783, %v1982
        %v2085 = vadd.f32 %v1784, %v1987
        %v2086 = vadd.f32 %v1785, %v1992
        %v2087 = vadd.f32 %v1786, %v1997
        %v2088 = vadd.f32 %v1787, %v2002
        %v2089 = vadd.f32 %v1788, %v2007
        %v2090 = vadd.f32 %v1789, %v2012
        %v2091 = vadd.f32 %v1790, %v2017
        %v2092 = vadd.f32 %v1791, %v2022
        %v2093 = vadd.f32 %v1792, %v2027
        %v2094 = vadd.f32 %v1793, %v2032
        %v2095 = vadd.f32 %v1794, %v2037
        %v2096 = vadd.f32 %v1795, %v2042
        %v2097 = vadd.f32 %v1796, %v2047
        %v2098 = vadd.f32 %v1797, %v2052
        %v2099 = vadd.f32 %v1798, %v2057
        %v2100 = vadd.f32 %v1799, %v2062
        %v2101 = vadd.f32 %v1800, %v2067
        %v2102 = vadd.f32 %v1801, %v2072
        %v2103 = vadd.f32 %v1802, %v2077
        %s2104 = scalar_lea.vmem [#allocation5], 896
        %v2105 = vld [vmem:[%s2104] sm:$0xff]
        %v2106 = vld [vmem:[%s2104 + $0x8] sm:$0xff]
        %v2107 = vld [vmem:[%s2104 + $0x10] sm:$0xff]
        %v2108 = vld [vmem:[%s2104 + $0x18] sm:$0xff]
        %v2109 = vld [vmem:[%s2104 + $0x20] sm:$0xff]
        %v2110 = vld [vmem:[%s2104 + $0x28] sm:$0xff]
        %v2111 = vld [vmem:[%s2104 + $0x30] sm:$0xff]
        %v2112 = vld [vmem:[%s2104 + $0x38] sm:$0xff]
        %v2113 = vld [vmem:[%s2104 + $0x40] sm:$0xff]
        %v2114 = vld [vmem:[%s2104 + $0x48] sm:$0xff]
        %v2115 = vld [vmem:[%s2104 + $0x50] sm:$0xff]
        %v2116 = vld [vmem:[%s2104 + $0x58] sm:$0xff]
        %v2117 = vld [vmem:[%s2104 + $0x60] sm:$0xff]
        %v2118 = vld [vmem:[%s2104 + $0x68] sm:$0xff]
        %v2119 = vld [vmem:[%s2104 + $0x70] sm:$0xff]
        %v2120 = vld [vmem:[%s2104 + $0x78] sm:$0xff]
        %2121 = vmatprep.subr.mxu0 0.0
        %2122 = vmatpush1.msra.mxu0 %v2105
        %2123 = vmatprep.subr.mxu0 0.0
        %2124 = vmatpush1.msra.mxu0 %v2106
        %2125 = vmatprep.subr.mxu0 0.0
        %2126 = vmatpush1.msra.mxu0 %v2107
        %2127 = vmatprep.subr.mxu0 0.0
        %2128 = vmatpush1.msra.mxu0 %v2108
        %2129 = vmatprep.subr.mxu0 0.0
        %2130 = vmatpush1.msra.mxu0 %v2109
        %2131 = vmatprep.subr.mxu0 0.0
        %2132 = vmatpush1.msra.mxu0 %v2110
        %2133 = vmatprep.subr.mxu0 0.0
        %2134 = vmatpush1.msra.mxu0 %v2111
        %2135 = vmatprep.subr.mxu0 0.0
        %2136 = vmatpush1.msra.mxu0 %v2112
        %2137 = vmatprep.subr.mxu0 0.0
        %2138 = vmatpush1.msra.mxu0 %v2113
        %2139 = vmatprep.subr.mxu0 0.0
        %2140 = vmatpush1.msra.mxu0 %v2114
        %2141 = vmatprep.subr.mxu0 0.0
        %2142 = vmatpush1.msra.mxu0 %v2115
        %2143 = vmatprep.subr.mxu0 0.0
        %2144 = vmatpush1.msra.mxu0 %v2116
        %2145 = vmatprep.subr.mxu0 0.0
        %2146 = vmatpush1.msra.mxu0 %v2117
        %2147 = vmatprep.subr.mxu0 0.0
        %2148 = vmatpush1.msra.mxu0 %v2118
        %2149 = vmatprep.subr.mxu0 0.0
        %2150 = vmatpush1.msra.mxu0 %v2119
        %2151 = vmatprep.subr.mxu0 0.0
        %2152 = vmatpush1.msra.mxu0 %v2120
        %2153 = vmatprep.subr.mxu0 0.0
        %2154 = vmatpush1.msra.mxu0 0.0
        %2155 = vmatprep.subr.mxu0 0.0
        %2156 = vmatpush1.msra.mxu0 0.0
        %2157 = vmatprep.subr.mxu0 0.0
        %2158 = vmatpush1.msra.mxu0 0.0
        %2159 = vmatprep.subr.mxu0 0.0
        %2160 = vmatpush1.msra.mxu0 0.0
        %2161 = vmatprep.subr.mxu0 0.0
        %2162 = vmatpush1.msra.mxu0 0.0
        %2163 = vmatprep.subr.mxu0 0.0
        %2164 = vmatpush1.msra.mxu0 0.0
        %2165 = vmatprep.subr.mxu0 0.0
        %2166 = vmatpush1.msra.mxu0 0.0
        %2167 = vmatprep.subr.mxu0 0.0
        %2168 = vmatpush1.msra.mxu0 0.0
        %2169 = vmatprep.subr.mxu0 0.0
        %2170 = vmatpush1.msra.mxu0 0.0
        %2171 = vmatprep.subr.mxu0 0.0
        %2172 = vmatpush1.msra.mxu0 0.0
        %2173 = vmatprep.subr.mxu0 0.0
        %2174 = vmatpush1.msra.mxu0 0.0
        %2175 = vmatprep.subr.mxu0 0.0
        %2176 = vmatpush1.msra.mxu0 0.0
        %2177 = vmatprep.subr.mxu0 0.0
        %2178 = vmatpush1.msra.mxu0 0.0
        %2179 = vmatprep.subr.mxu0 0.0
        %2180 = vmatpush1.msra.mxu0 0.0
        %2181 = vmatprep.subr.mxu0 0.0
        %2182 = vmatpush1.msra.mxu0 0.0
        %2183 = vmatprep.subr.mxu0 0.0
        %2184 = vmatpush1.msra.mxu0 0.0
        %2185 = vmatprep.mubr.f32.mxu0 0.0
        %2186 = vmatmul.mubr.f32.gmra.mrb[0].mxu0 %v1806
        %v2187 = vpop.f32.mrb[0].mxu0
        %v2188 = vadd.f32 0.0, %v2187
        %v2189 = vpop.f32.mrb[0].mxu0
        %2190 = vmatprep.mubr.f32.mxu0 0.0
        %2191 = vmatmul.mubr.f32.gmra.mrb[0].mxu0 %v1807
        %v2192 = vpop.f32.mrb[0].mxu0
        %v2193 = vadd.f32 0.0, %v2192
        %v2194 = vpop.f32.mrb[0].mxu0
        %2195 = vmatprep.mubr.f32.mxu0 0.0
        %2196 = vmatmul.mubr.f32.gmra.mrb[0].mxu0 %v1808
        %v2197 = vpop.f32.mrb[0].mxu0
        %v2198 = vadd.f32 0.0, %v2197
        %v2199 = vpop.f32.mrb[0].mxu0
        %2200 = vmatprep.mubr.f32.mxu0 0.0
        %2201 = vmatmul.mubr.f32.gmra.mrb[0].mxu0 %v1809
        %v2202 = vpop.f32.mrb[0].mxu0
        %v2203 = vadd.f32 0.0, %v2202
        %v2204 = vpop.f32.mrb[0].mxu0
        %2205 = vmatprep.mubr.f32.mxu0 0.0
        %2206 = vmatmul.mubr.f32.gmra.mrb[0].mxu0 %v1810
        %v2207 = vpop.f32.mrb[0].mxu0
        %v2208 = vadd.f32 0.0, %v2207
        %v2209 = vpop.f32.mrb[0].mxu0
        %2210 = vmatprep.mubr.f32.mxu0 0.0
        %2211 = vmatmul.mubr.f32.gmra.mrb[0].mxu0 %v1811
        %v2212 = vpop.f32.mrb[0].mxu0
        %v2213 = vadd.f32 0.0, %v2212
        %v2214 = vpop.f32.mrb[0].mxu0
        %2215 = vmatprep.mubr.f32.mxu0 0.0
        %2216 = vmatmul.mubr.f32.gmra.mrb[0].mxu0 %v1812
        %v2217 = vpop.f32.mrb[0].mxu0
        %v2218 = vadd.f32 0.0, %v2217
        %v2219 = vpop.f32.mrb[0].mxu0
        %2220 = vmatprep.mubr.f32.mxu0 0.0
        %2221 = vmatmul.mubr.f32.gmra.mrb[0].mxu0 %v1813
        %v2222 = vpop.f32.mrb[0].mxu0
        %v2223 = vadd.f32 0.0, %v2222
        %v2224 = vpop.f32.mrb[0].mxu0
        %2225 = vmatprep.mubr.f32.mxu0 0.0
        %2226 = vmatmul.mubr.f32.gmra.mrb[0].mxu0 %v1814
        %v2227 = vpop.f32.mrb[0].mxu0
        %v2228 = vadd.f32 0.0, %v2227
        %v2229 = vpop.f32.mrb[0].mxu0
        %2230 = vmatprep.mubr.f32.mxu0 0.0
        %2231 = vmatmul.mubr.f32.gmra.mrb[0].mxu0 %v1815
        %v2232 = vpop.f32.mrb[0].mxu0
        %v2233 = vadd.f32 0.0, %v2232
        %v2234 = vpop.f32.mrb[0].mxu0
        %2235 = vmatprep.mubr.f32.mxu0 0.0
        %2236 = vmatmul.mubr.f32.gmra.mrb[0].mxu0 %v1816
        %v2237 = vpop.f32.mrb[0].mxu0
        %v2238 = vadd.f32 0.0, %v2237
        %v2239 = vpop.f32.mrb[0].mxu0
        %2240 = vmatprep.mubr.f32.mxu0 0.0
        %2241 = vmatmul.mubr.f32.gmra.mrb[0].mxu0 %v1817
        %v2242 = vpop.f32.mrb[0].mxu0
        %v2243 = vadd.f32 0.0, %v2242
        %v2244 = vpop.f32.mrb[0].mxu0
        %2245 = vmatprep.mubr.f32.mxu0 0.0
        %2246 = vmatmul.mubr.f32.gmra.mrb[0].mxu0 %v1818
        %v2247 = vpop.f32.mrb[0].mxu0
        %v2248 = vadd.f32 0.0, %v2247
        %v2249 = vpop.f32.mrb[0].mxu0
        %2250 = vmatprep.mubr.f32.mxu0 0.0
        %2251 = vmatmul.mubr.f32.gmra.mrb[0].mxu0 %v1819
        %v2252 = vpop.f32.mrb[0].mxu0
        %v2253 = vadd.f32 0.0, %v2252
        %v2254 = vpop.f32.mrb[0].mxu0
        %2255 = vmatprep.mubr.f32.mxu0 0.0
        %2256 = vmatmul.mubr.f32.gmra.mrb[0].mxu0 %v1820
        %v2257 = vpop.f32.mrb[0].mxu0
        %v2258 = vadd.f32 0.0, %v2257
        %v2259 = vpop.f32.mrb[0].mxu0
        %2260 = vmatprep.mubr.f32.mxu0 0.0
        %2261 = vmatmul.mubr.f32.gmra.mrb[0].mxu0 %v1821
        %v2262 = vpop.f32.mrb[0].mxu0
        %v2263 = vadd.f32 0.0, %v2262
        %v2264 = vpop.f32.mrb[0].mxu0
        %2265 = vmatprep.mubr.f32.mxu0 0.0
        %2266 = vmatmul.mubr.f32.gmra.mrb[0].mxu0 %v1822
        %v2267 = vpop.f32.mrb[0].mxu0
        %v2268 = vadd.f32 0.0, %v2267
        %v2269 = vpop.f32.mrb[0].mxu0
        %2270 = vmatprep.mubr.f32.mxu0 0.0
        %2271 = vmatmul.mubr.f32.gmra.mrb[0].mxu0 %v1823
        %v2272 = vpop.f32.mrb[0].mxu0
        %v2273 = vadd.f32 0.0, %v2272
        %v2274 = vpop.f32.mrb[0].mxu0
        %2275 = vmatprep.mubr.f32.mxu0 0.0
        %2276 = vmatmul.mubr.f32.gmra.mrb[0].mxu0 %v1824
        %v2277 = vpop.f32.mrb[0].mxu0
        %v2278 = vadd.f32 0.0, %v2277
        %v2279 = vpop.f32.mrb[0].mxu0
        %2280 = vmatprep.mubr.f32.mxu0 0.0
        %2281 = vmatmul.mubr.f32.gmra.mrb[0].mxu0 %v1825
        %v2282 = vpop.f32.mrb[0].mxu0
        %v2283 = vadd.f32 0.0, %v2282
        %v2284 = vpop.f32.mrb[0].mxu0
        %2285 = vmatprep.mubr.f32.mxu0 0.0
        %2286 = vmatmul.mubr.f32.gmra.mrb[0].mxu0 %v1826
        %v2287 = vpop.f32.mrb[0].mxu0
        %v2288 = vadd.f32 0.0, %v2287
        %v2289 = vpop.f32.mrb[0].mxu0
        %2290 = vmatprep.mubr.f32.mxu0 0.0
        %2291 = vmatmul.mubr.f32.gmra.mrb[0].mxu0 %v1827
        %v2292 = vpop.f32.mrb[0].mxu0
        %v2293 = vadd.f32 0.0, %v2292
        %v2294 = vpop.f32.mrb[0].mxu0
        %2295 = vmatprep.mubr.f32.mxu0 0.0
        %2296 = vmatmul.mubr.f32.gmra.mrb[0].mxu0 %v1828
        %v2297 = vpop.f32.mrb[0].mxu0
        %v2298 = vadd.f32 0.0, %v2297
        %v2299 = vpop.f32.mrb[0].mxu0
        %2300 = vmatprep.mubr.f32.mxu0 0.0
        %2301 = vmatmul.mubr.f32.gmra.mrb[0].mxu0 %v1829
        %v2302 = vpop.f32.mrb[0].mxu0
        %v2303 = vadd.f32 0.0, %v2302
        %v2304 = vpop.f32.mrb[0].mxu0
        %2305 = vdwg.mxu0
        %v2306 = vadd.f32 %v2080, %v2188
        %v2307 = vadd.f32 %v2081, %v2193
        %v2308 = vadd.f32 %v2082, %v2198
        %v2309 = vadd.f32 %v2083, %v2203
        %v2310 = vadd.f32 %v2084, %v2208
        %v2311 = vadd.f32 %v2085, %v2213
        %v2312 = vadd.f32 %v2086, %v2218
        %v2313 = vadd.f32 %v2087, %v2223
        %v2314 = vadd.f32 %v2088, %v2228
        %v2315 = vadd.f32 %v2089, %v2233
        %v2316 = vadd.f32 %v2090, %v2238
        %v2317 = vadd.f32 %v2091, %v2243
        %v2318 = vadd.f32 %v2092, %v2248
        %v2319 = vadd.f32 %v2093, %v2253
        %v2320 = vadd.f32 %v2094, %v2258
        %v2321 = vadd.f32 %v2095, %v2263
        %v2322 = vadd.f32 %v2096, %v2268
        %v2323 = vadd.f32 %v2097, %v2273
        %v2324 = vadd.f32 %v2098, %v2278
        %v2325 = vadd.f32 %v2099, %v2283
        %v2326 = vadd.f32 %v2100, %v2288
        %v2327 = vadd.f32 %v2101, %v2293
        %v2328 = vadd.f32 %v2102, %v2298
        %v2329 = vadd.f32 %v2103, %v2303
        %v2330 = vrot.slane %v1806, 1
        %v2331 = vrot.slane %v1807, 1
        %v2332 = vrot.slane %v1808, 1
        %v2333 = vrot.slane %v1809, 1
        %v2334 = vrot.slane %v1810, 1
        %v2335 = vrot.slane %v1811, 1
        %v2336 = vrot.slane %v1812, 1
        %v2337 = vrot.slane %v1813, 1
        %v2338 = vrot.slane %v1814, 1
        %v2339 = vrot.slane %v1815, 1
        %v2340 = vrot.slane %v1816, 1
        %v2341 = vrot.slane %v1817, 1
        %v2342 = vrot.slane %v1818, 1
        %v2343 = vrot.slane %v1819, 1
        %v2344 = vrot.slane %v1820, 1
        %v2345 = vrot.slane %v1821, 1
        %v2346 = vrot.slane %v1822, 1
        %v2347 = vrot.slane %v1823, 1
        %v2348 = vrot.slane %v1824, 1
        %v2349 = vrot.slane %v1825, 1
        %v2350 = vrot.slane %v1826, 1
        %v2351 = vrot.slane %v1827, 1
        %v2352 = vrot.slane %v1828, 1
        %v2353 = vrot.slane %v1829, 1
        %v2354 = vsel %vm751, %v2352, %v2353
        %v2355 = vsel %vm751, %v2351, %v2352
        %v2356 = vsel %vm751, %v2350, %v2351
        %v2357 = vsel %vm751, %v2349, %v2350
        %v2358 = vsel %vm751, %v2348, %v2349
        %v2359 = vsel %vm751, %v2347, %v2348
        %v2360 = vsel %vm751, %v2346, %v2347
        %v2361 = vsel %vm751, %v2345, %v2346
        %v2362 = vsel %vm751, %v2344, %v2345
        %v2363 = vsel %vm751, %v2343, %v2344
        %v2364 = vsel %vm751, %v2342, %v2343
        %v2365 = vsel %vm751, %v2341, %v2342
        %v2366 = vsel %vm751, %v2340, %v2341
        %v2367 = vsel %vm751, %v2339, %v2340
        %v2368 = vsel %vm751, %v2338, %v2339
        %v2369 = vsel %vm751, %v2337, %v2338
        %v2370 = vsel %vm751, %v2336, %v2337
        %v2371 = vsel %vm751, %v2335, %v2336
        %v2372 = vsel %vm751, %v2334, %v2335
        %v2373 = vsel %vm751, %v2333, %v2334
        %v2374 = vsel %vm751, %v2332, %v2333
        %v2375 = vsel %vm751, %v2331, %v2332
        %v2376 = vsel %vm751, %v2330, %v2331
        %v2377 = vsel %vm751, %v2353, %v2330
        %s2378 = scalar_lea.vmem [#allocation5], 1024
        %v2379 = vld [vmem:[%s2378] sm:$0xff]
        %v2380 = vld [vmem:[%s2378 + $0x8] sm:$0xff]
        %v2381 = vld [vmem:[%s2378 + $0x10] sm:$0xff]
        %v2382 = vld [vmem:[%s2378 + $0x18] sm:$0xff]
        %v2383 = vld [vmem:[%s2378 + $0x20] sm:$0xff]
        %v2384 = vld [vmem:[%s2378 + $0x28] sm:$0xff]
        %v2385 = vld [vmem:[%s2378 + $0x30] sm:$0xff]
        %v2386 = vld [vmem:[%s2378 + $0x38] sm:$0xff]
        %v2387 = vld [vmem:[%s2378 + $0x40] sm:$0xff]
        %v2388 = vld [vmem:[%s2378 + $0x48] sm:$0xff]
        %v2389 = vld [vmem:[%s2378 + $0x50] sm:$0xff]
        %v2390 = vld [vmem:[%s2378 + $0x58] sm:$0xff]
        %v2391 = vld [vmem:[%s2378 + $0x60] sm:$0xff]
        %v2392 = vld [vmem:[%s2378 + $0x68] sm:$0xff]
        %v2393 = vld [vmem:[%s2378 + $0x70] sm:$0xff]
        %v2394 = vld [vmem:[%s2378 + $0x78] sm:$0xff]
        %2395 = vmatprep.subr.mxu0 0.0
        %2396 = vmatpush1.msra.mxu0 %v2379
        %2397 = vmatprep.subr.mxu0 0.0
        %2398 = vmatpush1.msra.mxu0 %v2380
        %2399 = vmatprep.subr.mxu0 0.0
        %2400 = vmatpush1.msra.mxu0 %v2381
        %2401 = vmatprep.subr.mxu0 0.0
        %2402 = vmatpush1.msra.mxu0 %v2382
        %2403 = vmatprep.subr.mxu0 0.0
        %2404 = vmatpush1.msra.mxu0 %v2383
        %2405 = vmatprep.subr.mxu0 0.0
        %2406 = vmatpush1.msra.mxu0 %v2384
        %2407 = vmatprep.subr.mxu0 0.0
        %2408 = vmatpush1.msra.mxu0 %v2385
        %2409 = vmatprep.subr.mxu0 0.0
        %2410 = vmatpush1.msra.mxu0 %v2386
        %2411 = vmatprep.subr.mxu0 0.0
        %2412 = vmatpush1.msra.mxu0 %v2387
        %2413 = vmatprep.subr.mxu0 0.0
        %2414 = vmatpush1.msra.mxu0 %v2388
        %2415 = vmatprep.subr.mxu0 0.0
        %2416 = vmatpush1.msra.mxu0 %v2389
        %2417 = vmatprep.subr.mxu0 0.0
        %2418 = vmatpush1.msra.mxu0 %v2390
        %2419 = vmatprep.subr.mxu0 0.0
        %2420 = vmatpush1.msra.mxu0 %v2391
        %2421 = vmatprep.subr.mxu0 0.0
        %2422 = vmatpush1.msra.mxu0 %v2392
        %2423 = vmatprep.subr.mxu0 0.0
        %2424 = vmatpush1.msra.mxu0 %v2393
        %2425 = vmatprep.subr.mxu0 0.0
        %2426 = vmatpush1.msra.mxu0 %v2394
        %2427 = vmatprep.subr.mxu0 0.0
        %2428 = vmatpush1.msra.mxu0 0.0
        %2429 = vmatprep.subr.mxu0 0.0
        %2430 = vmatpush1.msra.mxu0 0.0
        %2431 = vmatprep.subr.mxu0 0.0
        %2432 = vmatpush1.msra.mxu0 0.0
        %2433 = vmatprep.subr.mxu0 0.0
        %2434 = vmatpush1.msra.mxu0 0.0
        %2435 = vmatprep.subr.mxu0 0.0
        %2436 = vmatpush1.msra.mxu0 0.0
        %2437 = vmatprep.subr.mxu0 0.0
        %2438 = vmatpush1.msra.mxu0 0.0
        %2439 = vmatprep.subr.mxu0 0.0
        %2440 = vmatpush1.msra.mxu0 0.0
        %2441 = vmatprep.subr.mxu0 0.0
        %2442 = vmatpush1.msra.mxu0 0.0
        %2443 = vmatprep.subr.mxu0 0.0
        %2444 = vmatpush1.msra.mxu0 0.0
        %2445 = vmatprep.subr.mxu0 0.0
        %2446 = vmatpush1.msra.mxu0 0.0
        %2447 = vmatprep.subr.mxu0 0.0
        %2448 = vmatpush1.msra.mxu0 0.0
        %2449 = vmatprep.subr.mxu0 0.0
        %2450 = vmatpush1.msra.mxu0 0.0
        %2451 = vmatprep.subr.mxu0 0.0
        %2452 = vmatpush1.msra.mxu0 0.0
        %2453 = vmatprep.subr.mxu0 0.0
        %2454 = vmatpush1.msra.mxu0 0.0
        %2455 = vmatprep.subr.mxu0 0.0
        %2456 = vmatpush1.msra.mxu0 0.0
        %2457 = vmatprep.subr.mxu0 0.0
        %2458 = vmatpush1.msra.mxu0 0.0
        %2459 = vmatprep.mubr.f32.mxu0 0.0
        %2460 = vmatmul.mubr.f32.gmra.mrb[0].mxu0 %v2376
        %v2461 = vpop.f32.mrb[0].mxu0
        %v2462 = vadd.f32 0.0, %v2461
        %v2463 = vpop.f32.mrb[0].mxu0
        %2464 = vmatprep.mubr.f32.mxu0 0.0
        %2465 = vmatmul.mubr.f32.gmra.mrb[0].mxu0 %v2375
        %v2466 = vpop.f32.mrb[0].mxu0
        %v2467 = vadd.f32 0.0, %v2466
        %v2468 = vpop.f32.mrb[0].mxu0
        %2469 = vmatprep.mubr.f32.mxu0 0.0
        %2470 = vmatmul.mubr.f32.gmra.mrb[0].mxu0 %v2374
        %v2471 = vpop.f32.mrb[0].mxu0
        %v2472 = vadd.f32 0.0, %v2471
        %v2473 = vpop.f32.mrb[0].mxu0
        %2474 = vmatprep.mubr.f32.mxu0 0.0
        %2475 = vmatmul.mubr.f32.gmra.mrb[0].mxu0 %v2373
        %v2476 = vpop.f32.mrb[0].mxu0
        %v2477 = vadd.f32 0.0, %v2476
        %v2478 = vpop.f32.mrb[0].mxu0
        %2479 = vmatprep.mubr.f32.mxu0 0.0
        %2480 = vmatmul.mubr.f32.gmra.mrb[0].mxu0 %v2372
        %v2481 = vpop.f32.mrb[0].mxu0
        %v2482 = vadd.f32 0.0, %v2481
        %v2483 = vpop.f32.mrb[0].mxu0
        %2484 = vmatprep.mubr.f32.mxu0 0.0
        %2485 = vmatmul.mubr.f32.gmra.mrb[0].mxu0 %v2371
        %v2486 = vpop.f32.mrb[0].mxu0
        %v2487 = vadd.f32 0.0, %v2486
        %v2488 = vpop.f32.mrb[0].mxu0
        %2489 = vmatprep.mubr.f32.mxu0 0.0
        %2490 = vmatmul.mubr.f32.gmra.mrb[0].mxu0 %v2370
        %v2491 = vpop.f32.mrb[0].mxu0
        %v2492 = vadd.f32 0.0, %v2491
        %v2493 = vpop.f32.mrb[0].mxu0
        %2494 = vmatprep.mubr.f32.mxu0 0.0
        %2495 = vmatmul.mubr.f32.gmra.mrb[0].mxu0 %v2369
        %v2496 = vpop.f32.mrb[0].mxu0
        %v2497 = vadd.f32 0.0, %v2496
        %v2498 = vpop.f32.mrb[0].mxu0
        %2499 = vmatprep.mubr.f32.mxu0 0.0
        %2500 = vmatmul.mubr.f32.gmra.mrb[0].mxu0 %v2368
        %v2501 = vpop.f32.mrb[0].mxu0
        %v2502 = vadd.f32 0.0, %v2501
        %v2503 = vpop.f32.mrb[0].mxu0
        %2504 = vmatprep.mubr.f32.mxu0 0.0
        %2505 = vmatmul.mubr.f32.gmra.mrb[0].mxu0 %v2367
        %v2506 = vpop.f32.mrb[0].mxu0
        %v2507 = vadd.f32 0.0, %v2506
        %v2508 = vpop.f32.mrb[0].mxu0
        %2509 = vmatprep.mubr.f32.mxu0 0.0
        %2510 = vmatmul.mubr.f32.gmra.mrb[0].mxu0 %v2366
        %v2511 = vpop.f32.mrb[0].mxu0
        %v2512 = vadd.f32 0.0, %v2511
        %v2513 = vpop.f32.mrb[0].mxu0
        %2514 = vmatprep.mubr.f32.mxu0 0.0
        %2515 = vmatmul.mubr.f32.gmra.mrb[0].mxu0 %v2365
        %v2516 = vpop.f32.mrb[0].mxu0
        %v2517 = vadd.f32 0.0, %v2516
        %v2518 = vpop.f32.mrb[0].mxu0
        %2519 = vmatprep.mubr.f32.mxu0 0.0
        %2520 = vmatmul.mubr.f32.gmra.mrb[0].mxu0 %v2364
        %v2521 = vpop.f32.mrb[0].mxu0
        %v2522 = vadd.f32 0.0, %v2521
        %v2523 = vpop.f32.mrb[0].mxu0
        %2524 = vmatprep.mubr.f32.mxu0 0.0
        %2525 = vmatmul.mubr.f32.gmra.mrb[0].mxu0 %v2363
        %v2526 = vpop.f32.mrb[0].mxu0
        %v2527 = vadd.f32 0.0, %v2526
        %v2528 = vpop.f32.mrb[0].mxu0
        %2529 = vmatprep.mubr.f32.mxu0 0.0
        %2530 = vmatmul.mubr.f32.gmra.mrb[0].mxu0 %v2362
        %v2531 = vpop.f32.mrb[0].mxu0
        %v2532 = vadd.f32 0.0, %v2531
        %v2533 = vpop.f32.mrb[0].mxu0
        %2534 = vmatprep.mubr.f32.mxu0 0.0
        %2535 = vmatmul.mubr.f32.gmra.mrb[0].mxu0 %v2361
        %v2536 = vpop.f32.mrb[0].mxu0
        %v2537 = vadd.f32 0.0, %v2536
        %v2538 = vpop.f32.mrb[0].mxu0
        %2539 = vmatprep.mubr.f32.mxu0 0.0
        %2540 = vmatmul.mubr.f32.gmra.mrb[0].mxu0 %v2360
        %v2541 = vpop.f32.mrb[0].mxu0
        %v2542 = vadd.f32 0.0, %v2541
        %v2543 = vpop.f32.mrb[0].mxu0
        %2544 = vmatprep.mubr.f32.mxu0 0.0
        %2545 = vmatmul.mubr.f32.gmra.mrb[0].mxu0 %v2359
        %v2546 = vpop.f32.mrb[0].mxu0
        %v2547 = vadd.f32 0.0, %v2546
        %v2548 = vpop.f32.mrb[0].mxu0
        %2549 = vmatprep.mubr.f32.mxu0 0.0
        %2550 = vmatmul.mubr.f32.gmra.mrb[0].mxu0 %v2358
        %v2551 = vpop.f32.mrb[0].mxu0
        %v2552 = vadd.f32 0.0, %v2551
        %v2553 = vpop.f32.mrb[0].mxu0
        %2554 = vmatprep.mubr.f32.mxu0 0.0
        %2555 = vmatmul.mubr.f32.gmra.mrb[0].mxu0 %v2357
        %v2556 = vpop.f32.mrb[0].mxu0
        %v2557 = vadd.f32 0.0, %v2556
        %v2558 = vpop.f32.mrb[0].mxu0
        %2559 = vmatprep.mubr.f32.mxu0 0.0
        %2560 = vmatmul.mubr.f32.gmra.mrb[0].mxu0 %v2356
        %v2561 = vpop.f32.mrb[0].mxu0
        %v2562 = vadd.f32 0.0, %v2561
        %v2563 = vpop.f32.mrb[0].mxu0
        %2564 = vmatprep.mubr.f32.mxu0 0.0
        %2565 = vmatmul.mubr.f32.gmra.mrb[0].mxu0 %v2355
        %v2566 = vpop.f32.mrb[0].mxu0
        %v2567 = vadd.f32 0.0, %v2566
        %v2568 = vpop.f32.mrb[0].mxu0
        %2569 = vmatprep.mubr.f32.mxu0 0.0
        %2570 = vmatmul.mubr.f32.gmra.mrb[0].mxu0 %v2354
        %v2571 = vpop.f32.mrb[0].mxu0
        %v2572 = vadd.f32 0.0, %v2571
        %v2573 = vpop.f32.mrb[0].mxu0
        %2574 = vmatprep.mubr.f32.mxu0 0.0
        %2575 = vmatmul.mubr.f32.gmra.mrb[0].mxu0 %v2377
        %v2576 = vpop.f32.mrb[0].mxu0
        %v2577 = vadd.f32 0.0, %v2576
        %v2578 = vpop.f32.mrb[0].mxu0
        %2579 = vdwg.mxu0
        %v2580 = vadd.f32 %v2306, %v2462
        %v2581 = vadd.f32 %v2307, %v2467
        %v2582 = vadd.f32 %v2308, %v2472
        %v2583 = vadd.f32 %v2309, %v2477
        %v2584 = vadd.f32 %v2310, %v2482
        %v2585 = vadd.f32 %v2311, %v2487
        %v2586 = vadd.f32 %v2312, %v2492
        %v2587 = vadd.f32 %v2313, %v2497
        %v2588 = vadd.f32 %v2314, %v2502
        %v2589 = vadd.f32 %v2315, %v2507
        %v2590 = vadd.f32 %v2316, %v2512
        %v2591 = vadd.f32 %v2317, %v2517
        %v2592 = vadd.f32 %v2318, %v2522
        %v2593 = vadd.f32 %v2319, %v2527
        %v2594 = vadd.f32 %v2320, %v2532
        %v2595 = vadd.f32 %v2321, %v2537
        %v2596 = vadd.f32 %v2322, %v2542
        %v2597 = vadd.f32 %v2323, %v2547
        %v2598 = vadd.f32 %v2324, %v2552
        %v2599 = vadd.f32 %v2325, %v2557
        %v2600 = vadd.f32 %v2326, %v2562
        %v2601 = vadd.f32 %v2327, %v2567
        %v2602 = vadd.f32 %v2328, %v2572
        %v2603 = vadd.f32 %v2329, %v2577
        %v2604 = vld [vmem:[%s2] sm:$0x1]
        %v2605 = vld [vmem:[%s3] sm:$0x1]
        %v2607 = vlaneseq
        %v2608 = vshrl.u32 %v2607, 7
        %v2609 = vsub.s32 0, %v2608
        %v2610 = vrot.slane %v2604, %v2609
        %v2612 = vmul.f32 %v2580, %v2610
        %v2613 = vmul.f32 %v2581, %v2610
        %v2614 = vmul.f32 %v2582, %v2610
        %v2615 = vmul.f32 %v2583, %v2610
        %v2616 = vmul.f32 %v2584, %v2610
        %v2617 = vmul.f32 %v2585, %v2610
        %v2618 = vmul.f32 %v2586, %v2610
        %v2619 = vmul.f32 %v2587, %v2610
        %v2620 = vmul.f32 %v2588, %v2610
        %v2621 = vmul.f32 %v2589, %v2610
        %v2622 = vmul.f32 %v2590, %v2610
        %v2623 = vmul.f32 %v2591, %v2610
        %v2624 = vmul.f32 %v2592, %v2610
        %v2625 = vmul.f32 %v2593, %v2610
        %v2626 = vmul.f32 %v2594, %v2610
        %v2627 = vmul.f32 %v2595, %v2610
        %v2628 = vmul.f32 %v2596, %v2610
        %v2629 = vmul.f32 %v2597, %v2610
        %v2630 = vmul.f32 %v2598, %v2610
        %v2631 = vmul.f32 %v2599, %v2610
        %v2632 = vmul.f32 %v2600, %v2610
        %v2633 = vmul.f32 %v2601, %v2610
        %v2634 = vmul.f32 %v2602, %v2610
        %v2635 = vmul.f32 %v2603, %v2610
        %v2637 = vlaneseq
        %v2638 = vshrl.u32 %v2637, 7
        %v2639 = vsub.s32 0, %v2638
        %v2640 = vrot.slane %v2605, %v2639
        %v2642 = vadd.f32 %v2612, %v2640
        %v2643 = vadd.f32 %v2613, %v2640
        %v2644 = vadd.f32 %v2614, %v2640
        %v2645 = vadd.f32 %v2615, %v2640
        %v2646 = vadd.f32 %v2616, %v2640
        %v2647 = vadd.f32 %v2617, %v2640
        %v2648 = vadd.f32 %v2618, %v2640
        %v2649 = vadd.f32 %v2619, %v2640
        %v2650 = vadd.f32 %v2620, %v2640
        %v2651 = vadd.f32 %v2621, %v2640
        %v2652 = vadd.f32 %v2622, %v2640
        %v2653 = vadd.f32 %v2623, %v2640
        %v2654 = vadd.f32 %v2624, %v2640
        %v2655 = vadd.f32 %v2625, %v2640
        %v2656 = vadd.f32 %v2626, %v2640
        %v2657 = vadd.f32 %v2627, %v2640
        %v2658 = vadd.f32 %v2628, %v2640
        %v2659 = vadd.f32 %v2629, %v2640
        %v2660 = vadd.f32 %v2630, %v2640
        %v2661 = vadd.f32 %v2631, %v2640
        %v2662 = vadd.f32 %v2632, %v2640
        %v2663 = vadd.f32 %v2633, %v2640
        %v2664 = vadd.f32 %v2634, %v2640
        %v2665 = vadd.f32 %v2635, %v2640
        %v2666 = vadd.f32 %v2642, %v1005
        %v2667 = vadd.f32 %v2643, %v1006
        %v2668 = vadd.f32 %v2644, %v1007
        %v2669 = vadd.f32 %v2645, %v1008
        %v2670 = vadd.f32 %v2646, %v1009
        %v2671 = vadd.f32 %v2647, %v1010
        %v2672 = vadd.f32 %v2648, %v1011
        %v2673 = vadd.f32 %v2649, %v1012
        %v2674 = vadd.f32 %v2650, %v1013
        %v2675 = vadd.f32 %v2651, %v1014
        %v2676 = vadd.f32 %v2652, %v1015
        %v2677 = vadd.f32 %v2653, %v1016
        %v2678 = vadd.f32 %v2654, %v1017
        %v2679 = vadd.f32 %v2655, %v1018
        %v2680 = vadd.f32 %v2656, %v1019
        %v2681 = vadd.f32 %v2657, %v1020
        %v2682 = vadd.f32 %v2658, %v1021
        %v2683 = vadd.f32 %v2659, %v1022
        %v2684 = vadd.f32 %v2660, %v1023
        %v2685 = vadd.f32 %v2661, %v1024
        %v2686 = vadd.f32 %v2662, %v1025
        %v2687 = vadd.f32 %v2663, %v1026
        %v2688 = vadd.f32 %v2664, %v1027
        %v2689 = vadd.f32 %v2665, %v1028
        %v2690 = vmin.f32 %v2666, 20.0
        %v2691 = vmin.f32 %v2667, 20.0
        %v2692 = vmin.f32 %v2668, 20.0
        %v2693 = vmin.f32 %v2669, 20.0
        %v2694 = vmin.f32 %v2670, 20.0
        %v2695 = vmin.f32 %v2671, 20.0
        %v2696 = vmin.f32 %v2672, 20.0
        %v2697 = vmin.f32 %v2673, 20.0
        %v2698 = vmin.f32 %v2674, 20.0
        %v2699 = vmin.f32 %v2675, 20.0
        %v2700 = vmin.f32 %v2676, 20.0
        %v2701 = vmin.f32 %v2677, 20.0
        %v2702 = vmin.f32 %v2678, 20.0
        %v2703 = vmin.f32 %v2679, 20.0
        %v2704 = vmin.f32 %v2680, 20.0
        %v2705 = vmin.f32 %v2681, 20.0
        %v2706 = vmin.f32 %v2682, 20.0
        %v2707 = vmin.f32 %v2683, 20.0
        %v2708 = vmin.f32 %v2684, 20.0
        %v2709 = vmin.f32 %v2685, 20.0
        %v2710 = vmin.f32 %v2686, 20.0
        %v2711 = vmin.f32 %v2687, 20.0
        %v2712 = vmin.f32 %v2688, 20.0
        %v2713 = vmin.f32 %v2689, 20.0
        %v2714 = vmul.f32 %v2690, 1.442695
        %v2715 = vpow.pop %v2714
        %v2716 = vmul.f32 %v2691, 1.442695
        %v2717 = vpow.pop %v2716
        %v2718 = vmul.f32 %v2692, 1.442695
        %v2719 = vpow.pop %v2718
        %v2720 = vmul.f32 %v2693, 1.442695
        %v2721 = vpow.pop %v2720
        %v2722 = vmul.f32 %v2694, 1.442695
        %v2723 = vpow.pop %v2722
        %v2724 = vmul.f32 %v2695, 1.442695
        %v2725 = vpow.pop %v2724
        %v2726 = vmul.f32 %v2696, 1.442695
        %v2727 = vpow.pop %v2726
        %v2728 = vmul.f32 %v2697, 1.442695
        %v2729 = vpow.pop %v2728
        %v2730 = vmul.f32 %v2698, 1.442695
        %v2731 = vpow.pop %v2730
        %v2732 = vmul.f32 %v2699, 1.442695
        %v2733 = vpow.pop %v2732
        %v2734 = vmul.f32 %v2700, 1.442695
        %v2735 = vpow.pop %v2734
        %v2736 = vmul.f32 %v2701, 1.442695
        %v2737 = vpow.pop %v2736
        %v2738 = vmul.f32 %v2702, 1.442695
        %v2739 = vpow.pop %v2738
        %v2740 = vmul.f32 %v2703, 1.442695
        %v2741 = vpow.pop %v2740
        %v2742 = vmul.f32 %v2704, 1.442695
        %v2743 = vpow.pop %v2742
        %v2744 = vmul.f32 %v2705, 1.442695
        %v2745 = vpow.pop %v2744
        %v2746 = vmul.f32 %v2706, 1.442695
        %v2747 = vpow.pop %v2746
        %v2748 = vmul.f32 %v2707, 1.442695
        %v2749 = vpow.pop %v2748
        %v2750 = vmul.f32 %v2708, 1.442695
        %v2751 = vpow.pop %v2750
        %v2752 = vmul.f32 %v2709, 1.442695
        %v2753 = vpow.pop %v2752
        %v2754 = vmul.f32 %v2710, 1.442695
        %v2755 = vpow.pop %v2754
        %v2756 = vmul.f32 %v2711, 1.442695
        %v2757 = vpow.pop %v2756
        %v2758 = vmul.f32 %v2712, 1.442695
        %v2759 = vpow.pop %v2758
        %v2760 = vmul.f32 %v2713, 1.442695
        %v2761 = vpow.pop %v2760
        %v2762 = vadd.f32 %v2715, 1.0
        %v2763 = vadd.f32 %v2717, 1.0
        %v2764 = vadd.f32 %v2719, 1.0
        %v2765 = vadd.f32 %v2721, 1.0
        %v2766 = vadd.f32 %v2723, 1.0
        %v2767 = vadd.f32 %v2725, 1.0
        %v2768 = vadd.f32 %v2727, 1.0
        %v2769 = vadd.f32 %v2729, 1.0
        %v2770 = vadd.f32 %v2731, 1.0
        %v2771 = vadd.f32 %v2733, 1.0
        %v2772 = vadd.f32 %v2735, 1.0
        %v2773 = vadd.f32 %v2737, 1.0
        %v2774 = vadd.f32 %v2739, 1.0
        %v2775 = vadd.f32 %v2741, 1.0
        %v2776 = vadd.f32 %v2743, 1.0
        %v2777 = vadd.f32 %v2745, 1.0
        %v2778 = vadd.f32 %v2747, 1.0
        %v2779 = vadd.f32 %v2749, 1.0
        %v2780 = vadd.f32 %v2751, 1.0
        %v2781 = vadd.f32 %v2753, 1.0
        %v2782 = vadd.f32 %v2755, 1.0
        %v2783 = vadd.f32 %v2757, 1.0
        %v2784 = vadd.f32 %v2759, 1.0
        %v2785 = vadd.f32 %v2761, 1.0
        %v2786 = vmul.f32 %v2762, %v2762
        %v2787 = vmul.f32 %v2763, %v2763
        %v2788 = vmul.f32 %v2764, %v2764
        %v2789 = vmul.f32 %v2765, %v2765
        %v2790 = vmul.f32 %v2766, %v2766
        %v2791 = vmul.f32 %v2767, %v2767
        %v2792 = vmul.f32 %v2768, %v2768
        %v2793 = vmul.f32 %v2769, %v2769
        %v2794 = vmul.f32 %v2770, %v2770
        %v2795 = vmul.f32 %v2771, %v2771
        %v2796 = vmul.f32 %v2772, %v2772
        %v2797 = vmul.f32 %v2773, %v2773
        %v2798 = vmul.f32 %v2774, %v2774
        %v2799 = vmul.f32 %v2775, %v2775
        %v2800 = vmul.f32 %v2776, %v2776
        %v2801 = vmul.f32 %v2777, %v2777
        %v2802 = vmul.f32 %v2778, %v2778
        %v2803 = vmul.f32 %v2779, %v2779
        %v2804 = vmul.f32 %v2780, %v2780
        %v2805 = vmul.f32 %v2781, %v2781
        %v2806 = vmul.f32 %v2782, %v2782
        %v2807 = vmul.f32 %v2783, %v2783
        %v2808 = vmul.f32 %v2784, %v2784
        %v2809 = vmul.f32 %v2785, %v2785
        %v2810 = vsub.f32 %v2786, 1.0
        %v2811 = vsub.f32 %v2787, 1.0
        %v2812 = vsub.f32 %v2788, 1.0
        %v2813 = vsub.f32 %v2789, 1.0
        %v2814 = vsub.f32 %v2790, 1.0
        %v2815 = vsub.f32 %v2791, 1.0
        %v2816 = vsub.f32 %v2792, 1.0
        %v2817 = vsub.f32 %v2793, 1.0
        %v2818 = vsub.f32 %v2794, 1.0
        %v2819 = vsub.f32 %v2795, 1.0
        %v2820 = vsub.f32 %v2796, 1.0
        %v2821 = vsub.f32 %v2797, 1.0
        %v2822 = vsub.f32 %v2798, 1.0
        %v2823 = vsub.f32 %v2799, 1.0
        %v2824 = vsub.f32 %v2800, 1.0
        %v2825 = vsub.f32 %v2801, 1.0
        %v2826 = vsub.f32 %v2802, 1.0
        %v2827 = vsub.f32 %v2803, 1.0
        %v2828 = vsub.f32 %v2804, 1.0
        %v2829 = vsub.f32 %v2805, 1.0
        %v2830 = vsub.f32 %v2806, 1.0
        %v2831 = vsub.f32 %v2807, 1.0
        %v2832 = vsub.f32 %v2808, 1.0
        %v2833 = vsub.f32 %v2809, 1.0
        %v2834 = vmul.f32 %v2666, %v2810
        %v2835 = vmul.f32 %v2667, %v2811
        %v2836 = vmul.f32 %v2668, %v2812
        %v2837 = vmul.f32 %v2669, %v2813
        %v2838 = vmul.f32 %v2670, %v2814
        %v2839 = vmul.f32 %v2671, %v2815
        %v2840 = vmul.f32 %v2672, %v2816
        %v2841 = vmul.f32 %v2673, %v2817
        %v2842 = vmul.f32 %v2674, %v2818
        %v2843 = vmul.f32 %v2675, %v2819
        %v2844 = vmul.f32 %v2676, %v2820
        %v2845 = vmul.f32 %v2677, %v2821
        %v2846 = vmul.f32 %v2678, %v2822
        %v2847 = vmul.f32 %v2679, %v2823
        %v2848 = vmul.f32 %v2680, %v2824
        %v2849 = vmul.f32 %v2681, %v2825
        %v2850 = vmul.f32 %v2682, %v2826
        %v2851 = vmul.f32 %v2683, %v2827
        %v2852 = vmul.f32 %v2684, %v2828
        %v2853 = vmul.f32 %v2685, %v2829
        %v2854 = vmul.f32 %v2686, %v2830
        %v2855 = vmul.f32 %v2687, %v2831
        %v2856 = vmul.f32 %v2688, %v2832
        %v2857 = vmul.f32 %v2689, %v2833
        %v2858 = vadd.f32 %v2786, 1.0
        %v2859 = vadd.f32 %v2787, 1.0
        %v2860 = vadd.f32 %v2788, 1.0
        %v2861 = vadd.f32 %v2789, 1.0
        %v2862 = vadd.f32 %v2790, 1.0
        %v2863 = vadd.f32 %v2791, 1.0
        %v2864 = vadd.f32 %v2792, 1.0
        %v2865 = vadd.f32 %v2793, 1.0
        %v2866 = vadd.f32 %v2794, 1.0
        %v2867 = vadd.f32 %v2795, 1.0
        %v2868 = vadd.f32 %v2796, 1.0
        %v2869 = vadd.f32 %v2797, 1.0
        %v2870 = vadd.f32 %v2798, 1.0
        %v2871 = vadd.f32 %v2799, 1.0
        %v2872 = vadd.f32 %v2800, 1.0
        %v2873 = vadd.f32 %v2801, 1.0
        %v2874 = vadd.f32 %v2802, 1.0
        %v2875 = vadd.f32 %v2803, 1.0
        %v2876 = vadd.f32 %v2804, 1.0
        %v2877 = vadd.f32 %v2805, 1.0
        %v2878 = vadd.f32 %v2806, 1.0
        %v2879 = vadd.f32 %v2807, 1.0
        %v2880 = vadd.f32 %v2808, 1.0
        %v2881 = vadd.f32 %v2809, 1.0
        %v2882 = vrcp.pop %v2858
        %v2883 = vrcp.pop %v2859
        %v2884 = vrcp.pop %v2860
        %v2885 = vrcp.pop %v2861
        %v2886 = vrcp.pop %v2862
        %v2887 = vrcp.pop %v2863
        %v2888 = vrcp.pop %v2864
        %v2889 = vrcp.pop %v2865
        %v2890 = vrcp.pop %v2866
        %v2891 = vrcp.pop %v2867
        %v2892 = vrcp.pop %v2868
        %v2893 = vrcp.pop %v2869
        %v2894 = vrcp.pop %v2870
        %v2895 = vrcp.pop %v2871
        %v2896 = vrcp.pop %v2872
        %v2897 = vrcp.pop %v2873
        %v2898 = vrcp.pop %v2874
        %v2899 = vrcp.pop %v2875
        %v2900 = vrcp.pop %v2876
        %v2901 = vrcp.pop %v2877
        %v2902 = vrcp.pop %v2878
        %v2903 = vrcp.pop %v2879
        %v2904 = vrcp.pop %v2880
        %v2905 = vrcp.pop %v2881
        %v2906 = vmul.f32 %v2834, %v2882
        %v2907 = vmul.f32 %v2835, %v2883
        %v2908 = vmul.f32 %v2836, %v2884
        %v2909 = vmul.f32 %v2837, %v2885
        %v2910 = vmul.f32 %v2838, %v2886
        %v2911 = vmul.f32 %v2839, %v2887
        %v2912 = vmul.f32 %v2840, %v2888
        %v2913 = vmul.f32 %v2841, %v2889
        %v2914 = vmul.f32 %v2842, %v2890
        %v2915 = vmul.f32 %v2843, %v2891
        %v2916 = vmul.f32 %v2844, %v2892
        %v2917 = vmul.f32 %v2845, %v2893
        %v2918 = vmul.f32 %v2846, %v2894
        %v2919 = vmul.f32 %v2847, %v2895
        %v2920 = vmul.f32 %v2848, %v2896
        %v2921 = vmul.f32 %v2849, %v2897
        %v2922 = vmul.f32 %v2850, %v2898
        %v2923 = vmul.f32 %v2851, %v2899
        %v2924 = vmul.f32 %v2852, %v2900
        %v2925 = vmul.f32 %v2853, %v2901
        %v2926 = vmul.f32 %v2854, %v2902
        %v2927 = vmul.f32 %v2855, %v2903
        %v2928 = vmul.f32 %v2856, %v2904
        %v2929 = vmul.f32 %v2857, %v2905
        %2930 = vst [vmem:[%s244] sm:$0xff] %v2906
        %2931 = vst [vmem:[%s244 + $0x8] sm:$0xff] %v2907
        %2932 = vst [vmem:[%s244 + $0x10] sm:$0xff] %v2908
        %2933 = vst [vmem:[%s244 + $0x18] sm:$0xff] %v2909
        %2934 = vst [vmem:[%s244 + $0x20] sm:$0xff] %v2910
        %2935 = vst [vmem:[%s244 + $0x28] sm:$0xff] %v2911
        %2936 = vst [vmem:[%s244 + $0x30] sm:$0xff] %v2912
        %2937 = vst [vmem:[%s244 + $0x38] sm:$0xff] %v2913
        %2938 = vst [vmem:[%s244 + $0x40] sm:$0xff] %v2914
        %2939 = vst [vmem:[%s244 + $0x48] sm:$0xff] %v2915
        %2940 = vst [vmem:[%s244 + $0x50] sm:$0xff] %v2916
        %2941 = vst [vmem:[%s244 + $0x58] sm:$0xff] %v2917
        %2942 = vst [vmem:[%s244 + $0x60] sm:$0xff] %v2918
        %2943 = vst [vmem:[%s244 + $0x68] sm:$0xff] %v2919
        %2944 = vst [vmem:[%s244 + $0x70] sm:$0xff] %v2920
        %2945 = vst [vmem:[%s244 + $0x78] sm:$0xff] %v2921
        %2946 = vst [vmem:[%s244 + $0x80] sm:$0xff] %v2922
        %2947 = vst [vmem:[%s244 + $0x88] sm:$0xff] %v2923
        %2948 = vst [vmem:[%s244 + $0x90] sm:$0xff] %v2924
        %2949 = vst [vmem:[%s244 + $0x98] sm:$0xff] %v2925
        %2950 = vst [vmem:[%s244 + $0xa0] sm:$0xff] %v2926
        %2951 = vst [vmem:[%s244 + $0xa8] sm:$0xff] %v2927
        %2952 = vst [vmem:[%s244 + $0xb0] sm:$0xff] %v2928
        %2953 = vst [vmem:[%s244 + $0xb8] sm:$0xff] %v2929
        %s2954 = sand.u32 %s133, 1
        %s2955 = scalar_lea.sflag [#allocation4], %s2954
        %s2956 = sand.u32 %s133, 1
        %s2957 = smul.addr %s2956, 192
        %s2958 = scalar_lea.vmem [#allocation7], %s2957
        // Predicated region
        $region45: #{tpu_custom_call.1} parent=35 // pred_check
          %p2959 = pneg %p143
        $region46: #{tpu_custom_call.1} parent=35 // pred_check_branch
          %2961 = sbr.rel (%p2959) target = $region48
        $region47: #{tpu_custom_call.1} parent=35 // pred_region
          %s2962 = smul.u32 8, %s27
          %s2964 = ssub.s32 3072, 3072
          %2965 = vsyncadd %s2955, %s2964
          %s2966 = smul.addr %s2962, 3
          %s2967 = smul.addr %s26, 48
          %s2968 = sadd.s32 %s2966, %s2967
          %s2969 = smul.addr %s2968, 128
          %s2970 = scalar_lea.hbm %s4, %s2969
          %s2971 = sshll.u32 %s2958, 4
          %s2972 = int_to_ptr.vmem [resolvable:$true] %s2971
          %2977 = dma.vmem_to_hbm [thread:$0]  %s2972, 3072, %s2970, %s2955, 128, 128, 8
        $region48: #{tpu_custom_call.1} parent=35 // pred_fallthru
          _
      $region36: #{tpu_custom_call.1} parent=5 // pred_fallthru
        _
      %p2978 = scmp.le.s32.totalorder 2, %s17
      // Predicated region
      $region49: #{tpu_custom_call.1} parent=5 // pred_check
        %p2979 = pneg %p2978
      $region50: #{tpu_custom_call.1} parent=5 // pred_check_branch
        %2981 = sbr.rel (%p2979) target = $region52
      $region51: #{tpu_custom_call.1} parent=5 // pred_region
        %s2982 = ssub.s32 %s17, 2
        // Predicated region
        $region53: #{tpu_custom_call.1} parent=51 // pred_check
          %p2983 = pneg %p149
        $region54: #{tpu_custom_call.1} parent=51 // pred_check_branch
          %2985 = sbr.rel (%p2983) target = $region56
        $region55: #{tpu_custom_call.1} parent=51 // pred_region
          %s2986 = sand.u32 %s134, 1
          %s2987 = scalar_lea.sflag [#allocation4], %s2986
          %s2988 = sand.u32 %s134, 1
          %s2989 = smul.addr %s2988, 192
          %s2990 = scalar_lea.vmem [#allocation7], %s2989
          %2991 = dma.done %s2987, 3072
        $region56: #{tpu_custom_call.1} parent=51 // pred_fallthru
          _
      $region52: #{tpu_custom_call.1} parent=5 // pred_fallthru
        _
    $region6: #{tpu_custom_call.1} parent=1 // loop_footer
      %s21 = sadd.s32 1, %s17
    $region7: #{tpu_custom_call.1} parent=1 // loop_footer_branch
      %16 = sbr.rel target = $region3
    $region8: #{tpu_custom_call.1} parent=1 // loop_exit
      _
    %2992 = vsyncpa [#allocation3], 1
    %s2993 = scalar_lea.sflag [#allocation3], 1
    %2994 = vsyncpa %s2993, 1
    %2995 = vsyncpa [#allocation6], 1
    %2996 = vsyncpa [#allocation4], 1
    %s2997 = scalar_lea.sflag [#allocation4], 1
    %2998 = vsyncpa %s2997, 1

</llo_original>
